<compile_context>
chip_gen: v7x
topology: tpu7x:2x2x1
jax: 0.10.0
libtpu: 0.0.40
codegen_flags: <defaults>
</compile_context>

<pallas_src>
import jax
import jax.numpy as jnp
from jax.experimental import pallas as pl
from jax.experimental.pallas import tpu as pltpu

# Python floats only (a closed-over jnp scalar becomes a captured constant that
# pallas_call rejects).  Invariant: MASK (-2e9) is strictly below M_INIT (-1e9)
# and exp(MASK - M_INIT) = exp(-1e9) underflows to exactly 0 in fp32, so masked
# entries never contribute to the online softmax, even before any real edge.
M_INIT = -1.0e9     # running-max initial value
MASK_MAG = 2.0e9    # magnitude of the additive non-edge bias


def _round_up(x, m):
    return ((x + m - 1) // m) * m


# --------------------------------------------------------------------------
# Kernel 1: projection + fused per-node attention scores
# --------------------------------------------------------------------------
def _proj_kernel(h_ref, w_ref, a_ref, z_ref, s_ref):
    # h arrives as bf16; z = h @ W (fp32 acc), then s = z @ A gives el/er for
    # every head in a single extra MXU pass: s[:, :H] = el(src), s[:, H:] = er(dst).
    z = jnp.dot(h_ref[...], w_ref[...], preferred_element_type=jnp.float32)
    z_bf = z.astype(jnp.bfloat16)
    z_ref[...] = z_bf                                          # [rt, H*Fp] bf16
    s_ref[...] = jnp.dot(z_bf, a_ref[...], preferred_element_type=jnp.float32)


def _project(h, w_pad, a_mat, row_tile):
    Npad, Fin = h.shape
    HFp = w_pad.shape[1]
    twoH = a_mat.shape[1]
    return pl.pallas_call(
        _proj_kernel,
        out_shape=(
            jax.ShapeDtypeStruct((Npad, HFp), jnp.bfloat16),
            jax.ShapeDtypeStruct((Npad, twoH), jnp.float32),
        ),
        grid=(Npad // row_tile,),
        in_specs=[
            pl.BlockSpec((row_tile, Fin), lambda i: (i, 0)),
            pl.BlockSpec((Fin, HFp), lambda i: (0, 0)),
            pl.BlockSpec((HFp, twoH), lambda i: (0, 0)),
        ],
        out_specs=(
            pl.BlockSpec((row_tile, HFp), lambda i: (i, 0)),
            pl.BlockSpec((row_tile, twoH), lambda i: (i, 0)),
        ),
        compiler_params=pltpu.CompilerParams(
            dimension_semantics=("parallel",),
            vmem_limit_bytes=32 * 1024 * 1024,
        ),
    )(h, w_pad, a_mat)


# --------------------------------------------------------------------------
# Kernel 2: blocked attention with online softmax + empty-block skipping
# --------------------------------------------------------------------------
def _make_attn_kernel(H, Fp, apply_elu, reduce_mean):
    def kernel(cnt_ref, er_ref, elT_ref, z_ref, adj_ref, out_ref,
               m_ref, l_ref, acc_ref):
        d = pl.program_id(0)                                   # dst-block index
        j = pl.program_id(1)                                   # src-block index
        n_src = pl.num_programs(1)

        @pl.when(j == 0)
        def _():
            m_ref[...] = jnp.full_like(m_ref[...], M_INIT)
            l_ref[...] = jnp.zeros_like(l_ref[...])
            acc_ref[...] = jnp.zeros_like(acc_ref[...])

        # Skip the whole head loop when this adjacency block has no edges
        # (count table is scalar-prefetched into SMEM).
        @pl.when(cnt_ref[d * n_src + j] > 0)
        def _():
            # 0/1 adjacency -> additive mask bias, computed once, reused by all
            # heads: 0 on edges, -2e9 on non-edges.
            adj_f = adj_ref[...].astype(jnp.float32)           # [dt, st]
            neg_bias = (adj_f - 1.0) * MASK_MAG
            z_src = z_ref[...]                                  # [st, H*Fp] bf16
            er = er_ref[...]                                    # [dt, H] f32 (dst)
            elT = elT_ref[...]                                  # [H, st] f32 (src)

            for hd in range(H):                                 # static unroll
                # e[i, j] = LeakyReLU(er_dst[i] + el_src[j], 0.2), then mask.
                e = er[:, hd:hd + 1] + elT[hd:hd + 1, :]        # [dt, st]
                e = jnp.maximum(e, 0.2 * e)                     # LeakyReLU(0.2)
                e = e + neg_bias                                # non-edges ~ -2e9

                m_prev = m_ref[:, hd:hd + 1]
                m_new = jnp.maximum(m_prev, jnp.max(e, axis=-1, keepdims=True))
                scale = jnp.exp(m_prev - m_new)
                # masked entries: exp(<= -2e9 - (-1e9)) == exp(-1e9) == 0 exactly
                p = jnp.exp(e - m_new)
                l_ref[:, hd:hd + 1] = (scale * l_ref[:, hd:hd + 1]
                                       + jnp.sum(p, axis=-1, keepdims=True))
                col = slice(hd * Fp, (hd + 1) * Fp)
                acc_ref[:, col] = scale * acc_ref[:, col] + jnp.dot(
                    p.astype(jnp.bfloat16), z_src[:, col],
                    preferred_element_type=jnp.float32)
                m_ref[:, hd:hd + 1] = m_new

        @pl.when(j == n_src - 1)
        def _():
            # denominator only reaches 0 for padded / edge-free rows (stripped
            # in the wrapper); clamp keeps them finite (0 * big = 0).
            inv_l = 1.0 / jnp.maximum(l_ref[...], 1e-20)        # [dt, H]
            if reduce_mean:
                res = jnp.zeros_like(acc_ref[:, 0:Fp])
                for hd in range(H):
                    o = acc_ref[:, hd * Fp:(hd + 1) * Fp] * inv_l[:, hd:hd + 1]
                    if apply_elu:
                        o = jnp.where(o > 0, o,
                                      jnp.exp(jnp.minimum(o, 0.0)) - 1.0)
                    res = res + o
                out_ref[...] = (res * (1.0 / H)).astype(out_ref.dtype)
            else:
                # per-head 128-lane-aligned stores; no [dt, H*Fp] concat temp
                for hd in range(H):
                    o = acc_ref[:, hd * Fp:(hd + 1) * Fp] * inv_l[:, hd:hd + 1]
                    if apply_elu:
                        o = jnp.where(o > 0, o,
                                      jnp.exp(jnp.minimum(o, 0.0)) - 1.0)
                    out_ref[:, hd * Fp:(hd + 1) * Fp] = o.astype(out_ref.dtype)

    return kernel


# --------------------------------------------------------------------------
# One dense-adjacency GAT layer
# --------------------------------------------------------------------------
def gat_layer(h, W, al, ar, adj, *, apply_elu, reduce_mean,
              out_dtype=jnp.float32, dst_tile=512, src_tile=1024):
    N, Fin = h.shape
    H, Fout = al.shape
    Fp = max(128, _round_up(Fout, 128))       # per-head lane-dense width
    HFp = H * Fp

    # ---- tile selection (independent dst/src padding, no lcm blow-up) ------
    src_tile = min(src_tile, _round_up(N, 128))     # lane axis -> 128-multiple
    dst_tile = min(dst_tile, _round_up(N, 32))      # 32-sublane keeps int8 adj packed
    dst_tile = min(dst_tile, src_tile)
    Npad_src = _round_up(N, src_tile)
    Npad_dst = _round_up(N, dst_tile)
    # v7x megacore: prefer >= 2 dst blocks on the "parallel" axis when halving
    # keeps the 32-sublane alignment.
    if Npad_dst == dst_tile and dst_tile % 64 == 0:
        dst_tile //= 2
        Npad_dst = _round_up(N, dst_tile)
    n_dst = Npad_dst // dst_tile
    n_src = Npad_src // src_tile

    # ---- weights: pad per-head columns to Fp lanes --------------------------
    W3 = W.reshape(Fin, H, Fout)
    w_pad = jnp.zeros((Fin, H, Fp), jnp.float32).at[:, :, :Fout].set(W3)
    w_pad = w_pad.reshape(Fin, HFp).astype(jnp.bfloat16)

    # fused score matrix: s = z @ a_mat; s[:, :H] = el(src), s[:, H:] = er(dst)
    a_mat = jnp.zeros((H, Fp, 2 * H), jnp.float32)
    for hd in range(H):
        a_mat = a_mat.at[hd, :Fout, hd].set(al[hd])
        a_mat = a_mat.at[hd, :Fout, H + hd].set(ar[hd])
    a_mat = a_mat.reshape(HFp, 2 * H).astype(jnp.bfloat16)

    # ---- node padding (padded src columns are zero adjacency -> masked) -----
    h_pad = jnp.pad(h.astype(jnp.bfloat16), ((0, Npad_src - N), (0, 0)))
    adj_i8 = jnp.pad((adj > 0).astype(jnp.int8),
                     ((0, Npad_dst - N), (0, Npad_src - N)))

    # per-(dst_block, src_block) edge counts, flattened for SMEM prefetch
    counts = adj_i8.astype(jnp.int32).reshape(
        n_dst, dst_tile, n_src, src_tile).sum(axis=(1, 3)).reshape(-1)

    # ---- 1) projection + per-node scores (bf16 in, bf16 z out) --------------
    z, s = _project(h_pad, w_pad, a_mat, row_tile=src_tile)
    el_t = s[:, :H].T                       # [H, Npad_src] lane-aligned src scores
    er = s[:Npad_dst, H:]                   # [Npad_dst, H] dst scores

    # ---- 2) blocked attention / online softmax ------------------------------
    out_cols = Fp if reduce_mean else HFp
    out_bytes = jnp.dtype(out_dtype).itemsize
    kernel = _make_attn_kernel(H, Fp, apply_elu, reduce_mean)

    # explicit VMEM budget from the double-buffered blocks + scratch (v7x-safe)
    blk_bytes = (dst_tile * H * 4 + H * src_tile * 4
                 + src_tile * HFp * 2 + dst_tile * src_tile * 1
                 + dst_tile * out_cols * out_bytes)
    scratch_bytes = 2 * dst_tile * H * 4 + dst_tile * HFp * 4
    vmem_limit = int(min(max(2 * (2 * blk_bytes + scratch_bytes),
                             32 * 1024 * 1024), 48 * 1024 * 1024))

    cost = pl.CostEstimate(
        flops=int(2 * Npad_dst * Npad_src * H * (Fp + 4)),
        transcendentals=int(Npad_dst * Npad_src * H),
        bytes_accessed=int(Npad_dst * Npad_src                 # int8 adjacency
                           + n_dst * Npad_src * HFp * 2        # z per dst block
                           + n_src * Npad_dst * H * 4          # er per src block
                           + n_dst * Npad_src * H * 4          # el.T per dst block
                           + Npad_dst * out_cols * out_bytes), # output write
    )

    out_pad = pl.pallas_call(
        kernel,
        out_shape=jax.ShapeDtypeStruct((Npad_dst, out_cols), out_dtype),
        grid_spec=pltpu.PrefetchScalarGridSpec(
            num_scalar_prefetch=1,
            grid=(n_dst, n_src),
            in_specs=[
                pl.BlockSpec((dst_tile, H), lambda d, j, cnt: (d, 0)),       # er
                pl.BlockSpec((H, src_tile), lambda d, j, cnt: (0, j)),       # el.T
                pl.BlockSpec((src_tile, HFp), lambda d, j, cnt: (j, 0)),     # z
                pl.BlockSpec((dst_tile, src_tile), lambda d, j, cnt: (d, j)),  # adj
            ],
            out_specs=pl.BlockSpec((dst_tile, out_cols), lambda d, j, cnt: (d, 0)),
            scratch_shapes=[
                pltpu.VMEM((dst_tile, H), jnp.float32),    # running max
                pltpu.VMEM((dst_tile, H), jnp.float32),    # running denom
                pltpu.VMEM((dst_tile, HFp), jnp.float32),  # accumulator
            ],
        ),
        compiler_params=pltpu.CompilerParams(
            dimension_semantics=("parallel", "arbitrary"),
            vmem_limit_bytes=vmem_limit,
        ),
        cost_estimate=cost,
    )(counts, er, el_t, z, adj_i8)

    # strip node padding and per-head lane padding
    out_pad = out_pad[:N]
    if reduce_mean:
        return out_pad[:, :Fout]
    if Fp == Fout:
        return out_pad
    return jnp.concatenate(
        [out_pad[:, hd * Fp: hd * Fp + Fout] for hd in range(H)], axis=-1)


# --------------------------------------------------------------------------
# 2-layer GAT student (ATTNET_s.forward equivalent)
# --------------------------------------------------------------------------
def init_gat_params(key, in_feats, hidden, num_heads, num_classes):
    ks = jax.random.split(key, 6)

    def glorot(k, shape):
        fan_in, fan_out = shape[0], shape[-1]
        scale = jnp.sqrt(2.0 / (fan_in + fan_out))
        return jax.random.normal(k, shape, jnp.float32) * scale

    return {
        # layer 1: in_feats -> hidden per head, concat heads, ELU
        "W1": glorot(ks[0], (in_feats, num_heads * hidden)),
        "al1": glorot(ks[1], (num_heads, hidden)),
        "ar1": glorot(ks[2], (num_heads, hidden)),
        # layer 2: (heads*hidden) -> num_classes per head, mean over heads
        "W2": glorot(ks[3], (num_heads * hidden, num_heads * num_classes)),
        "al2": glorot(ks[4], (num_heads, num_classes)),
        "ar2": glorot(ks[5], (num_heads, num_classes)),
    }


def attnet_s_forward(params, adj, features):
    """ATTNET_s.forward(graph, features): attach the same graph (dense
    adjacency here) to every GAT layer and run the 2-layer student."""
    # layer-1 output stays bf16 so the HBM handoff to layer 2 is bf16 end-to-end
    h = gat_layer(features, params["W1"], params["al1"], params["ar1"], adj,
                  apply_elu=True, reduce_mean=False,
                  out_dtype=jnp.bfloat16)                       # [N, H*hidden]
    out = gat_layer(h, params["W2"], params["al2"], params["ar2"], adj,
                    apply_elu=False, reduce_mean=True,
                    out_dtype=jnp.float32)                      # [N, classes]
    return out


if __name__ == "__main__":
    N = 16            # nodes
    IN_FEATS = 32     # input node feature dim
    HIDDEN = 32       # hidden dim per head
    HEADS = 2
    NUM_CLASSES = 8   # small synthetic label space (PPI would be 121)

    key = jax.random.PRNGKey(0)
    k_feat, k_adj, k_param = jax.random.split(key, 3)

    features = jax.random.normal(k_feat, (N, IN_FEATS), jnp.float32)

    # deterministic random directed graph + self-loops (every dst row must have
    # at least one edge so the softmax denominator is nonzero)
    adj = (jax.random.uniform(k_adj, (N, N)) < 0.3).astype(jnp.float32)
    adj = jnp.maximum(adj, jnp.eye(N, dtype=jnp.float32))

    params = init_gat_params(k_param, IN_FEATS, HIDDEN, HEADS, NUM_CLASSES)

    fwd = jax.jit(attnet_s_forward)
    out = jax.block_until_ready(fwd(params, adj, features))
    assert out.shape == (N, NUM_CLASSES)
    assert bool(jnp.all(jnp.isfinite(out)))
    print("KERNEL_OK")
</pallas_src>

<mosaic_0001>
module attributes {stable_mosaic.version = 11 : i64} {
  func.func @_proj_kernel(%arg0: i32, %arg1: memref<128x32xbf16, #tpu.memory_space<vmem>>, %arg2: memref<32x256xbf16, #tpu.memory_space<vmem>>, %arg3: memref<256x4xbf16, #tpu.memory_space<vmem>>, %arg4: memref<128x256xbf16, #tpu.memory_space<vmem>>, %arg5: memref<128x4xf32, #tpu.memory_space<vmem>>) attributes {dimension_semantics = [#tpu.dimension_semantics<parallel>], iteration_bounds = array<i64: 1>, scalar_prefetch = 0 : i64, scratch_operands = 0 : i64, tpu.core_type = #tpu.core_type<tc>, window_params = [{transform_indices = @transform_0, window_bounds = array<i64: 128, 32>}, {pipeline_mode = #tpu.pipeline_mode<synchronous>, transform_indices = @transform_1, window_bounds = array<i64: 32, 256>}, {pipeline_mode = #tpu.pipeline_mode<synchronous>, transform_indices = @transform_2, window_bounds = array<i64: 256, 4>}, {transform_indices = @transform_3, window_bounds = array<i64: 128, 256>}, {transform_indices = @transform_4, window_bounds = array<i64: 128, 4>}]} {
    %c0 = arith.constant 0 : index
    %c0_0 = arith.constant 0 : index
    %0 = vector.load %arg1[%c0, %c0_0] : memref<128x32xbf16, #tpu.memory_space<vmem>>, vector<128x32xbf16>
    %c0_1 = arith.constant 0 : index
    %c0_2 = arith.constant 0 : index
    %1 = vector.load %arg2[%c0_1, %c0_2] : memref<32x256xbf16, #tpu.memory_space<vmem>>, vector<32x256xbf16>
    %cst = arith.constant dense<0.000000e+00> : vector<128x256xf32>
    %2 = tpu.matmul %0, %1, %cst {dimension_numbers = #tpu.dot_dimension_numbers<[1], [0], [0], [1], [0, 0, 1, 1], [], []>} : vector<128x32xbf16>, vector<32x256xbf16>, vector<128x256xf32> -> vector<128x256xf32>
    %3 = arith.truncf %2 : vector<128x256xf32> to vector<128x256xbf16>
    %c0_3 = arith.constant 0 : index
    %c0_4 = arith.constant 0 : index
    %4 = vector.load %arg4[%c0_3, %c0_4] : memref<128x256xbf16, #tpu.memory_space<vmem>>, vector<128x256xbf16>
    tpu.vector_store %arg4[%c0_3, %c0_4], %3 {strides = array<i32>} : memref<128x256xbf16, #tpu.memory_space<vmem>>, vector<128x256xbf16>,
    %c0_5 = arith.constant 0 : index
    %c0_6 = arith.constant 0 : index
    %5 = vector.load %arg3[%c0_5, %c0_6] : memref<256x4xbf16, #tpu.memory_space<vmem>>, vector<256x4xbf16>
    %cst_7 = arith.constant dense<0.000000e+00> : vector<128x4xf32>
    %6 = tpu.matmul %3, %5, %cst_7 {dimension_numbers = #tpu.dot_dimension_numbers<[1], [0], [0], [1], [0, 0, 1, 1], [], []>} : vector<128x256xbf16>, vector<256x4xbf16>, vector<128x4xf32> -> vector<128x4xf32>
    %c0_8 = arith.constant 0 : index
    %c0_9 = arith.constant 0 : index
    %7 = vector.load %arg5[%c0_8, %c0_9] : memref<128x4xf32, #tpu.memory_space<vmem>>, vector<128x4xf32>
    tpu.vector_store %arg5[%c0_8, %c0_9], %6 {strides = array<i32>} : memref<128x4xf32, #tpu.memory_space<vmem>>, vector<128x4xf32>,
    return
  }
  func.func @transform_0(%arg0: i32) -> (i32, i32) {
    %c0_i32 = arith.constant 0 : i32
    %c0_i32_0 = arith.constant 0 : i32
    return %arg0, %c0_i32 : i32, i32
  }
  func.func @transform_1(%arg0: i32) -> (i32, i32) {
    %c0_i32 = arith.constant 0 : i32
    %c0_i32_0 = arith.constant 0 : i32
    %c0_i32_1 = arith.constant 0 : i32
    return %c0_i32, %c0_i32_0 : i32, i32
  }
  func.func @transform_2(%arg0: i32) -> (i32, i32) {
    %c0_i32 = arith.constant 0 : i32
    %c0_i32_0 = arith.constant 0 : i32
    %c0_i32_1 = arith.constant 0 : i32
    return %c0_i32, %c0_i32_0 : i32, i32
  }
  func.func @transform_3(%arg0: i32) -> (i32, i32) {
    %c0_i32 = arith.constant 0 : i32
    %c0_i32_0 = arith.constant 0 : i32
    return %arg0, %c0_i32 : i32, i32
  }
  func.func @transform_4(%arg0: i32) -> (i32, i32) {
    %c0_i32 = arith.constant 0 : i32
    %c0_i32_0 = arith.constant 0 : i32
    return %arg0, %c0_i32 : i32, i32
  }
}

module attributes {stable_mosaic.version = 11 : i64} {
  func.func @kernel(%arg0: i32, %arg1: i32, %arg2: memref<1xi32, #tpu.memory_space<smem>>, %arg3: memref<32x2xf32, #tpu.memory_space<vmem>>, %arg4: memref<2x128xf32, #tpu.memory_space<vmem>>, %arg5: memref<128x256xbf16, #tpu.memory_space<vmem>>, %arg6: memref<32x128xi8, #tpu.memory_space<vmem>>, %arg7: memref<32x256xbf16, #tpu.memory_space<vmem>>, %arg8: memref<32x2xf32, #tpu.memory_space<vmem>>, %arg9: memref<32x2xf32, #tpu.memory_space<vmem>>, %arg10: memref<32x256xf32, #tpu.memory_space<vmem>>) attributes {dimension_semantics = [#tpu.dimension_semantics<parallel>, #tpu.dimension_semantics<arbitrary>], iteration_bounds = array<i64: 1, 1>, scalar_prefetch = 1 : i64, scratch_operands = 3 : i64, tpu.core_type = #tpu.core_type<tc>, window_params = [{transform_indices = @transform_0, window_bounds = array<i64: 32, 2>}, {transform_indices = @transform_1, window_bounds = array<i64: 2, 128>}, {transform_indices = @transform_2, window_bounds = array<i64: 128, 256>}, {transform_indices = @transform_3, window_bounds = array<i64: 32, 128>}, {transform_indices = @transform_4, window_bounds = array<i64: 32, 256>}]} {
    %c0_i32 = arith.constant 0 : i32
    %0 = arith.cmpi eq, %arg1, %c0_i32 : i32
    %1 = arith.extui %0 : i1 to i32
    %c0_i32_0 = arith.constant 0 : i32
    %2 = arith.cmpi ne, %1, %c0_i32_0 : i32
    scf.if %2 {
      %cst = arith.constant -1.000000e+09 : f32
      %13 = vector.broadcast %cst : f32 to vector<32x2xf32>
      %c0 = arith.constant 0 : index
      %c0_5 = arith.constant 0 : index
      %14 = vector.load %arg8[%c0, %c0_5] : memref<32x2xf32, #tpu.memory_space<vmem>>, vector<32x2xf32>
      tpu.vector_store %arg8[%c0, %c0_5], %13 {strides = array<i32>} : memref<32x2xf32, #tpu.memory_space<vmem>>, vector<32x2xf32>,
      %cst_6 = arith.constant 0.000000e+00 : f32
      %15 = vector.broadcast %cst_6 : f32 to vector<32x2xf32>
      %c0_7 = arith.constant 0 : index
      %c0_8 = arith.constant 0 : index
      %16 = vector.load %arg9[%c0_7, %c0_8] : memref<32x2xf32, #tpu.memory_space<vmem>>, vector<32x2xf32>
      tpu.vector_store %arg9[%c0_7, %c0_8], %15 {strides = array<i32>} : memref<32x2xf32, #tpu.memory_space<vmem>>, vector<32x2xf32>,
      %cst_9 = arith.constant 0.000000e+00 : f32
      %17 = vector.broadcast %cst_9 : f32 to vector<32x256xf32>
      %c0_10 = arith.constant 0 : index
      %c0_11 = arith.constant 0 : index
      %18 = vector.load %arg10[%c0_10, %c0_11] : memref<32x256xf32, #tpu.memory_space<vmem>>, vector<32x256xf32>
      tpu.vector_store %arg10[%c0_10, %c0_11], %17 {strides = array<i32>} : memref<32x256xf32, #tpu.memory_space<vmem>>, vector<32x256xf32>,
    } else {
    }
    %c1_i32 = arith.constant 1 : i32
    %3 = arith.muli %arg0, %c1_i32 : i32
    %4 = arith.addi %3, %arg1 : i32
    %5 = arith.index_cast %4 : i32 to index
    %6 = memref.load %arg2[%5] : memref<1xi32, #tpu.memory_space<smem>>
    %c0_i32_1 = arith.constant 0 : i32
    %7 = arith.cmpi sgt, %6, %c0_i32_1 : i32
    %8 = arith.extui %7 : i1 to i32
    %c0_i32_2 = arith.constant 0 : i32
    %9 = arith.cmpi ne, %8, %c0_i32_2 : i32
    scf.if %9 {
      %c0 = arith.constant 0 : index
      %c0_5 = arith.constant 0 : index
      %13 = vector.load %arg6[%c0, %c0_5] : memref<32x128xi8, #tpu.memory_space<vmem>>, vector<32x128xi8>
      %14 = arith.sitofp %13 : vector<32x128xi8> to vector<32x128xf32>
      %cst = arith.constant 1.000000e+00 : f32
      %15 = vector.broadcast %cst : f32 to vector<32x128xf32>
      %16 = arith.subf %14, %15 : vector<32x128xf32>
      %cst_6 = arith.constant 2.000000e+09 : f32
      %17 = vector.broadcast %cst_6 : f32 to vector<32x128xf32>
      %18 = arith.mulf %16, %17 : vector<32x128xf32>
      %c0_7 = arith.constant 0 : index
      %c0_8 = arith.constant 0 : index
      %19 = vector.load %arg5[%c0_7, %c0_8] : memref<128x256xbf16, #tpu.memory_space<vmem>>, vector<128x256xbf16>
      %c0_9 = arith.constant 0 : index
      %c0_10 = arith.constant 0 : index
      %20 = vector.load %arg3[%c0_9, %c0_10] : memref<32x2xf32, #tpu.memory_space<vmem>>, vector<32x2xf32>
      %c0_11 = arith.constant 0 : index
      %c0_12 = arith.constant 0 : index
      %21 = vector.load %arg4[%c0_11, %c0_12] : memref<2x128xf32, #tpu.memory_space<vmem>>, vector<2x128xf32>
      %22 = vector.extract_strided_slice %20 {offsets = [0, 0], sizes = [32, 1], strides = [1, 1]} : vector<32x2xf32> to vector<32x1xf32>
      %23 = vector.extract_strided_slice %21 {offsets = [0, 0], sizes = [1, 128], strides = [1, 1]} : vector<2x128xf32> to vector<1x128xf32>
      %24 = vector.broadcast %22 : vector<32x1xf32> to vector<32x128xf32>
      %25 = vector.broadcast %23 : vector<1x128xf32> to vector<32x128xf32>
      %26 = arith.addf %24, %25 : vector<32x128xf32>
      %cst_13 = arith.constant 2.000000e-01 : f32
      %27 = vector.broadcast %cst_13 : f32 to vector<32x128xf32>
      %28 = arith.mulf %27, %26 : vector<32x128xf32>
      %29 = arith.maximumf %26, %28 : vector<32x128xf32>
      %30 = arith.addf %29, %18 : vector<32x128xf32>
      %c0_14 = arith.constant 0 : index
      %c0_15 = arith.constant 0 : index
      %31 = vector.load %arg8[%c0_14, %c0_15] : memref<32x2xf32, #tpu.memory_space<vmem>>, vector<32x1xf32>
      %cst_16 = arith.constant dense<0xFF800000> : vector<32xf32>
      %32 = vector.multi_reduction <maximumf>, %30, %cst_16 [1] : vector<32x128xf32> to vector<32xf32>
      %33 = vector.shape_cast %32 : vector<32xf32> to vector<32x1xf32>
      %34 = arith.maximumf %31, %33 : vector<32x1xf32>
      %35 = arith.subf %31, %34 : vector<32x1xf32>
      %36 = math.exp %35 : vector<32x1xf32>
      %37 = vector.broadcast %34 : vector<32x1xf32> to vector<32x128xf32>
      %38 = arith.subf %30, %37 : vector<32x128xf32>
      %39 = math.exp %38 : vector<32x128xf32>
      %c0_17 = arith.constant 0 : index
      %c0_18 = arith.constant 0 : index
      %40 = vector.load %arg9[%c0_17, %c0_18] : memref<32x2xf32, #tpu.memory_space<vmem>>, vector<32x1xf32>
      %41 = arith.mulf %36, %40 : vector<32x1xf32>
      %cst_19 = arith.constant dense<0.000000e+00> : vector<32xf32>
      %42 = vector.multi_reduction <add>, %39, %cst_19 [1] : vector<32x128xf32> to vector<32xf32>
      %43 = vector.shape_cast %42 : vector<32xf32> to vector<32x1xf32>
      %44 = arith.addf %41, %43 : vector<32x1xf32>
      %c0_20 = arith.constant 0 : index
      %c0_21 = arith.constant 0 : index
      %45 = vector.load %arg9[%c0_20, %c0_21] : memref<32x2xf32, #tpu.memory_space<vmem>>, vector<32x1xf32>
      tpu.vector_store %arg9[%c0_20, %c0_21], %44 {strides = array<i32>} : memref<32x2xf32, #tpu.memory_space<vmem>>, vector<32x1xf32>,
      %c0_22 = arith.constant 0 : index
      %c0_23 = arith.constant 0 : index
      %46 = vector.load %arg10[%c0_22, %c0_23] : memref<32x256xf32, #tpu.memory_space<vmem>>, vector<32x128xf32>
      %47 = vector.broadcast %36 : vector<32x1xf32> to vector<32x128xf32>
      %48 = arith.mulf %47, %46 : vector<32x128xf32>
      %49 = arith.truncf %39 : vector<32x128xf32> to vector<32x128xbf16>
      %50 = vector.extract_strided_slice %19 {offsets = [0, 0], sizes = [128, 128], strides = [1, 1]} : vector<128x256xbf16> to vector<128x128xbf16>
      %cst_24 = arith.constant dense<0.000000e+00> : vector<32x128xf32>
      %51 = tpu.matmul %49, %50, %cst_24 {dimension_numbers = #tpu.dot_dimension_numbers<[1], [0], [0], [1], [0, 0, 1, 1], [], []>} : vector<32x128xbf16>, vector<128x128xbf16>, vector<32x128xf32> -> vector<32x128xf32>
      %52 = arith.addf %48, %51 : vector<32x128xf32>
      %c0_25 = arith.constant 0 : index
      %c0_26 = arith.constant 0 : index
      %53 = vector.load %arg10[%c0_25, %c0_26] : memref<32x256xf32, #tpu.memory_space<vmem>>, vector<32x128xf32>
      tpu.vector_store %arg10[%c0_25, %c0_26], %52 {strides = array<i32>} : memref<32x256xf32, #tpu.memory_space<vmem>>, vector<32x128xf32>,
      %c0_27 = arith.constant 0 : index
      %c0_28 = arith.constant 0 : index
      %54 = vector.load %arg8[%c0_27, %c0_28] : memref<32x2xf32, #tpu.memory_space<vmem>>, vector<32x1xf32>
      tpu.vector_store %arg8[%c0_27, %c0_28], %34 {strides = array<i32>} : memref<32x2xf32, #tpu.memory_space<vmem>>, vector<32x1xf32>,
      %55 = vector.extract_strided_slice %20 {offsets = [0, 1], sizes = [32, 1], strides = [1, 1]} : vector<32x2xf32> to vector<32x1xf32>
      %56 = vector.extract_strided_slice %21 {offsets = [1, 0], sizes = [1, 128], strides = [1, 1]} : vector<2x128xf32> to vector<1x128xf32>
      %57 = vector.broadcast %55 : vector<32x1xf32> to vector<32x128xf32>
      %58 = vector.broadcast %56 : vector<1x128xf32> to vector<32x128xf32>
      %59 = arith.addf %57, %58 : vector<32x128xf32>
      %cst_29 = arith.constant 2.000000e-01 : f32
      %60 = vector.broadcast %cst_29 : f32 to vector<32x128xf32>
      %61 = arith.mulf %60, %59 : vector<32x128xf32>
      %62 = arith.maximumf %59, %61 : vector<32x128xf32>
      %63 = arith.addf %62, %18 : vector<32x128xf32>
      %c0_30 = arith.constant 0 : index
      %c1 = arith.constant 1 : index
      %64 = vector.load %arg8[%c0_30, %c1] : memref<32x2xf32, #tpu.memory_space<vmem>>, vector<32x1xf32>
      %cst_31 = arith.constant dense<0xFF800000> : vector<32xf32>
      %65 = vector.multi_reduction <maximumf>, %63, %cst_31 [1] : vector<32x128xf32> to vector<32xf32>
      %66 = vector.shape_cast %65 : vector<32xf32> to vector<32x1xf32>
      %67 = arith.maximumf %64, %66 : vector<32x1xf32>
      %68 = arith.subf %64, %67 : vector<32x1xf32>
      %69 = math.exp %68 : vector<32x1xf32>
      %70 = vector.broadcast %67 : vector<32x1xf32> to vector<32x128xf32>
      %71 = arith.subf %63, %70 : vector<32x128xf32>
      %72 = math.exp %71 : vector<32x128xf32>
      %c0_32 = arith.constant 0 : index
      %c1_33 = arith.constant 1 : index
      %73 = vector.load %arg9[%c0_32, %c1_33] : memref<32x2xf32, #tpu.memory_space<vmem>>, vector<32x1xf32>
      %74 = arith.mulf %69, %73 : vector<32x1xf32>
      %cst_34 = arith.constant dense<0.000000e+00> : vector<32xf32>
      %75 = vector.multi_reduction <add>, %72, %cst_34 [1] : vector<32x128xf32> to vector<32xf32>
      %76 = vector.shape_cast %75 : vector<32xf32> to vector<32x1xf32>
      %77 = arith.addf %74, %76 : vector<32x1xf32>
      %c0_35 = arith.constant 0 : index
      %c1_36 = arith.constant 1 : index
      %78 = vector.load %arg9[%c0_35, %c1_36] : memref<32x2xf32, #tpu.memory_space<vmem>>, vector<32x1xf32>
      tpu.vector_store %arg9[%c0_35, %c1_36], %77 {strides = array<i32>} : memref<32x2xf32, #tpu.memory_space<vmem>>, vector<32x1xf32>,
      %c0_37 = arith.constant 0 : index
      %c128 = arith.constant 128 : index
      %79 = vector.load %arg10[%c0_37, %c128] : memref<32x256xf32, #tpu.memory_space<vmem>>, vector<32x128xf32>
      %80 = vector.broadcast %69 : vector<32x1xf32> to vector<32x128xf32>
      %81 = arith.mulf %80, %79 : vector<32x128xf32>
      %82 = arith.truncf %72 : vector<32x128xf32> to vector<32x128xbf16>
      %83 = vector.extract_strided_slice %19 {offsets = [0, 128], sizes = [128, 128], strides = [1, 1]} : vector<128x256xbf16> to vector<128x128xbf16>
      %cst_38 = arith.constant dense<0.000000e+00> : vector<32x128xf32>
      %84 = tpu.matmul %82, %83, %cst_38 {dimension_numbers = #tpu.dot_dimension_numbers<[1], [0], [0], [1], [0, 0, 1, 1], [], []>} : vector<32x128xbf16>, vector<128x128xbf16>, vector<32x128xf32> -> vector<32x128xf32>
      %85 = arith.addf %81, %84 : vector<32x128xf32>
      %c0_39 = arith.constant 0 : index
      %c128_40 = arith.constant 128 : index
      %86 = vector.load %arg10[%c0_39, %c128_40] : memref<32x256xf32, #tpu.memory_space<vmem>>, vector<32x128xf32>
      tpu.vector_store %arg10[%c0_39, %c128_40], %85 {strides = array<i32>} : memref<32x256xf32, #tpu.memory_space<vmem>>, vector<32x128xf32>,
      %c0_41 = arith.constant 0 : index
      %c1_42 = arith.constant 1 : index
      %87 = vector.load %arg8[%c0_41, %c1_42] : memref<32x2xf32, #tpu.memory_space<vmem>>, vector<32x1xf32>
      tpu.vector_store %arg8[%c0_41, %c1_42], %67 {strides = array<i32>} : memref<32x2xf32, #tpu.memory_space<vmem>>, vector<32x1xf32>,
    } else {
    }
    %c0_i32_3 = arith.constant 0 : i32
    %10 = arith.cmpi eq, %arg1, %c0_i32_3 : i32
    %11 = arith.extui %10 : i1 to i32
    %c0_i32_4 = arith.constant 0 : i32
    %12 = arith.cmpi ne, %11, %c0_i32_4 : i32
    scf.if %12 {
      %c0 = arith.constant 0 : index
      %c0_5 = arith.constant 0 : index
      %13 = vector.load %arg9[%c0, %c0_5] : memref<32x2xf32, #tpu.memory_space<vmem>>, vector<32x2xf32>
      %cst = arith.constant 9.99999968E-21 : f32
      %14 = vector.broadcast %cst : f32 to vector<32x2xf32>
      %15 = arith.maximumf %13, %14 : vector<32x2xf32>
      %cst_6 = arith.constant 1.000000e+00 : f32
      %16 = vector.broadcast %cst_6 : f32 to vector<32x2xf32>
      %17 = arith.divf %16, %15 : vector<32x2xf32>
      %c0_7 = arith.constant 0 : index
      %c0_8 = arith.constant 0 : index
      %18 = vector.load %arg10[%c0_7, %c0_8] : memref<32x256xf32, #tpu.memory_space<vmem>>, vector<32x128xf32>
      %19 = vector.extract_strided_slice %17 {offsets = [0, 0], sizes = [32, 1], strides = [1, 1]} : vector<32x2xf32> to vector<32x1xf32>
      %20 = vector.broadcast %19 : vector<32x1xf32> to vector<32x128xf32>
      %21 = arith.mulf %18, %20 : vector<32x128xf32>
      %cst_9 = arith.constant 0.000000e+00 : f32
      %22 = vector.broadcast %cst_9 : f32 to vector<32x128xf32>
      %23 = arith.cmpf ogt, %21, %22 : vector<32x128xf32>
      %cst_10 = arith.constant 0.000000e+00 : f32
      %24 = vector.broadcast %cst_10 : f32 to vector<32x128xf32>
      %25 = arith.minimumf %21, %24 : vector<32x128xf32>
      %26 = math.exp %25 : vector<32x128xf32>
      %cst_11 = arith.constant 1.000000e+00 : f32
      %27 = vector.broadcast %cst_11 : f32 to vector<32x128xf32>
      %28 = arith.subf %26, %27 : vector<32x128xf32>
      %29 = arith.select %23, %21, %28 : vector<32x128xi1>, vector<32x128xf32>
      %30 = arith.truncf %29 : vector<32x128xf32> to vector<32x128xbf16>
      %c0_12 = arith.constant 0 : index
      %c0_13 = arith.constant 0 : index
      %31 = vector.load %arg7[%c0_12, %c0_13] : memref<32x256xbf16, #tpu.memory_space<vmem>>, vector<32x128xbf16>
      tpu.vector_store %arg7[%c0_12, %c0_13], %30 {strides = array<i32>} : memref<32x256xbf16, #tpu.memory_space<vmem>>, vector<32x128xbf16>,
      %c0_14 = arith.constant 0 : index
      %c128 = arith.constant 128 : index
      %32 = vector.load %arg10[%c0_14, %c128] : memref<32x256xf32, #tpu.memory_space<vmem>>, vector<32x128xf32>
      %33 = vector.extract_strided_slice %17 {offsets = [0, 1], sizes = [32, 1], strides = [1, 1]} : vector<32x2xf32> to vector<32x1xf32>
      %34 = vector.broadcast %33 : vector<32x1xf32> to vector<32x128xf32>
      %35 = arith.mulf %32, %34 : vector<32x128xf32>
      %cst_15 = arith.constant 0.000000e+00 : f32
      %36 = vector.broadcast %cst_15 : f32 to vector<32x128xf32>
      %37 = arith.cmpf ogt, %35, %36 : vector<32x128xf32>
      %cst_16 = arith.constant 0.000000e+00 : f32
      %38 = vector.broadcast %cst_16 : f32 to vector<32x128xf32>
      %39 = arith.minimumf %35, %38 : vector<32x128xf32>
      %40 = math.exp %39 : vector<32x128xf32>
      %cst_17 = arith.constant 1.000000e+00 : f32
      %41 = vector.broadcast %cst_17 : f32 to vector<32x128xf32>
      %42 = arith.subf %40, %41 : vector<32x128xf32>
      %43 = arith.select %37, %35, %42 : vector<32x128xi1>, vector<32x128xf32>
      %44 = arith.truncf %43 : vector<32x128xf32> to vector<32x128xbf16>
      %c0_18 = arith.constant 0 : index
      %c128_19 = arith.constant 128 : index
      %45 = vector.load %arg7[%c0_18, %c128_19] : memref<32x256xbf16, #tpu.memory_space<vmem>>, vector<32x128xbf16>
      tpu.vector_store %arg7[%c0_18, %c128_19], %44 {strides = array<i32>} : memref<32x256xbf16, #tpu.memory_space<vmem>>, vector<32x128xbf16>,
    } else {
    }
    return
  }
  func.func @transform_0(%arg0: i32, %arg1: i32, %arg2: memref<1xi32, #tpu.memory_space<smem>>) -> (i32, i32) {
    %c0_i32 = arith.constant 0 : i32
    %c0_i32_0 = arith.constant 0 : i32
    return %arg0, %c0_i32 : i32, i32
  }
  func.func @transform_1(%arg0: i32, %arg1: i32, %arg2: memref<1xi32, #tpu.memory_space<smem>>) -> (i32, i32) {
    %c0_i32 = arith.constant 0 : i32
    %c0_i32_0 = arith.constant 0 : i32
    return %c0_i32, %arg1 : i32, i32
  }
  func.func @transform_2(%arg0: i32, %arg1: i32, %arg2: memref<1xi32, #tpu.memory_space<smem>>) -> (i32, i32) {
    %c0_i32 = arith.constant 0 : i32
    %c0_i32_0 = arith.constant 0 : i32
    return %arg1, %c0_i32 : i32, i32
  }
  func.func @transform_3(%arg0: i32, %arg1: i32, %arg2: memref<1xi32, #tpu.memory_space<smem>>) -> (i32, i32) {
    %c0_i32 = arith.constant 0 : i32
    return %arg0, %arg1 : i32, i32
  }
  func.func @transform_4(%arg0: i32, %arg1: i32, %arg2: memref<1xi32, #tpu.memory_space<smem>>) -> (i32, i32) {
    %c0_i32 = arith.constant 0 : i32
    %c0_i32_0 = arith.constant 0 : i32
    return %arg0, %c0_i32 : i32, i32
  }
}

module attributes {stable_mosaic.version = 11 : i64} {
  func.func @_proj_kernel(%arg0: i32, %arg1: memref<128x64xbf16, #tpu.memory_space<vmem>>, %arg2: memref<64x256xbf16, #tpu.memory_space<vmem>>, %arg3: memref<256x4xbf16, #tpu.memory_space<vmem>>, %arg4: memref<128x256xbf16, #tpu.memory_space<vmem>>, %arg5: memref<128x4xf32, #tpu.memory_space<vmem>>) attributes {dimension_semantics = [#tpu.dimension_semantics<parallel>], iteration_bounds = array<i64: 1>, scalar_prefetch = 0 : i64, scratch_operands = 0 : i64, tpu.core_type = #tpu.core_type<tc>, window_params = [{transform_indices = @transform_0, window_bounds = array<i64: 128, 64>}, {pipeline_mode = #tpu.pipeline_mode<synchronous>, transform_indices = @transform_1, window_bounds = array<i64: 64, 256>}, {pipeline_mode = #tpu.pipeline_mode<synchronous>, transform_indices = @transform_2, window_bounds = array<i64: 256, 4>}, {transform_indices = @transform_3, window_bounds = array<i64: 128, 256>}, {transform_indices = @transform_4, window_bounds = array<i64: 128, 4>}]} {
    %c0 = arith.constant 0 : index
    %c0_0 = arith.constant 0 : index
    %0 = vector.load %arg1[%c0, %c0_0] : memref<128x64xbf16, #tpu.memory_space<vmem>>, vector<128x64xbf16>
    %c0_1 = arith.constant 0 : index
    %c0_2 = arith.constant 0 : index
    %1 = vector.load %arg2[%c0_1, %c0_2] : memref<64x256xbf16, #tpu.memory_space<vmem>>, vector<64x256xbf16>
    %cst = arith.constant dense<0.000000e+00> : vector<128x256xf32>
    %2 = tpu.matmul %0, %1, %cst {dimension_numbers = #tpu.dot_dimension_numbers<[1], [0], [0], [1], [0, 0, 1, 1], [], []>} : vector<128x64xbf16>, vector<64x256xbf16>, vector<128x256xf32> -> vector<128x256xf32>
    %3 = arith.truncf %2 : vector<128x256xf32> to vector<128x256xbf16>
    %c0_3 = arith.constant 0 : index
    %c0_4 = arith.constant 0 : index
    %4 = vector.load %arg4[%c0_3, %c0_4] : memref<128x256xbf16, #tpu.memory_space<vmem>>, vector<128x256xbf16>
    tpu.vector_store %arg4[%c0_3, %c0_4], %3 {strides = array<i32>} : memref<128x256xbf16, #tpu.memory_space<vmem>>, vector<128x256xbf16>,
    %c0_5 = arith.constant 0 : index
    %c0_6 = arith.constant 0 : index
    %5 = vector.load %arg3[%c0_5, %c0_6] : memref<256x4xbf16, #tpu.memory_space<vmem>>, vector<256x4xbf16>
    %cst_7 = arith.constant dense<0.000000e+00> : vector<128x4xf32>
    %6 = tpu.matmul %3, %5, %cst_7 {dimension_numbers = #tpu.dot_dimension_numbers<[1], [0], [0], [1], [0, 0, 1, 1], [], []>} : vector<128x256xbf16>, vector<256x4xbf16>, vector<128x4xf32> -> vector<128x4xf32>
    %c0_8 = arith.constant 0 : index
    %c0_9 = arith.constant 0 : index
    %7 = vector.load %arg5[%c0_8, %c0_9] : memref<128x4xf32, #tpu.memory_space<vmem>>, vector<128x4xf32>
    tpu.vector_store %arg5[%c0_8, %c0_9], %6 {strides = array<i32>} : memref<128x4xf32, #tpu.memory_space<vmem>>, vector<128x4xf32>,
    return
  }
  func.func @transform_0(%arg0: i32) -> (i32, i32) {
    %c0_i32 = arith.constant 0 : i32
    %c0_i32_0 = arith.constant 0 : i32
    return %arg0, %c0_i32 : i32, i32
  }
  func.func @transform_1(%arg0: i32) -> (i32, i32) {
    %c0_i32 = arith.constant 0 : i32
    %c0_i32_0 = arith.constant 0 : i32
    %c0_i32_1 = arith.constant 0 : i32
    return %c0_i32, %c0_i32_0 : i32, i32
  }
  func.func @transform_2(%arg0: i32) -> (i32, i32) {
    %c0_i32 = arith.constant 0 : i32
    %c0_i32_0 = arith.constant 0 : i32
    %c0_i32_1 = arith.constant 0 : i32
    return %c0_i32, %c0_i32_0 : i32, i32
  }
  func.func @transform_3(%arg0: i32) -> (i32, i32) {
    %c0_i32 = arith.constant 0 : i32
    %c0_i32_0 = arith.constant 0 : i32
    return %arg0, %c0_i32 : i32, i32
  }
  func.func @transform_4(%arg0: i32) -> (i32, i32) {
    %c0_i32 = arith.constant 0 : i32
    %c0_i32_0 = arith.constant 0 : i32
    return %arg0, %c0_i32 : i32, i32
  }
}

module attributes {stable_mosaic.version = 11 : i64} {
  func.func @kernel(%arg0: i32, %arg1: i32, %arg2: memref<1xi32, #tpu.memory_space<smem>>, %arg3: memref<32x2xf32, #tpu.memory_space<vmem>>, %arg4: memref<2x128xf32, #tpu.memory_space<vmem>>, %arg5: memref<128x256xbf16, #tpu.memory_space<vmem>>, %arg6: memref<32x128xi8, #tpu.memory_space<vmem>>, %arg7: memref<32x128xf32, #tpu.memory_space<vmem>>, %arg8: memref<32x2xf32, #tpu.memory_space<vmem>>, %arg9: memref<32x2xf32, #tpu.memory_space<vmem>>, %arg10: memref<32x256xf32, #tpu.memory_space<vmem>>) attributes {dimension_semantics = [#tpu.dimension_semantics<parallel>, #tpu.dimension_semantics<arbitrary>], iteration_bounds = array<i64: 1, 1>, scalar_prefetch = 1 : i64, scratch_operands = 3 : i64, tpu.core_type = #tpu.core_type<tc>, window_params = [{transform_indices = @transform_0, window_bounds = array<i64: 32, 2>}, {transform_indices = @transform_1, window_bounds = array<i64: 2, 128>}, {transform_indices = @transform_2, window_bounds = array<i64: 128, 256>}, {transform_indices = @transform_3, window_bounds = array<i64: 32, 128>}, {transform_indices = @transform_4, window_bounds = array<i64: 32, 128>}]} {
    %c0_i32 = arith.constant 0 : i32
    %0 = arith.cmpi eq, %arg1, %c0_i32 : i32
    %1 = arith.extui %0 : i1 to i32
    %c0_i32_0 = arith.constant 0 : i32
    %2 = arith.cmpi ne, %1, %c0_i32_0 : i32
    scf.if %2 {
      %cst = arith.constant -1.000000e+09 : f32
      %13 = vector.broadcast %cst : f32 to vector<32x2xf32>
      %c0 = arith.constant 0 : index
      %c0_5 = arith.constant 0 : index
      %14 = vector.load %arg8[%c0, %c0_5] : memref<32x2xf32, #tpu.memory_space<vmem>>, vector<32x2xf32>
      tpu.vector_store %arg8[%c0, %c0_5], %13 {strides = array<i32>} : memref<32x2xf32, #tpu.memory_space<vmem>>, vector<32x2xf32>,
      %cst_6 = arith.constant 0.000000e+00 : f32
      %15 = vector.broadcast %cst_6 : f32 to vector<32x2xf32>
      %c0_7 = arith.constant 0 : index
      %c0_8 = arith.constant 0 : index
      %16 = vector.load %arg9[%c0_7, %c0_8] : memref<32x2xf32, #tpu.memory_space<vmem>>, vector<32x2xf32>
      tpu.vector_store %arg9[%c0_7, %c0_8], %15 {strides = array<i32>} : memref<32x2xf32, #tpu.memory_space<vmem>>, vector<32x2xf32>,
      %cst_9 = arith.constant 0.000000e+00 : f32
      %17 = vector.broadcast %cst_9 : f32 to vector<32x256xf32>
      %c0_10 = arith.constant 0 : index
      %c0_11 = arith.constant 0 : index
      %18 = vector.load %arg10[%c0_10, %c0_11] : memref<32x256xf32, #tpu.memory_space<vmem>>, vector<32x256xf32>
      tpu.vector_store %arg10[%c0_10, %c0_11], %17 {strides = array<i32>} : memref<32x256xf32, #tpu.memory_space<vmem>>, vector<32x256xf32>,
    } else {
    }
    %c1_i32 = arith.constant 1 : i32
    %3 = arith.muli %arg0, %c1_i32 : i32
    %4 = arith.addi %3, %arg1 : i32
    %5 = arith.index_cast %4 : i32 to index
    %6 = memref.load %arg2[%5] : memref<1xi32, #tpu.memory_space<smem>>
    %c0_i32_1 = arith.constant 0 : i32
    %7 = arith.cmpi sgt, %6, %c0_i32_1 : i32
    %8 = arith.extui %7 : i1 to i32
    %c0_i32_2 = arith.constant 0 : i32
    %9 = arith.cmpi ne, %8, %c0_i32_2 : i32
    scf.if %9 {
      %c0 = arith.constant 0 : index
      %c0_5 = arith.constant 0 : index
      %13 = vector.load %arg6[%c0, %c0_5] : memref<32x128xi8, #tpu.memory_space<vmem>>, vector<32x128xi8>
      %14 = arith.sitofp %13 : vector<32x128xi8> to vector<32x128xf32>
      %cst = arith.constant 1.000000e+00 : f32
      %15 = vector.broadcast %cst : f32 to vector<32x128xf32>
      %16 = arith.subf %14, %15 : vector<32x128xf32>
      %cst_6 = arith.constant 2.000000e+09 : f32
      %17 = vector.broadcast %cst_6 : f32 to vector<32x128xf32>
      %18 = arith.mulf %16, %17 : vector<32x128xf32>
      %c0_7 = arith.constant 0 : index
      %c0_8 = arith.constant 0 : index
      %19 = vector.load %arg5[%c0_7, %c0_8] : memref<128x256xbf16, #tpu.memory_space<vmem>>, vector<128x256xbf16>
      %c0_9 = arith.constant 0 : index
      %c0_10 = arith.constant 0 : index
      %20 = vector.load %arg3[%c0_9, %c0_10] : memref<32x2xf32, #tpu.memory_space<vmem>>, vector<32x2xf32>
      %c0_11 = arith.constant 0 : index
      %c0_12 = arith.constant 0 : index
      %21 = vector.load %arg4[%c0_11, %c0_12] : memref<2x128xf32, #tpu.memory_space<vmem>>, vector<2x128xf32>
      %22 = vector.extract_strided_slice %20 {offsets = [0, 0], sizes = [32, 1], strides = [1, 1]} : vector<32x2xf32> to vector<32x1xf32>
      %23 = vector.extract_strided_slice %21 {offsets = [0, 0], sizes = [1, 128], strides = [1, 1]} : vector<2x128xf32> to vector<1x128xf32>
      %24 = vector.broadcast %22 : vector<32x1xf32> to vector<32x128xf32>
      %25 = vector.broadcast %23 : vector<1x128xf32> to vector<32x128xf32>
      %26 = arith.addf %24, %25 : vector<32x128xf32>
      %cst_13 = arith.constant 2.000000e-01 : f32
      %27 = vector.broadcast %cst_13 : f32 to vector<32x128xf32>
      %28 = arith.mulf %27, %26 : vector<32x128xf32>
      %29 = arith.maximumf %26, %28 : vector<32x128xf32>
      %30 = arith.addf %29, %18 : vector<32x128xf32>
      %c0_14 = arith.constant 0 : index
      %c0_15 = arith.constant 0 : index
      %31 = vector.load %arg8[%c0_14, %c0_15] : memref<32x2xf32, #tpu.memory_space<vmem>>, vector<32x1xf32>
      %cst_16 = arith.constant dense<0xFF800000> : vector<32xf32>
      %32 = vector.multi_reduction <maximumf>, %30, %cst_16 [1] : vector<32x128xf32> to vector<32xf32>
      %33 = vector.shape_cast %32 : vector<32xf32> to vector<32x1xf32>
      %34 = arith.maximumf %31, %33 : vector<32x1xf32>
      %35 = arith.subf %31, %34 : vector<32x1xf32>
      %36 = math.exp %35 : vector<32x1xf32>
      %37 = vector.broadcast %34 : vector<32x1xf32> to vector<32x128xf32>
      %38 = arith.subf %30, %37 : vector<32x128xf32>
      %39 = math.exp %38 : vector<32x128xf32>
      %c0_17 = arith.constant 0 : index
      %c0_18 = arith.constant 0 : index
      %40 = vector.load %arg9[%c0_17, %c0_18] : memref<32x2xf32, #tpu.memory_space<vmem>>, vector<32x1xf32>
      %41 = arith.mulf %36, %40 : vector<32x1xf32>
      %cst_19 = arith.constant dense<0.000000e+00> : vector<32xf32>
      %42 = vector.multi_reduction <add>, %39, %cst_19 [1] : vector<32x128xf32> to vector<32xf32>
      %43 = vector.shape_cast %42 : vector<32xf32> to vector<32x1xf32>
      %44 = arith.addf %41, %43 : vector<32x1xf32>
      %c0_20 = arith.constant 0 : index
      %c0_21 = arith.constant 0 : index
      %45 = vector.load %arg9[%c0_20, %c0_21] : memref<32x2xf32, #tpu.memory_space<vmem>>, vector<32x1xf32>
      tpu.vector_store %arg9[%c0_20, %c0_21], %44 {strides = array<i32>} : memref<32x2xf32, #tpu.memory_space<vmem>>, vector<32x1xf32>,
      %c0_22 = arith.constant 0 : index
      %c0_23 = arith.constant 0 : index
      %46 = vector.load %arg10[%c0_22, %c0_23] : memref<32x256xf32, #tpu.memory_space<vmem>>, vector<32x128xf32>
      %47 = vector.broadcast %36 : vector<32x1xf32> to vector<32x128xf32>
      %48 = arith.mulf %47, %46 : vector<32x128xf32>
      %49 = arith.truncf %39 : vector<32x128xf32> to vector<32x128xbf16>
      %50 = vector.extract_strided_slice %19 {offsets = [0, 0], sizes = [128, 128], strides = [1, 1]} : vector<128x256xbf16> to vector<128x128xbf16>
      %cst_24 = arith.constant dense<0.000000e+00> : vector<32x128xf32>
      %51 = tpu.matmul %49, %50, %cst_24 {dimension_numbers = #tpu.dot_dimension_numbers<[1], [0], [0], [1], [0, 0, 1, 1], [], []>} : vector<32x128xbf16>, vector<128x128xbf16>, vector<32x128xf32> -> vector<32x128xf32>
      %52 = arith.addf %48, %51 : vector<32x128xf32>
      %c0_25 = arith.constant 0 : index
      %c0_26 = arith.constant 0 : index
      %53 = vector.load %arg10[%c0_25, %c0_26] : memref<32x256xf32, #tpu.memory_space<vmem>>, vector<32x128xf32>
      tpu.vector_store %arg10[%c0_25, %c0_26], %52 {strides = array<i32>} : memref<32x256xf32, #tpu.memory_space<vmem>>, vector<32x128xf32>,
      %c0_27 = arith.constant 0 : index
      %c0_28 = arith.constant 0 : index
      %54 = vector.load %arg8[%c0_27, %c0_28] : memref<32x2xf32, #tpu.memory_space<vmem>>, vector<32x1xf32>
      tpu.vector_store %arg8[%c0_27, %c0_28], %34 {strides = array<i32>} : memref<32x2xf32, #tpu.memory_space<vmem>>, vector<32x1xf32>,
      %55 = vector.extract_strided_slice %20 {offsets = [0, 1], sizes = [32, 1], strides = [1, 1]} : vector<32x2xf32> to vector<32x1xf32>
      %56 = vector.extract_strided_slice %21 {offsets = [1, 0], sizes = [1, 128], strides = [1, 1]} : vector<2x128xf32> to vector<1x128xf32>
      %57 = vector.broadcast %55 : vector<32x1xf32> to vector<32x128xf32>
      %58 = vector.broadcast %56 : vector<1x128xf32> to vector<32x128xf32>
      %59 = arith.addf %57, %58 : vector<32x128xf32>
      %cst_29 = arith.constant 2.000000e-01 : f32
      %60 = vector.broadcast %cst_29 : f32 to vector<32x128xf32>
      %61 = arith.mulf %60, %59 : vector<32x128xf32>
      %62 = arith.maximumf %59, %61 : vector<32x128xf32>
      %63 = arith.addf %62, %18 : vector<32x128xf32>
      %c0_30 = arith.constant 0 : index
      %c1 = arith.constant 1 : index
      %64 = vector.load %arg8[%c0_30, %c1] : memref<32x2xf32, #tpu.memory_space<vmem>>, vector<32x1xf32>
      %cst_31 = arith.constant dense<0xFF800000> : vector<32xf32>
      %65 = vector.multi_reduction <maximumf>, %63, %cst_31 [1] : vector<32x128xf32> to vector<32xf32>
      %66 = vector.shape_cast %65 : vector<32xf32> to vector<32x1xf32>
      %67 = arith.maximumf %64, %66 : vector<32x1xf32>
      %68 = arith.subf %64, %67 : vector<32x1xf32>
      %69 = math.exp %68 : vector<32x1xf32>
      %70 = vector.broadcast %67 : vector<32x1xf32> to vector<32x128xf32>
      %71 = arith.subf %63, %70 : vector<32x128xf32>
      %72 = math.exp %71 : vector<32x128xf32>
      %c0_32 = arith.constant 0 : index
      %c1_33 = arith.constant 1 : index
      %73 = vector.load %arg9[%c0_32, %c1_33] : memref<32x2xf32, #tpu.memory_space<vmem>>, vector<32x1xf32>
      %74 = arith.mulf %69, %73 : vector<32x1xf32>
      %cst_34 = arith.constant dense<0.000000e+00> : vector<32xf32>
      %75 = vector.multi_reduction <add>, %72, %cst_34 [1] : vector<32x128xf32> to vector<32xf32>
      %76 = vector.shape_cast %75 : vector<32xf32> to vector<32x1xf32>
      %77 = arith.addf %74, %76 : vector<32x1xf32>
      %c0_35 = arith.constant 0 : index
      %c1_36 = arith.constant 1 : index
      %78 = vector.load %arg9[%c0_35, %c1_36] : memref<32x2xf32, #tpu.memory_space<vmem>>, vector<32x1xf32>
      tpu.vector_store %arg9[%c0_35, %c1_36], %77 {strides = array<i32>} : memref<32x2xf32, #tpu.memory_space<vmem>>, vector<32x1xf32>,
      %c0_37 = arith.constant 0 : index
      %c128 = arith.constant 128 : index
      %79 = vector.load %arg10[%c0_37, %c128] : memref<32x256xf32, #tpu.memory_space<vmem>>, vector<32x128xf32>
      %80 = vector.broadcast %69 : vector<32x1xf32> to vector<32x128xf32>
      %81 = arith.mulf %80, %79 : vector<32x128xf32>
      %82 = arith.truncf %72 : vector<32x128xf32> to vector<32x128xbf16>
      %83 = vector.extract_strided_slice %19 {offsets = [0, 128], sizes = [128, 128], strides = [1, 1]} : vector<128x256xbf16> to vector<128x128xbf16>
      %cst_38 = arith.constant dense<0.000000e+00> : vector<32x128xf32>
      %84 = tpu.matmul %82, %83, %cst_38 {dimension_numbers = #tpu.dot_dimension_numbers<[1], [0], [0], [1], [0, 0, 1, 1], [], []>} : vector<32x128xbf16>, vector<128x128xbf16>, vector<32x128xf32> -> vector<32x128xf32>
      %85 = arith.addf %81, %84 : vector<32x128xf32>
      %c0_39 = arith.constant 0 : index
      %c128_40 = arith.constant 128 : index
      %86 = vector.load %arg10[%c0_39, %c128_40] : memref<32x256xf32, #tpu.memory_space<vmem>>, vector<32x128xf32>
      tpu.vector_store %arg10[%c0_39, %c128_40], %85 {strides = array<i32>} : memref<32x256xf32, #tpu.memory_space<vmem>>, vector<32x128xf32>,
      %c0_41 = arith.constant 0 : index
      %c1_42 = arith.constant 1 : index
      %87 = vector.load %arg8[%c0_41, %c1_42] : memref<32x2xf32, #tpu.memory_space<vmem>>, vector<32x1xf32>
      tpu.vector_store %arg8[%c0_41, %c1_42], %67 {strides = array<i32>} : memref<32x2xf32, #tpu.memory_space<vmem>>, vector<32x1xf32>,
    } else {
    }
    %c0_i32_3 = arith.constant 0 : i32
    %10 = arith.cmpi eq, %arg1, %c0_i32_3 : i32
    %11 = arith.extui %10 : i1 to i32
    %c0_i32_4 = arith.constant 0 : i32
    %12 = arith.cmpi ne, %11, %c0_i32_4 : i32
    scf.if %12 {
      %c0 = arith.constant 0 : index
      %c0_5 = arith.constant 0 : index
      %13 = vector.load %arg9[%c0, %c0_5] : memref<32x2xf32, #tpu.memory_space<vmem>>, vector<32x2xf32>
      %cst = arith.constant 9.99999968E-21 : f32
      %14 = vector.broadcast %cst : f32 to vector<32x2xf32>
      %15 = arith.maximumf %13, %14 : vector<32x2xf32>
      %cst_6 = arith.constant 1.000000e+00 : f32
      %16 = vector.broadcast %cst_6 : f32 to vector<32x2xf32>
      %17 = arith.divf %16, %15 : vector<32x2xf32>
      %cst_7 = arith.constant 0.000000e+00 : f32
      %18 = vector.broadcast %cst_7 : f32 to vector<32x128xf32>
      %c0_8 = arith.constant 0 : index
      %c0_9 = arith.constant 0 : index
      %19 = vector.load %arg10[%c0_8, %c0_9] : memref<32x256xf32, #tpu.memory_space<vmem>>, vector<32x128xf32>
      %20 = vector.extract_strided_slice %17 {offsets = [0, 0], sizes = [32, 1], strides = [1, 1]} : vector<32x2xf32> to vector<32x1xf32>
      %21 = vector.broadcast %20 : vector<32x1xf32> to vector<32x128xf32>
      %22 = arith.mulf %19, %21 : vector<32x128xf32>
      %23 = arith.addf %18, %22 : vector<32x128xf32>
      %c0_10 = arith.constant 0 : index
      %c128 = arith.constant 128 : index
      %24 = vector.load %arg10[%c0_10, %c128] : memref<32x256xf32, #tpu.memory_space<vmem>>, vector<32x128xf32>
      %25 = vector.extract_strided_slice %17 {offsets = [0, 1], sizes = [32, 1], strides = [1, 1]} : vector<32x2xf32> to vector<32x1xf32>
      %26 = vector.broadcast %25 : vector<32x1xf32> to vector<32x128xf32>
      %27 = arith.mulf %24, %26 : vector<32x128xf32>
      %28 = arith.addf %23, %27 : vector<32x128xf32>
      %cst_11 = arith.constant 5.000000e-01 : f32
      %29 = vector.broadcast %cst_11 : f32 to vector<32x128xf32>
      %30 = arith.mulf %28, %29 : vector<32x128xf32>
      %c0_12 = arith.constant 0 : index
      %c0_13 = arith.constant 0 : index
      %31 = vector.load %arg7[%c0_12, %c0_13] : memref<32x128xf32, #tpu.memory_space<vmem>>, vector<32x128xf32>
      tpu.vector_store %arg7[%c0_12, %c0_13], %30 {strides = array<i32>} : memref<32x128xf32, #tpu.memory_space<vmem>>, vector<32x128xf32>,
    } else {
    }
    return
  }
  func.func @transform_0(%arg0: i32, %arg1: i32, %arg2: memref<1xi32, #tpu.memory_space<smem>>) -> (i32, i32) {
    %c0_i32 = arith.constant 0 : i32
    %c0_i32_0 = arith.constant 0 : i32
    return %arg0, %c0_i32 : i32, i32
  }
  func.func @transform_1(%arg0: i32, %arg1: i32, %arg2: memref<1xi32, #tpu.memory_space<smem>>) -> (i32, i32) {
    %c0_i32 = arith.constant 0 : i32
    %c0_i32_0 = arith.constant 0 : i32
    return %c0_i32, %arg1 : i32, i32
  }
  func.func @transform_2(%arg0: i32, %arg1: i32, %arg2: memref<1xi32, #tpu.memory_space<smem>>) -> (i32, i32) {
    %c0_i32 = arith.constant 0 : i32
    %c0_i32_0 = arith.constant 0 : i32
    return %arg1, %c0_i32 : i32, i32
  }
  func.func @transform_3(%arg0: i32, %arg1: i32, %arg2: memref<1xi32, #tpu.memory_space<smem>>) -> (i32, i32) {
    %c0_i32 = arith.constant 0 : i32
    return %arg0, %arg1 : i32, i32
  }
  func.func @transform_4(%arg0: i32, %arg1: i32, %arg2: memref<1xi32, #tpu.memory_space<smem>>) -> (i32, i32) {
    %c0_i32 = arith.constant 0 : i32
    %c0_i32_0 = arith.constant 0 : i32
    return %arg0, %c0_i32 : i32, i32
  }
}

</mosaic_0001>

<llo_original>
// kernel: attnet_s_forward.4
$region0: #{attnet_s_forward.4}
  #allocation0 [shape = 'u32[]', space=smem, size = 0x4, offset = 0x4, fixed_abs, tag = 'smem constant byte address 0x4 - core index']
  #allocation1 [shape = 'u32[144,128]{1,0:T(1,128)}', space=vmem, size = 0x12000, scoped, tag = 'internal scratch']
  %s0 = inlined_call_operand.vmem [shape: bf16[128,32], index: 0, kind: input, shape index: {}]
  %s1 = inlined_call_operand.vmem [shape: bf16[32,256], index: 1, kind: input, shape index: {}]
  %s2 = inlined_call_operand.vmem [shape: bf16[256,4], index: 2, kind: input, shape index: {}]
  %s3 = inlined_call_operand.vmem [shape: bf16[128,256], index: 3, kind: output, shape index: {0}]
  %s4 = inlined_call_operand.vmem [shape: f32[128,4], index: 4, kind: output, shape index: {1}]
  %5 = xla_tuple %s3, %s4
  %s6 = sld [smem:[#allocation0]]
  $region30: #{attnet_s_forward.4} parent=0
    _
  %s8 = ssub.s32 1, %s6
  %s9 = scalar_select 0, %s8, %s6
  // Predicated region
  $region2: #{attnet_s_forward.4} parent=0 // pred_check
    _
  $region3: #{attnet_s_forward.4} parent=0 // pred_check_branch
    %11 = sbr.rel (0) target = $region5
  $region4: #{attnet_s_forward.4} parent=0 // pred_region
    _
  $region5: #{attnet_s_forward.4} parent=0 // pred_fallthru
    _
  // Predicated region
  $region6: #{attnet_s_forward.4} parent=0 // pred_check
    _
  $region7: #{attnet_s_forward.4} parent=0 // pred_check_branch
    %13 = sbr.rel (0) target = $region9
  $region8: #{attnet_s_forward.4} parent=0 // pred_region
    _
  $region9: #{attnet_s_forward.4} parent=0 // pred_fallthru
    _
  // Predicated region
  $region10: #{attnet_s_forward.4} parent=0 // pred_check
    _
  $region11: #{attnet_s_forward.4} parent=0 // pred_check_branch
    %15 = sbr.rel (0) target = $region13
  $region12: #{attnet_s_forward.4} parent=0 // pred_region
    _
  $region13: #{attnet_s_forward.4} parent=0 // pred_fallthru
    _
  %v17 = vld [vmem:[%s0] sm:$0xf]
  %v18 = vld [vmem:[%s0 + $0x4] sm:$0xf]
  %v19 = vld [vmem:[%s0 + $0x8] sm:$0xf]
  %v20 = vld [vmem:[%s0 + $0xc] sm:$0xf]
  %v21 = vld [vmem:[%s0 + $0x10] sm:$0xf]
  %v22 = vld [vmem:[%s0 + $0x14] sm:$0xf]
  %v23 = vld [vmem:[%s0 + $0x18] sm:$0xf]
  %v24 = vld [vmem:[%s0 + $0x1c] sm:$0xf]
  %v25 = vld [vmem:[%s0 + $0x20] sm:$0xf]
  %v26 = vld [vmem:[%s0 + $0x24] sm:$0xf]
  %v27 = vld [vmem:[%s0 + $0x28] sm:$0xf]
  %v28 = vld [vmem:[%s0 + $0x2c] sm:$0xf]
  %v29 = vld [vmem:[%s0 + $0x30] sm:$0xf]
  %v30 = vld [vmem:[%s0 + $0x34] sm:$0xf]
  %v31 = vld [vmem:[%s0 + $0x38] sm:$0xf]
  %v32 = vld [vmem:[%s0 + $0x3c] sm:$0xf]
  %v33 = vld [vmem:[%s1] sm:$0xff]
  %v34 = vld [vmem:[%s1 + $0x8] sm:$0xff]
  %v35 = vld [vmem:[%s1 + $0x10] sm:$0xff]
  %v36 = vld [vmem:[%s1 + $0x18] sm:$0xff]
  %v53 = vunpack.c.l.b16 %v17
  %v54 = vunpack.c.l.b16 %v18
  %v55 = vunpack.c.l.b16 %v19
  %v56 = vunpack.c.l.b16 %v20
  %v57 = vunpack.c.l.b16 %v21
  %v58 = vunpack.c.l.b16 %v22
  %v59 = vunpack.c.l.b16 %v23
  %v60 = vunpack.c.l.b16 %v24
  %v61 = vunpack.c.l.b16 %v25
  %v62 = vunpack.c.l.b16 %v26
  %v63 = vunpack.c.l.b16 %v27
  %v64 = vunpack.c.l.b16 %v28
  %v65 = vunpack.c.l.b16 %v29
  %v66 = vunpack.c.l.b16 %v30
  %v67 = vunpack.c.l.b16 %v31
  %v68 = vunpack.c.l.b16 %v32
  %v69 = vpack.c.b16 %v54, %v53
  %v70 = vpack.c.b16 %v56, %v55
  %v71 = vpack.c.b16 %v58, %v57
  %v72 = vpack.c.b16 %v60, %v59
  %v73 = vpack.c.b16 %v62, %v61
  %v74 = vpack.c.b16 %v64, %v63
  %v75 = vpack.c.b16 %v66, %v65
  %v76 = vpack.c.b16 %v68, %v67
  %v81 = vunpack.c.l.b16 %v33
  %v82 = vunpack.c.h.b16 %v33
  %v83 = vunpack.c.l.b16 %v34
  %v84 = vunpack.c.h.b16 %v34
  %v85 = vunpack.c.l.b16 %v35
  %v86 = vunpack.c.h.b16 %v35
  %v87 = vunpack.c.l.b16 %v36
  %v88 = vunpack.c.h.b16 %v36
  %v89 = vpack.c.b16 %v83, %v81
  %v90 = vpack.c.b16 %v84, %v82
  %v91 = vpack.c.b16 %v87, %v85
  %v92 = vpack.c.b16 %v88, %v86
  %vm97 = vcmask 261120
  %v99 = vsel %vm97, %v69, 0
  %v102 = vsel %vm97, %v70, 0
  %v105 = vsel %vm97, %v71, 0
  %v108 = vsel %vm97, %v72, 0
  %v111 = vsel %vm97, %v73, 0
  %v114 = vsel %vm97, %v74, 0
  %v117 = vsel %vm97, %v75, 0
  %v120 = vsel %vm97, %v76, 0
  %122 = vmatprep.subr.bf16.mxu0 %v90
  %123 = vmatpush1.bf16.msra.mxu0 %v89
  %124 = vmatprep.subr.bf16.mxu0 %v92
  %125 = vmatpush1.bf16.msra.mxu0 %v91
  %126 = vmatprep.subr.bf16.mxu0 0
  %127 = vmatpush1.bf16.msra.mxu0 0
  %128 = vmatprep.subr.bf16.mxu0 0
  %129 = vmatpush1.bf16.msra.mxu0 0
  %130 = vmatprep.subr.bf16.mxu0 0
  %131 = vmatpush1.bf16.msra.mxu0 0
  %132 = vmatprep.subr.bf16.mxu0 0
  %133 = vmatpush1.bf16.msra.mxu0 0
  %134 = vmatprep.subr.bf16.mxu0 0
  %135 = vmatpush1.bf16.msra.mxu0 0
  %136 = vmatprep.subr.bf16.mxu0 0
  %137 = vmatpush1.bf16.msra.mxu0 0
  %138 = vmatprep.subr.bf16.mxu0 0
  %139 = vmatpush1.bf16.msra.mxu0 0
  %140 = vmatprep.subr.bf16.mxu0 0
  %141 = vmatpush1.bf16.msra.mxu0 0
  %142 = vmatprep.subr.bf16.mxu0 0
  %143 = vmatpush1.bf16.msra.mxu0 0
  %144 = vmatprep.subr.bf16.mxu0 0
  %145 = vmatpush1.bf16.msra.mxu0 0
  %146 = vmatprep.subr.bf16.mxu0 0
  %147 = vmatpush1.bf16.msra.mxu0 0
  %148 = vmatprep.subr.bf16.mxu0 0
  %149 = vmatpush1.bf16.msra.mxu0 0
  %150 = vmatprep.subr.bf16.mxu0 0
  %151 = vmatpush1.bf16.msra.mxu0 0
  %152 = vmatprep.subr.bf16.mxu0 0
  %153 = vmatpush1.bf16.msra.mxu0 0
  %154 = vmatprep.mubr.bf16.mxu0 0
  %155 = vmatmul.mubr.bf16.gmra.mrb[0].mxu0 %v99
  %v156 = vpop.f32.mrb[0].mxu0
  %v157 = vadd.f32 0.0, %v156
  %v158 = vpop.f32.mrb[0].mxu0
  %v159 = vadd.f32 0.0, %v158
  %v160 = vpop.f32.mrb[0].mxu0
  %v161 = vadd.f32 0.0, %v160
  %v162 = vpop.f32.mrb[0].mxu0
  %v163 = vadd.f32 0.0, %v162
  %164 = vmatprep.mubr.bf16.mxu0 0
  %165 = vmatmul.mubr.bf16.gmra.mrb[0].mxu0 %v102
  %v166 = vpop.f32.mrb[0].mxu0
  %v167 = vadd.f32 0.0, %v166
  %v168 = vpop.f32.mrb[0].mxu0
  %v169 = vadd.f32 0.0, %v168
  %v170 = vpop.f32.mrb[0].mxu0
  %v171 = vadd.f32 0.0, %v170
  %v172 = vpop.f32.mrb[0].mxu0
  %v173 = vadd.f32 0.0, %v172
  %174 = vmatprep.mubr.bf16.mxu0 0
  %175 = vmatmul.mubr.bf16.gmra.mrb[0].mxu0 %v105
  %v176 = vpop.f32.mrb[0].mxu0
  %v177 = vadd.f32 0.0, %v176
  %v178 = vpop.f32.mrb[0].mxu0
  %v179 = vadd.f32 0.0, %v178
  %v180 = vpop.f32.mrb[0].mxu0
  %v181 = vadd.f32 0.0, %v180
  %v182 = vpop.f32.mrb[0].mxu0
  %v183 = vadd.f32 0.0, %v182
  %184 = vmatprep.mubr.bf16.mxu0 0
  %185 = vmatmul.mubr.bf16.gmra.mrb[0].mxu0 %v108
  %v186 = vpop.f32.mrb[0].mxu0
  %v187 = vadd.f32 0.0, %v186
  %v188 = vpop.f32.mrb[0].mxu0
  %v189 = vadd.f32 0.0, %v188
  %v190 = vpop.f32.mrb[0].mxu0
  %v191 = vadd.f32 0.0, %v190
  %v192 = vpop.f32.mrb[0].mxu0
  %v193 = vadd.f32 0.0, %v192
  %194 = vmatprep.mubr.bf16.mxu0 0
  %195 = vmatmul.mubr.bf16.gmra.mrb[0].mxu0 %v111
  %v196 = vpop.f32.mrb[0].mxu0
  %v197 = vadd.f32 0.0, %v196
  %v198 = vpop.f32.mrb[0].mxu0
  %v199 = vadd.f32 0.0, %v198
  %v200 = vpop.f32.mrb[0].mxu0
  %v201 = vadd.f32 0.0, %v200
  %v202 = vpop.f32.mrb[0].mxu0
  %v203 = vadd.f32 0.0, %v202
  %204 = vmatprep.mubr.bf16.mxu0 0
  %205 = vmatmul.mubr.bf16.gmra.mrb[0].mxu0 %v114
  %v206 = vpop.f32.mrb[0].mxu0
  %v207 = vadd.f32 0.0, %v206
  %v208 = vpop.f32.mrb[0].mxu0
  %v209 = vadd.f32 0.0, %v208
  %v210 = vpop.f32.mrb[0].mxu0
  %v211 = vadd.f32 0.0, %v210
  %v212 = vpop.f32.mrb[0].mxu0
  %v213 = vadd.f32 0.0, %v212
  %214 = vmatprep.mubr.bf16.mxu0 0
  %215 = vmatmul.mubr.bf16.gmra.mrb[0].mxu0 %v117
  %v216 = vpop.f32.mrb[0].mxu0
  %v217 = vadd.f32 0.0, %v216
  %v218 = vpop.f32.mrb[0].mxu0
  %v219 = vadd.f32 0.0, %v218
  %v220 = vpop.f32.mrb[0].mxu0
  %v221 = vadd.f32 0.0, %v220
  %v222 = vpop.f32.mrb[0].mxu0
  %v223 = vadd.f32 0.0, %v222
  %224 = vmatprep.mubr.bf16.mxu0 0
  %225 = vmatmul.mubr.bf16.gmra.mrb[0].mxu0 %v120
  %v226 = vpop.f32.mrb[0].mxu0
  %v227 = vadd.f32 0.0, %v226
  %v228 = vpop.f32.mrb[0].mxu0
  %v229 = vadd.f32 0.0, %v228
  %v230 = vpop.f32.mrb[0].mxu0
  %v231 = vadd.f32 0.0, %v230
  %v232 = vpop.f32.mrb[0].mxu0
  %v233 = vadd.f32 0.0, %v232
  %234 = vdwg.mxu0
  %v235 = vpack.c.bf16 %v161, %v157
  %v236 = vpack.c.bf16 %v163, %v159
  %v237 = vpack.c.bf16 %v171, %v167
  %v238 = vpack.c.bf16 %v173, %v169
  %v239 = vpack.c.bf16 %v181, %v177
  %v240 = vpack.c.bf16 %v183, %v179
  %v241 = vpack.c.bf16 %v191, %v187
  %v242 = vpack.c.bf16 %v193, %v189
  %v243 = vpack.c.bf16 %v201, %v197
  %v244 = vpack.c.bf16 %v203, %v199
  %v245 = vpack.c.bf16 %v211, %v207
  %v246 = vpack.c.bf16 %v213, %v209
  %v247 = vpack.c.bf16 %v221, %v217
  %v248 = vpack.c.bf16 %v223, %v219
  %v249 = vpack.c.bf16 %v231, %v227
  %v250 = vpack.c.bf16 %v233, %v229
  %v267 = vunpack.c.l.b16 %v235
  %v268 = vunpack.c.l.b16 %v236
  %v269 = vunpack.c.h.b16 %v235
  %v270 = vunpack.c.h.b16 %v236
  %v271 = vunpack.c.l.b16 %v237
  %v272 = vunpack.c.l.b16 %v238
  %v273 = vunpack.c.h.b16 %v237
  %v274 = vunpack.c.h.b16 %v238
  %v275 = vunpack.c.l.b16 %v239
  %v276 = vunpack.c.l.b16 %v240
  %v277 = vunpack.c.h.b16 %v239
  %v278 = vunpack.c.h.b16 %v240
  %v279 = vunpack.c.l.b16 %v241
  %v280 = vunpack.c.l.b16 %v242
  %v281 = vunpack.c.h.b16 %v241
  %v282 = vunpack.c.h.b16 %v242
  %v283 = vunpack.c.l.b16 %v243
  %v284 = vunpack.c.l.b16 %v244
  %v285 = vunpack.c.h.b16 %v243
  %v286 = vunpack.c.h.b16 %v244
  %v287 = vunpack.c.l.b16 %v245
  %v288 = vunpack.c.l.b16 %v246
  %v289 = vunpack.c.h.b16 %v245
  %v290 = vunpack.c.h.b16 %v246
  %v291 = vunpack.c.l.b16 %v247
  %v292 = vunpack.c.l.b16 %v248
  %v293 = vunpack.c.h.b16 %v247
  %v294 = vunpack.c.h.b16 %v248
  %v295 = vunpack.c.l.b16 %v249
  %v296 = vunpack.c.l.b16 %v250
  %v297 = vunpack.c.h.b16 %v249
  %v298 = vunpack.c.h.b16 %v250
  %v299 = vpack.c.b16 %v268, %v267
  %v300 = vpack.c.b16 %v270, %v269
  %v301 = vpack.c.b16 %v272, %v271
  %v302 = vpack.c.b16 %v274, %v273
  %v303 = vpack.c.b16 %v276, %v275
  %v304 = vpack.c.b16 %v278, %v277
  %v305 = vpack.c.b16 %v280, %v279
  %v306 = vpack.c.b16 %v282, %v281
  %v307 = vpack.c.b16 %v284, %v283
  %v308 = vpack.c.b16 %v286, %v285
  %v309 = vpack.c.b16 %v288, %v287
  %v310 = vpack.c.b16 %v290, %v289
  %v311 = vpack.c.b16 %v292, %v291
  %v312 = vpack.c.b16 %v294, %v293
  %v313 = vpack.c.b16 %v296, %v295
  %v314 = vpack.c.b16 %v298, %v297
  %331 = vst [vmem:[%s3] sm:$0xff] %v299
  %332 = vst [vmem:[%s3 + $0x8] sm:$0xff] %v300
  %333 = vst [vmem:[%s3 + $0x10] sm:$0xff] %v301
  %334 = vst [vmem:[%s3 + $0x18] sm:$0xff] %v302
  %335 = vst [vmem:[%s3 + $0x20] sm:$0xff] %v303
  %336 = vst [vmem:[%s3 + $0x28] sm:$0xff] %v304
  %337 = vst [vmem:[%s3 + $0x30] sm:$0xff] %v305
  %338 = vst [vmem:[%s3 + $0x38] sm:$0xff] %v306
  %339 = vst [vmem:[%s3 + $0x40] sm:$0xff] %v307
  %340 = vst [vmem:[%s3 + $0x48] sm:$0xff] %v308
  %341 = vst [vmem:[%s3 + $0x50] sm:$0xff] %v309
  %342 = vst [vmem:[%s3 + $0x58] sm:$0xff] %v310
  %343 = vst [vmem:[%s3 + $0x60] sm:$0xff] %v311
  %344 = vst [vmem:[%s3 + $0x68] sm:$0xff] %v312
  %345 = vst [vmem:[%s3 + $0x70] sm:$0xff] %v313
  %346 = vst [vmem:[%s3 + $0x78] sm:$0xff] %v314
  %v347 = vld [vmem:[%s2] sm:$0xf]
  %v348 = vld [vmem:[%s2 + $0x4] sm:$0xf]
  %v349 = vld [vmem:[%s2 + $0x8] sm:$0xf]
  %v350 = vld [vmem:[%s2 + $0xc] sm:$0xf]
  %v351 = vld [vmem:[%s2 + $0x10] sm:$0xf]
  %v352 = vld [vmem:[%s2 + $0x14] sm:$0xf]
  %v353 = vld [vmem:[%s2 + $0x18] sm:$0xf]
  %v354 = vld [vmem:[%s2 + $0x1c] sm:$0xf]
  %v355 = vld [vmem:[%s2 + $0x20] sm:$0xf]
  %v356 = vld [vmem:[%s2 + $0x24] sm:$0xf]
  %v357 = vld [vmem:[%s2 + $0x28] sm:$0xf]
  %v358 = vld [vmem:[%s2 + $0x2c] sm:$0xf]
  %v359 = vld [vmem:[%s2 + $0x30] sm:$0xf]
  %v360 = vld [vmem:[%s2 + $0x34] sm:$0xf]
  %v361 = vld [vmem:[%s2 + $0x38] sm:$0xf]
  %v362 = vld [vmem:[%s2 + $0x3c] sm:$0xf]
  %v363 = vld [vmem:[%s2 + $0x40] sm:$0xf]
  %v364 = vld [vmem:[%s2 + $0x44] sm:$0xf]
  %v365 = vld [vmem:[%s2 + $0x48] sm:$0xf]
  %v366 = vld [vmem:[%s2 + $0x4c] sm:$0xf]
  %v367 = vld [vmem:[%s2 + $0x50] sm:$0xf]
  %v368 = vld [vmem:[%s2 + $0x54] sm:$0xf]
  %v369 = vld [vmem:[%s2 + $0x58] sm:$0xf]
  %v370 = vld [vmem:[%s2 + $0x5c] sm:$0xf]
  %v371 = vld [vmem:[%s2 + $0x60] sm:$0xf]
  %v372 = vld [vmem:[%s2 + $0x64] sm:$0xf]
  %v373 = vld [vmem:[%s2 + $0x68] sm:$0xf]
  %v374 = vld [vmem:[%s2 + $0x6c] sm:$0xf]
  %v375 = vld [vmem:[%s2 + $0x70] sm:$0xf]
  %v376 = vld [vmem:[%s2 + $0x74] sm:$0xf]
  %v377 = vld [vmem:[%s2 + $0x78] sm:$0xf]
  %v378 = vld [vmem:[%s2 + $0x7c] sm:$0xf]
  %v411 = vunpack.c.l.b16 %v347
  %v412 = vunpack.c.l.b16 %v348
  %v413 = vunpack.c.l.b16 %v349
  %v414 = vunpack.c.l.b16 %v350
  %v415 = vunpack.c.l.b16 %v351
  %v416 = vunpack.c.l.b16 %v352
  %v417 = vunpack.c.l.b16 %v353
  %v418 = vunpack.c.l.b16 %v354
  %v419 = vunpack.c.l.b16 %v355
  %v420 = vunpack.c.l.b16 %v356
  %v421 = vunpack.c.l.b16 %v357
  %v422 = vunpack.c.l.b16 %v358
  %v423 = vunpack.c.l.b16 %v359
  %v424 = vunpack.c.l.b16 %v360
  %v425 = vunpack.c.l.b16 %v361
  %v426 = vunpack.c.l.b16 %v362
  %v427 = vunpack.c.l.b16 %v363
  %v428 = vunpack.c.l.b16 %v364
  %v429 = vunpack.c.l.b16 %v365
  %v430 = vunpack.c.l.b16 %v366
  %v431 = vunpack.c.l.b16 %v367
  %v432 = vunpack.c.l.b16 %v368
  %v433 = vunpack.c.l.b16 %v369
  %v434 = vunpack.c.l.b16 %v370
  %v435 = vunpack.c.l.b16 %v371
  %v436 = vunpack.c.l.b16 %v372
  %v437 = vunpack.c.l.b16 %v373
  %v438 = vunpack.c.l.b16 %v374
  %v439 = vunpack.c.l.b16 %v375
  %v440 = vunpack.c.l.b16 %v376
  %v441 = vunpack.c.l.b16 %v377
  %v442 = vunpack.c.l.b16 %v378
  %v443 = vpack.c.b16 %v412, %v411
  %v444 = vpack.c.b16 %v414, %v413
  %v445 = vpack.c.b16 %v416, %v415
  %v446 = vpack.c.b16 %v418, %v417
  %v447 = vpack.c.b16 %v420, %v419
  %v448 = vpack.c.b16 %v422, %v421
  %v449 = vpack.c.b16 %v424, %v423
  %v450 = vpack.c.b16 %v426, %v425
  %v451 = vpack.c.b16 %v428, %v427
  %v452 = vpack.c.b16 %v430, %v429
  %v453 = vpack.c.b16 %v432, %v431
  %v454 = vpack.c.b16 %v434, %v433
  %v455 = vpack.c.b16 %v436, %v435
  %v456 = vpack.c.b16 %v438, %v437
  %v457 = vpack.c.b16 %v440, %v439
  %v458 = vpack.c.b16 %v442, %v441
  %475 = vmatprep.subr.bf16.mxu0 0
  %476 = vmatpush1.bf16.msra.mxu0 %v443
  %477 = vmatprep.subr.bf16.mxu0 0
  %478 = vmatpush1.bf16.msra.mxu0 %v444
  %479 = vmatprep.subr.bf16.mxu0 0
  %480 = vmatpush1.bf16.msra.mxu0 %v445
  %481 = vmatprep.subr.bf16.mxu0 0
  %482 = vmatpush1.bf16.msra.mxu0 %v446
  %483 = vmatprep.subr.bf16.mxu0 0
  %484 = vmatpush1.bf16.msra.mxu0 %v447
  %485 = vmatprep.subr.bf16.mxu0 0
  %486 = vmatpush1.bf16.msra.mxu0 %v448
  %487 = vmatprep.subr.bf16.mxu0 0
  %488 = vmatpush1.bf16.msra.mxu0 %v449
  %489 = vmatprep.subr.bf16.mxu0 0
  %490 = vmatpush1.bf16.msra.mxu0 %v450
  %491 = vmatprep.subr.bf16.mxu0 0
  %492 = vmatpush1.bf16.msra.mxu0 %v451
  %493 = vmatprep.subr.bf16.mxu0 0
  %494 = vmatpush1.bf16.msra.mxu0 %v452
  %495 = vmatprep.subr.bf16.mxu0 0
  %496 = vmatpush1.bf16.msra.mxu0 %v453
  %497 = vmatprep.subr.bf16.mxu0 0
  %498 = vmatpush1.bf16.msra.mxu0 %v454
  %499 = vmatprep.subr.bf16.mxu0 0
  %500 = vmatpush1.bf16.msra.mxu0 %v455
  %501 = vmatprep.subr.bf16.mxu0 0
  %502 = vmatpush1.bf16.msra.mxu0 %v456
  %503 = vmatprep.subr.bf16.mxu0 0
  %504 = vmatpush1.bf16.msra.mxu0 %v457
  %505 = vmatprep.subr.bf16.mxu0 0
  %506 = vmatpush1.bf16.msra.mxu0 %v458
  %507 = vmatprep.mubr.bf16.mxu0 %v236
  %508 = vmatmul.mubr.bf16.gmra.mrb[0].mxu0 %v235
  %v509 = vpop.f32.mrb[0].mxu0
  %v510 = vadd.f32 0.0, %v509
  %v511 = vpop.f32.mrb[0].mxu0
  %v512 = vpop.f32.mrb[0].mxu0
  %v513 = vadd.f32 0.0, %v512
  %v514 = vpop.f32.mrb[0].mxu0
  %515 = vmatprep.mubr.bf16.mxu0 %v238
  %516 = vmatmul.mubr.bf16.gmra.mrb[0].mxu0 %v237
  %v517 = vpop.f32.mrb[0].mxu0
  %v518 = vadd.f32 0.0, %v517
  %v519 = vpop.f32.mrb[0].mxu0
  %v520 = vpop.f32.mrb[0].mxu0
  %v521 = vadd.f32 0.0, %v520
  %v522 = vpop.f32.mrb[0].mxu0
  %523 = vmatprep.mubr.bf16.mxu0 %v240
  %524 = vmatmul.mubr.bf16.gmra.mrb[0].mxu0 %v239
  %v525 = vpop.f32.mrb[0].mxu0
  %v526 = vadd.f32 0.0, %v525
  %v527 = vpop.f32.mrb[0].mxu0
  %v528 = vpop.f32.mrb[0].mxu0
  %v529 = vadd.f32 0.0, %v528
  %v530 = vpop.f32.mrb[0].mxu0
  %531 = vmatprep.mubr.bf16.mxu0 %v242
  %532 = vmatmul.mubr.bf16.gmra.mrb[0].mxu0 %v241
  %v533 = vpop.f32.mrb[0].mxu0
  %v534 = vadd.f32 0.0, %v533
  %v535 = vpop.f32.mrb[0].mxu0
  %v536 = vpop.f32.mrb[0].mxu0
  %v537 = vadd.f32 0.0, %v536
  %v538 = vpop.f32.mrb[0].mxu0
  %539 = vmatprep.mubr.bf16.mxu0 %v244
  %540 = vmatmul.mubr.bf16.gmra.mrb[0].mxu0 %v243
  %v541 = vpop.f32.mrb[0].mxu0
  %v542 = vadd.f32 0.0, %v541
  %v543 = vpop.f32.mrb[0].mxu0
  %v544 = vpop.f32.mrb[0].mxu0
  %v545 = vadd.f32 0.0, %v544
  %v546 = vpop.f32.mrb[0].mxu0
  %547 = vmatprep.mubr.bf16.mxu0 %v246
  %548 = vmatmul.mubr.bf16.gmra.mrb[0].mxu0 %v245
  %v549 = vpop.f32.mrb[0].mxu0
  %v550 = vadd.f32 0.0, %v549
  %v551 = vpop.f32.mrb[0].mxu0
  %v552 = vpop.f32.mrb[0].mxu0
  %v553 = vadd.f32 0.0, %v552
  %v554 = vpop.f32.mrb[0].mxu0
  %555 = vmatprep.mubr.bf16.mxu0 %v248
  %556 = vmatmul.mubr.bf16.gmra.mrb[0].mxu0 %v247
  %v557 = vpop.f32.mrb[0].mxu0
  %v558 = vadd.f32 0.0, %v557
  %v559 = vpop.f32.mrb[0].mxu0
  %v560 = vpop.f32.mrb[0].mxu0
  %v561 = vadd.f32 0.0, %v560
  %v562 = vpop.f32.mrb[0].mxu0
  %563 = vmatprep.mubr.bf16.mxu0 %v250
  %564 = vmatmul.mubr.bf16.gmra.mrb[0].mxu0 %v249
  %v565 = vpop.f32.mrb[0].mxu0
  %v566 = vadd.f32 0.0, %v565
  %v567 = vpop.f32.mrb[0].mxu0
  %v568 = vpop.f32.mrb[0].mxu0
  %v569 = vadd.f32 0.0, %v568
  %v570 = vpop.f32.mrb[0].mxu0
  %571 = vdwg.mxu0
  %vm572 = vcmask 31744
  %573 = vst.msk [vmem:[%s4] sm:$0xff] %vm572, %v510
  %574 = vst.msk [vmem:[%s4 + $0x8] sm:$0xff] %vm572, %v513
  %575 = vst.msk [vmem:[%s4 + $0x10] sm:$0xff] %vm572, %v518
  %576 = vst.msk [vmem:[%s4 + $0x18] sm:$0xff] %vm572, %v521
  %577 = vst.msk [vmem:[%s4 + $0x20] sm:$0xff] %vm572, %v526
  %578 = vst.msk [vmem:[%s4 + $0x28] sm:$0xff] %vm572, %v529
  %579 = vst.msk [vmem:[%s4 + $0x30] sm:$0xff] %vm572, %v534
  %580 = vst.msk [vmem:[%s4 + $0x38] sm:$0xff] %vm572, %v537
  %581 = vst.msk [vmem:[%s4 + $0x40] sm:$0xff] %vm572, %v542
  %582 = vst.msk [vmem:[%s4 + $0x48] sm:$0xff] %vm572, %v545
  %583 = vst.msk [vmem:[%s4 + $0x50] sm:$0xff] %vm572, %v550
  %584 = vst.msk [vmem:[%s4 + $0x58] sm:$0xff] %vm572, %v553
  %585 = vst.msk [vmem:[%s4 + $0x60] sm:$0xff] %vm572, %v558
  %586 = vst.msk [vmem:[%s4 + $0x68] sm:$0xff] %vm572, %v561
  %587 = vst.msk [vmem:[%s4 + $0x70] sm:$0xff] %vm572, %v566
  %588 = vst.msk [vmem:[%s4 + $0x78] sm:$0xff] %vm572, %v569
  // Predicated region
  $region14: #{attnet_s_forward.4} parent=0 // pred_check
    _
  $region15: #{attnet_s_forward.4} parent=0 // pred_check_branch
    %590 = sbr.rel (0) target = $region17
  $region16: #{attnet_s_forward.4} parent=0 // pred_region
    _
  $region17: #{attnet_s_forward.4} parent=0 // pred_fallthru
    _
  // Predicated region
  $region18: #{attnet_s_forward.4} parent=0 // pred_check
    _
  $region19: #{attnet_s_forward.4} parent=0 // pred_check_branch
    %592 = sbr.rel (0) target = $region21
  $region20: #{attnet_s_forward.4} parent=0 // pred_region
    _
  $region21: #{attnet_s_forward.4} parent=0 // pred_fallthru
    _
  // Predicated region
  $region22: #{attnet_s_forward.4} parent=0 // pred_check
    _
  $region23: #{attnet_s_forward.4} parent=0 // pred_check_branch
    %594 = sbr.rel (0) target = $region25
  $region24: #{attnet_s_forward.4} parent=0 // pred_region
    _
  $region25: #{attnet_s_forward.4} parent=0 // pred_fallthru
    _
  // Predicated region
  $region26: #{attnet_s_forward.4} parent=0 // pred_check
    _
  $region27: #{attnet_s_forward.4} parent=0 // pred_check_branch
    %596 = sbr.rel (0) target = $region29
  $region28: #{attnet_s_forward.4} parent=0 // pred_region
    _
  $region29: #{attnet_s_forward.4} parent=0 // pred_fallthru
    _

// kernel: attnet_s_forward.5
$region0: #{attnet_s_forward.5}
  #allocation0 [shape = 'u32[]', space=smem, size = 0x4, offset = 0x4, fixed_abs, tag = 'smem constant byte address 0x4 - core index']
  #allocation1 [shape = 'u32[144,128]{1,0:T(1,128)}', space=vmem, size = 0x12000, scoped, tag = 'internal scratch']
  #allocation2 [shape = 'f32[32,2]{1,0:T(8,128)}', space=vmem, size = 0x4000, scoped, tag = 'scratch operand']
  #allocation3 [shape = 'f32[32,2]{1,0:T(8,128)}', space=vmem, size = 0x4000, scoped, tag = 'scratch operand']
  #allocation4 [shape = 'f32[32,256]{1,0:T(8,128)}', space=vmem, size = 0x8000, scoped, tag = 'scratch operand']
  #allocation5 [shape = 's32[1]{0}', space=sflag, size = 0x4, scoped, tag = 'scoped memory for attnet_s_forward.5']
  #allocation6 [shape = 's32[1]{0:T(128)S(6)}', space=smem, size = 0x200, scoped, tag = 'prefetched SMEM operand 0']
  %s0 = inlined_call_operand.<no memory space> [shape: s32[1], index: 0, kind: input, shape index: {}]
  %s1 = inlined_call_operand.vmem [shape: f32[32,2], index: 1, kind: input, shape index: {}]
  %s2 = inlined_call_operand.vmem [shape: f32[2,128], index: 2, kind: input, shape index: {}]
  %s3 = inlined_call_operand.vmem [shape: bf16[128,256], index: 3, kind: input, shape index: {}]
  %s4 = inlined_call_operand.vmem [shape: s8[32,128], index: 4, kind: input, shape index: {}]
  %s5 = inlined_call_operand.vmem [shape: bf16[32,256], index: 5, kind: output, shape index: {}]
  %s6 = sld [smem:[#allocation0]]
  $region38: #{attnet_s_forward.5} parent=0
    _
  %s8 = ssub.s32 1, %s6
  %s9 = scalar_select 0, %s8, %s6
  %10 = sst [smem:[#allocation6]] %s0
  // Predicated region
  $region2: #{attnet_s_forward.5} parent=0 // pred_check
    _
  $region3: #{attnet_s_forward.5} parent=0 // pred_check_branch
    %12 = sbr.rel (0) target = $region5
  $region4: #{attnet_s_forward.5} parent=0 // pred_region
    _
  $region5: #{attnet_s_forward.5} parent=0 // pred_fallthru
    _
  // Predicated region
  $region6: #{attnet_s_forward.5} parent=0 // pred_check
    _
  $region7: #{attnet_s_forward.5} parent=0 // pred_check_branch
    %14 = sbr.rel (0) target = $region9
  $region8: #{attnet_s_forward.5} parent=0 // pred_region
    _
  $region9: #{attnet_s_forward.5} parent=0 // pred_fallthru
    _
  // Predicated region
  $region10: #{attnet_s_forward.5} parent=0 // pred_check
    _
  $region11: #{attnet_s_forward.5} parent=0 // pred_check_branch
    %16 = sbr.rel (0) target = $region13
  $region12: #{attnet_s_forward.5} parent=0 // pred_region
    _
  $region13: #{attnet_s_forward.5} parent=0 // pred_fallthru
    _
  // Predicated region
  $region14: #{attnet_s_forward.5} parent=0 // pred_check
    _
  $region15: #{attnet_s_forward.5} parent=0 // pred_check_branch
    %18 = sbr.rel (0) target = $region17
  $region16: #{attnet_s_forward.5} parent=0 // pred_region
    _
  $region17: #{attnet_s_forward.5} parent=0 // pred_fallthru
    _
  %p20 = scmp.eq.s32.totalorder 0, 0
  // Predicated region
  $region18: #{attnet_s_forward.5} parent=0 // pred_check
    %p21 = pneg %p20
  $region19: #{attnet_s_forward.5} parent=0 // pred_check_branch
    %23 = sbr.rel (%p21) target = $region21
  $region20: #{attnet_s_forward.5} parent=0 // pred_region
    %vm24 = vcmask 15360
    %25 = vst.msk [vmem:[#allocation2] sm:$0xff] %vm24, -1e+09
    %26 = vst.msk [vmem:[#allocation2 + $0x8] sm:$0xff] %vm24, -1e+09
    %27 = vst.msk [vmem:[#allocation2 + $0x10] sm:$0xff] %vm24, -1e+09
    %28 = vst.msk [vmem:[#allocation2 + $0x18] sm:$0xff] %vm24, -1e+09
    %29 = vst.msk [vmem:[#allocation3] sm:$0xff] %vm24, 0.0
    %30 = vst.msk [vmem:[#allocation3 + $0x8] sm:$0xff] %vm24, 0.0
    %31 = vst.msk [vmem:[#allocation3 + $0x10] sm:$0xff] %vm24, 0.0
    %32 = vst.msk [vmem:[#allocation3 + $0x18] sm:$0xff] %vm24, 0.0
    %33 = vst [vmem:[#allocation4] sm:$0xff] 0.0
    %34 = vst [vmem:[#allocation4 + $0x8] sm:$0xff] 0.0
    %35 = vst [vmem:[#allocation4 + $0x10] sm:$0xff] 0.0
    %36 = vst [vmem:[#allocation4 + $0x18] sm:$0xff] 0.0
    %37 = vst [vmem:[#allocation4 + $0x20] sm:$0xff] 0.0
    %38 = vst [vmem:[#allocation4 + $0x28] sm:$0xff] 0.0
    %39 = vst [vmem:[#allocation4 + $0x30] sm:$0xff] 0.0
    %40 = vst [vmem:[#allocation4 + $0x38] sm:$0xff] 0.0
  $region21: #{attnet_s_forward.5} parent=0 // pred_fallthru
    _
  %s41 = sadd.s32 0, 0
  %s42 = sld [smem:[#allocation6 + %s41]]
  %p43 = scmp.gt.s32.totalorder %s42, 0
  // Predicated region
  $region22: #{attnet_s_forward.5} parent=0 // pred_check
    %p44 = pneg %p43
  $region23: #{attnet_s_forward.5} parent=0 // pred_check_branch
    %46 = sbr.rel (%p44) target = $region25
  $region24: #{attnet_s_forward.5} parent=0 // pred_region
    %v47 = vld [vmem:[%s4] sm:$0xff]
    %v48 = vunpack.c.0.s8 %v47
    %v49 = vunpack.c.1.s8 %v47
    %v50 = vunpack.c.2.s8 %v47
    %v51 = vunpack.c.3.s8 %v47
    %v52 = vcvt.s32.f32 %v48
    %v53 = vcvt.s32.f32 %v49
    %v54 = vcvt.s32.f32 %v50
    %v55 = vcvt.s32.f32 %v51
    %v56 = vsub.f32 %v52, 1.0
    %v57 = vsub.f32 %v53, 1.0
    %v58 = vsub.f32 %v54, 1.0
    %v59 = vsub.f32 %v55, 1.0
    %v60 = vmul.f32 %v56, 2e+09
    %v61 = vmul.f32 %v57, 2e+09
    %v62 = vmul.f32 %v58, 2e+09
    %v63 = vmul.f32 %v59, 2e+09
    %v64 = vld [vmem:[%s3] sm:$0xff]
    %v65 = vld [vmem:[%s3 + $0x8] sm:$0xff]
    %v66 = vld [vmem:[%s3 + $0x10] sm:$0xff]
    %v67 = vld [vmem:[%s3 + $0x18] sm:$0xff]
    %v68 = vld [vmem:[%s3 + $0x20] sm:$0xff]
    %v69 = vld [vmem:[%s3 + $0x28] sm:$0xff]
    %v70 = vld [vmem:[%s3 + $0x30] sm:$0xff]
    %v71 = vld [vmem:[%s3 + $0x38] sm:$0xff]
    %v72 = vld [vmem:[%s3 + $0x40] sm:$0xff]
    %v73 = vld [vmem:[%s3 + $0x48] sm:$0xff]
    %v74 = vld [vmem:[%s3 + $0x50] sm:$0xff]
    %v75 = vld [vmem:[%s3 + $0x58] sm:$0xff]
    %v76 = vld [vmem:[%s3 + $0x60] sm:$0xff]
    %v77 = vld [vmem:[%s3 + $0x68] sm:$0xff]
    %v78 = vld [vmem:[%s3 + $0x70] sm:$0xff]
    %v79 = vld [vmem:[%s3 + $0x78] sm:$0xff]
    %v80 = vld [vmem:[%s1] sm:$0xff]
    %v81 = vld [vmem:[%s1 + $0x8] sm:$0xff]
    %v82 = vld [vmem:[%s1 + $0x10] sm:$0xff]
    %v83 = vld [vmem:[%s1 + $0x18] sm:$0xff]
    %v84 = vld [vmem:[%s2] sm:$0x3]
    %86 = vset.pattern.permute.xlu0 0
    %87 = vperm.xlu0 %86, %v80
    %v88 = vpop.permute.xlu0 %87
    %91 = vset.pattern.permute.xlu0 0
    %92 = vperm.xlu0 %91, %v81
    %v93 = vpop.permute.xlu0 %92
    %96 = vset.pattern.permute.xlu0 0
    %97 = vperm.xlu0 %96, %v82
    %v98 = vpop.permute.xlu0 %97
    %101 = vset.pattern.permute.xlu0 0
    %102 = vperm.xlu0 %101, %v83
    %v103 = vpop.permute.xlu0 %102
    %v105 = vlaneseq
    %v106 = vshrl.u32 %v105, 7
    %v107 = vsub.s32 0, %v106
    %v108 = vrot.slane %v84, %v107
    %v109 = vadd.f32 %v88, %v108
    %v110 = vadd.f32 %v93, %v108
    %v111 = vadd.f32 %v98, %v108
    %v112 = vadd.f32 %v103, %v108
    %v113 = vmul.f32 %v109, 0.2
    %v114 = vmul.f32 %v110, 0.2
    %v115 = vmul.f32 %v111, 0.2
    %v116 = vmul.f32 %v112, 0.2
    %v117 = vmax.f32 %v109, %v113
    %v118 = vmax.f32 %v110, %v114
    %v119 = vmax.f32 %v111, %v115
    %v120 = vmax.f32 %v112, %v116
    %v121 = vadd.f32 %v117, %v60
    %v122 = vadd.f32 %v118, %v61
    %v123 = vadd.f32 %v119, %v62
    %v124 = vadd.f32 %v120, %v63
    %v125 = vld [vmem:[#allocation2] sm:$0xff]
    %v126 = vld [vmem:[#allocation2 + $0x8] sm:$0xff]
    %v127 = vld [vmem:[#allocation2 + $0x10] sm:$0xff]
    %v128 = vld [vmem:[#allocation2 + $0x18] sm:$0xff]
    %129 = vmax.xlane.f32.xlu0 %v121
    %v130 = vpop.xlane.xlu0 %129
    %131 = vmax.xlane.f32.xlu0 %v122
    %v132 = vpop.xlane.xlu0 %131
    %133 = vmax.xlane.f32.xlu0 %v123
    %v134 = vpop.xlane.xlu0 %133
    %135 = vmax.xlane.f32.xlu0 %v124
    %v136 = vpop.xlane.xlu0 %135
    %v137 = vmax.f32 %v125, %v130
    %v138 = vmax.f32 %v126, %v132
    %v139 = vmax.f32 %v127, %v134
    %v140 = vmax.f32 %v128, %v136
    %v141 = vsub.f32 %v125, %v137
    %v142 = vsub.f32 %v126, %v138
    %v143 = vsub.f32 %v127, %v139
    %v144 = vsub.f32 %v128, %v140
    %v145 = vmul.f32 %v141, 1.442695
    %v146 = vpow.pop %v145
    %v147 = vmul.f32 %v142, 1.442695
    %v148 = vpow.pop %v147
    %v149 = vmul.f32 %v143, 1.442695
    %v150 = vpow.pop %v149
    %v151 = vmul.f32 %v144, 1.442695
    %v152 = vpow.pop %v151
    %154 = vset.pattern.permute.xlu0 0
    %155 = vperm.xlu0 %154, %v137
    %v156 = vpop.permute.xlu0 %155
    %159 = vset.pattern.permute.xlu0 0
    %160 = vperm.xlu0 %159, %v138
    %v161 = vpop.permute.xlu0 %160
    %164 = vset.pattern.permute.xlu0 0
    %165 = vperm.xlu0 %164, %v139
    %v166 = vpop.permute.xlu0 %165
    %169 = vset.pattern.permute.xlu0 0
    %170 = vperm.xlu0 %169, %v140
    %v171 = vpop.permute.xlu0 %170
    %v173 = vsub.f32 %v121, %v156
    %v174 = vsub.f32 %v122, %v161
    %v175 = vsub.f32 %v123, %v166
    %v176 = vsub.f32 %v124, %v171
    %v177 = vmul.f32 %v173, 1.442695
    %v178 = vpow.pop %v177
    %v179 = vmul.f32 %v174, 1.442695
    %v180 = vpow.pop %v179
    %v181 = vmul.f32 %v175, 1.442695
    %v182 = vpow.pop %v181
    %v183 = vmul.f32 %v176, 1.442695
    %v184 = vpow.pop %v183
    %v185 = vld [vmem:[#allocation3] sm:$0xff]
    %v186 = vld [vmem:[#allocation3 + $0x8] sm:$0xff]
    %v187 = vld [vmem:[#allocation3 + $0x10] sm:$0xff]
    %v188 = vld [vmem:[#allocation3 + $0x18] sm:$0xff]
    %v189 = vmul.f32 %v146, %v185
    %v190 = vmul.f32 %v148, %v186
    %v191 = vmul.f32 %v150, %v187
    %v192 = vmul.f32 %v152, %v188
    %193 = vadd.xlane.f32.xlu0 %v178
    %v194 = vpop.xlane.xlu0 %193
    %195 = vadd.xlane.f32.xlu0 %v180
    %v196 = vpop.xlane.xlu0 %195
    %197 = vadd.xlane.f32.xlu0 %v182
    %v198 = vpop.xlane.xlu0 %197
    %199 = vadd.xlane.f32.xlu0 %v184
    %v200 = vpop.xlane.xlu0 %199
    %v201 = vadd.f32 %v189, %v194
    %v202 = vadd.f32 %v190, %v196
    %v203 = vadd.f32 %v191, %v198
    %v204 = vadd.f32 %v192, %v200
    %vm205 = vcmask 7168
    %206 = vst.msk [vmem:[#allocation3] sm:$0xff] %vm205, %v201
    %207 = vst.msk [vmem:[#allocation3 + $0x8] sm:$0xff] %vm205, %v202
    %208 = vst.msk [vmem:[#allocation3 + $0x10] sm:$0xff] %vm205, %v203
    %209 = vst.msk [vmem:[#allocation3 + $0x18] sm:$0xff] %vm205, %v204
    %v210 = vld [vmem:[#allocation4] sm:$0xff]
    %v211 = vld [vmem:[#allocation4 + $0x10] sm:$0xff]
    %v212 = vld [vmem:[#allocation4 + $0x20] sm:$0xff]
    %v213 = vld [vmem:[#allocation4 + $0x30] sm:$0xff]
    %215 = vset.pattern.permute.xlu0 0
    %216 = vperm.xlu0 %215, %v146
    %v217 = vpop.permute.xlu0 %216
    %220 = vset.pattern.permute.xlu0 0
    %221 = vperm.xlu0 %220, %v148
    %v222 = vpop.permute.xlu0 %221
    %225 = vset.pattern.permute.xlu0 0
    %226 = vperm.xlu0 %225, %v150
    %v227 = vpop.permute.xlu0 %226
    %230 = vset.pattern.permute.xlu0 0
    %231 = vperm.xlu0 %230, %v152
    %v232 = vpop.permute.xlu0 %231
    %v234 = vmul.f32 %v217, %v210
    %v235 = vmul.f32 %v222, %v211
    %v236 = vmul.f32 %v227, %v212
    %v237 = vmul.f32 %v232, %v213
    %v238 = vpack.c.bf16 %v180, %v178
    %v239 = vpack.c.bf16 %v184, %v182
    %v256 = vunpack.c.l.b16 %v64
    %v257 = vunpack.c.l.b16 %v65
    %v258 = vunpack.c.l.b16 %v66
    %v259 = vunpack.c.l.b16 %v67
    %v260 = vunpack.c.l.b16 %v68
    %v261 = vunpack.c.l.b16 %v69
    %v262 = vunpack.c.l.b16 %v70
    %v263 = vunpack.c.l.b16 %v71
    %v264 = vunpack.c.l.b16 %v72
    %v265 = vunpack.c.l.b16 %v73
    %v266 = vunpack.c.l.b16 %v74
    %v267 = vunpack.c.l.b16 %v75
    %v268 = vunpack.c.l.b16 %v76
    %v269 = vunpack.c.l.b16 %v77
    %v270 = vunpack.c.l.b16 %v78
    %v271 = vunpack.c.l.b16 %v79
    %v272 = vpack.c.b16 %v257, %v256
    %v273 = vpack.c.b16 %v259, %v258
    %v274 = vpack.c.b16 %v261, %v260
    %v275 = vpack.c.b16 %v263, %v262
    %v276 = vpack.c.b16 %v265, %v264
    %v277 = vpack.c.b16 %v267, %v266
    %v278 = vpack.c.b16 %v269, %v268
    %v279 = vpack.c.b16 %v271, %v270
    %288 = vmatprep.subr.bf16.mxu0 0
    %289 = vmatpush1.bf16.msra.mxu0 %v272
    %290 = vmatprep.subr.bf16.mxu0 0
    %291 = vmatpush1.bf16.msra.mxu0 %v273
    %292 = vmatprep.subr.bf16.mxu0 0
    %293 = vmatpush1.bf16.msra.mxu0 %v274
    %294 = vmatprep.subr.bf16.mxu0 0
    %295 = vmatpush1.bf16.msra.mxu0 %v275
    %296 = vmatprep.subr.bf16.mxu0 0
    %297 = vmatpush1.bf16.msra.mxu0 %v276
    %298 = vmatprep.subr.bf16.mxu0 0
    %299 = vmatpush1.bf16.msra.mxu0 %v277
    %300 = vmatprep.subr.bf16.mxu0 0
    %301 = vmatpush1.bf16.msra.mxu0 %v278
    %302 = vmatprep.subr.bf16.mxu0 0
    %303 = vmatpush1.bf16.msra.mxu0 %v279
    %304 = vmatprep.subr.bf16.mxu0 0
    %305 = vmatpush1.bf16.msra.mxu0 0
    %306 = vmatprep.subr.bf16.mxu0 0
    %307 = vmatpush1.bf16.msra.mxu0 0
    %308 = vmatprep.subr.bf16.mxu0 0
    %309 = vmatpush1.bf16.msra.mxu0 0
    %310 = vmatprep.subr.bf16.mxu0 0
    %311 = vmatpush1.bf16.msra.mxu0 0
    %312 = vmatprep.subr.bf16.mxu0 0
    %313 = vmatpush1.bf16.msra.mxu0 0
    %314 = vmatprep.subr.bf16.mxu0 0
    %315 = vmatpush1.bf16.msra.mxu0 0
    %316 = vmatprep.subr.bf16.mxu0 0
    %317 = vmatpush1.bf16.msra.mxu0 0
    %318 = vmatprep.subr.bf16.mxu0 0
    %319 = vmatpush1.bf16.msra.mxu0 0
    %320 = vmatprep.mubr.bf16.mxu0 0
    %321 = vmatmul.mubr.bf16.gmra.mrb[0].mxu0 %v238
    %v322 = vpop.f32.mrb[0].mxu0
    %v323 = vadd.f32 0.0, %v322
    %v324 = vpop.f32.mrb[0].mxu0
    %v325 = vpop.f32.mrb[0].mxu0
    %v326 = vadd.f32 0.0, %v325
    %v327 = vpop.f32.mrb[0].mxu0
    %328 = vmatprep.mubr.bf16.mxu0 0
    %329 = vmatmul.mubr.bf16.gmra.mrb[0].mxu0 %v239
    %v330 = vpop.f32.mrb[0].mxu0
    %v331 = vadd.f32 0.0, %v330
    %v332 = vpop.f32.mrb[0].mxu0
    %v333 = vpop.f32.mrb[0].mxu0
    %v334 = vadd.f32 0.0, %v333
    %v335 = vpop.f32.mrb[0].mxu0
    %336 = vdwg.mxu0
    %v337 = vadd.f32 %v234, %v323
    %v338 = vadd.f32 %v235, %v326
    %v339 = vadd.f32 %v236, %v331
    %v340 = vadd.f32 %v237, %v334
    %341 = vst [vmem:[#allocation4] sm:$0xff] %v337
    %342 = vst [vmem:[#allocation4 + $0x10] sm:$0xff] %v338
    %343 = vst [vmem:[#allocation4 + $0x20] sm:$0xff] %v339
    %344 = vst [vmem:[#allocation4 + $0x30] sm:$0xff] %v340
    %345 = vst.msk [vmem:[#allocation2] sm:$0xff] %vm205, %v137
    %346 = vst.msk [vmem:[#allocation2 + $0x8] sm:$0xff] %vm205, %v138
    %347 = vst.msk [vmem:[#allocation2 + $0x10] sm:$0xff] %vm205, %v139
    %348 = vst.msk [vmem:[#allocation2 + $0x18] sm:$0xff] %vm205, %v140
    %349 = vset.pattern.permute.xlu0 1
    %350 = vperm.xlu0 %349, %v80
    %v351 = vpop.permute.xlu0 %350
    %353 = vset.pattern.permute.xlu0 1
    %354 = vperm.xlu0 %353, %v81
    %v355 = vpop.permute.xlu0 %354
    %357 = vset.pattern.permute.xlu0 1
    %358 = vperm.xlu0 %357, %v82
    %v359 = vpop.permute.xlu0 %358
    %361 = vset.pattern.permute.xlu0 1
    %362 = vperm.xlu0 %361, %v83
    %v363 = vpop.permute.xlu0 %362
    %v365 = vlaneseq
    %v366 = vshrl.u32 %v365, 7
    %v367 = vsub.s32 1, %v366
    %v368 = vrot.slane %v84, %v367
    %v369 = vadd.f32 %v351, %v368
    %v370 = vadd.f32 %v355, %v368
    %v371 = vadd.f32 %v359, %v368
    %v372 = vadd.f32 %v363, %v368
    %v373 = vmul.f32 %v369, 0.2
    %v374 = vmul.f32 %v370, 0.2
    %v375 = vmul.f32 %v371, 0.2
    %v376 = vmul.f32 %v372, 0.2
    %v377 = vmax.f32 %v369, %v373
    %v378 = vmax.f32 %v370, %v374
    %v379 = vmax.f32 %v371, %v375
    %v380 = vmax.f32 %v372, %v376
    %v381 = vadd.f32 %v377, %v60
    %v382 = vadd.f32 %v378, %v61
    %v383 = vadd.f32 %v379, %v62
    %v384 = vadd.f32 %v380, %v63
    %v385 = vld [vmem:[#allocation2] sm:$0xff]
    %v386 = vld [vmem:[#allocation2 + $0x8] sm:$0xff]
    %v387 = vld [vmem:[#allocation2 + $0x10] sm:$0xff]
    %v388 = vld [vmem:[#allocation2 + $0x18] sm:$0xff]
    %389 = vmax.xlane.f32.xlu0 %v381
    %v390 = vpop.xlane.xlu0 %389
    %391 = vmax.xlane.f32.xlu0 %v382
    %v392 = vpop.xlane.xlu0 %391
    %393 = vmax.xlane.f32.xlu0 %v383
    %v394 = vpop.xlane.xlu0 %393
    %395 = vmax.xlane.f32.xlu0 %v384
    %v396 = vpop.xlane.xlu0 %395
    %v397 = vmax.f32 %v385, %v390
    %v398 = vmax.f32 %v386, %v392
    %v399 = vmax.f32 %v387, %v394
    %v400 = vmax.f32 %v388, %v396
    %v401 = vsub.f32 %v385, %v397
    %v402 = vsub.f32 %v386, %v398
    %v403 = vsub.f32 %v387, %v399
    %v404 = vsub.f32 %v388, %v400
    %v405 = vmul.f32 %v401, 1.442695
    %v406 = vpow.pop %v405
    %v407 = vmul.f32 %v402, 1.442695
    %v408 = vpow.pop %v407
    %v409 = vmul.f32 %v403, 1.442695
    %v410 = vpow.pop %v409
    %v411 = vmul.f32 %v404, 1.442695
    %v412 = vpow.pop %v411
    %414 = vset.pattern.permute.xlu0 1
    %415 = vperm.xlu0 %414, %v397
    %v416 = vpop.permute.xlu0 %415
    %419 = vset.pattern.permute.xlu0 1
    %420 = vperm.xlu0 %419, %v398
    %v421 = vpop.permute.xlu0 %420
    %424 = vset.pattern.permute.xlu0 1
    %425 = vperm.xlu0 %424, %v399
    %v426 = vpop.permute.xlu0 %425
    %429 = vset.pattern.permute.xlu0 1
    %430 = vperm.xlu0 %429, %v400
    %v431 = vpop.permute.xlu0 %430
    %v433 = vsub.f32 %v381, %v416
    %v434 = vsub.f32 %v382, %v421
    %v435 = vsub.f32 %v383, %v426
    %v436 = vsub.f32 %v384, %v431
    %v437 = vmul.f32 %v433, 1.442695
    %v438 = vpow.pop %v437
    %v439 = vmul.f32 %v434, 1.442695
    %v440 = vpow.pop %v439
    %v441 = vmul.f32 %v435, 1.442695
    %v442 = vpow.pop %v441
    %v443 = vmul.f32 %v436, 1.442695
    %v444 = vpow.pop %v443
    %v445 = vld [vmem:[#allocation3] sm:$0xff]
    %v446 = vld [vmem:[#allocation3 + $0x8] sm:$0xff]
    %v447 = vld [vmem:[#allocation3 + $0x10] sm:$0xff]
    %v448 = vld [vmem:[#allocation3 + $0x18] sm:$0xff]
    %v449 = vmul.f32 %v406, %v445
    %v450 = vmul.f32 %v408, %v446
    %v451 = vmul.f32 %v410, %v447
    %v452 = vmul.f32 %v412, %v448
    %453 = vadd.xlane.f32.xlu0 %v438
    %v454 = vpop.xlane.xlu0 %453
    %455 = vadd.xlane.f32.xlu0 %v440
    %v456 = vpop.xlane.xlu0 %455
    %457 = vadd.xlane.f32.xlu0 %v442
    %v458 = vpop.xlane.xlu0 %457
    %459 = vadd.xlane.f32.xlu0 %v444
    %v460 = vpop.xlane.xlu0 %459
    %v461 = vadd.f32 %v449, %v454
    %v462 = vadd.f32 %v450, %v456
    %v463 = vadd.f32 %v451, %v458
    %v464 = vadd.f32 %v452, %v460
    %vm465 = vcmask 15368
    %466 = vst.msk [vmem:[#allocation3] sm:$0xff] %vm465, %v461
    %467 = vst.msk [vmem:[#allocation3 + $0x8] sm:$0xff] %vm465, %v462
    %468 = vst.msk [vmem:[#allocation3 + $0x10] sm:$0xff] %vm465, %v463
    %469 = vst.msk [vmem:[#allocation3 + $0x18] sm:$0xff] %vm465, %v464
    %v470 = vld [vmem:[#allocation4 + $0x8] sm:$0xff]
    %v471 = vld [vmem:[#allocation4 + $0x18] sm:$0xff]
    %v472 = vld [vmem:[#allocation4 + $0x28] sm:$0xff]
    %v473 = vld [vmem:[#allocation4 + $0x38] sm:$0xff]
    %475 = vset.pattern.permute.xlu0 1
    %476 = vperm.xlu0 %475, %v406
    %v477 = vpop.permute.xlu0 %476
    %480 = vset.pattern.permute.xlu0 1
    %481 = vperm.xlu0 %480, %v408
    %v482 = vpop.permute.xlu0 %481
    %485 = vset.pattern.permute.xlu0 1
    %486 = vperm.xlu0 %485, %v410
    %v487 = vpop.permute.xlu0 %486
    %490 = vset.pattern.permute.xlu0 1
    %491 = vperm.xlu0 %490, %v412
    %v492 = vpop.permute.xlu0 %491
    %v494 = vmul.f32 %v477, %v470
    %v495 = vmul.f32 %v482, %v471
    %v496 = vmul.f32 %v487, %v472
    %v497 = vmul.f32 %v492, %v473
    %v498 = vpack.c.bf16 %v440, %v438
    %v499 = vpack.c.bf16 %v444, %v442
    %v500 = vunpack.c.h.b16 %v64
    %v501 = vunpack.c.h.b16 %v65
    %v502 = vunpack.c.h.b16 %v66
    %v503 = vunpack.c.h.b16 %v67
    %v504 = vunpack.c.h.b16 %v68
    %v505 = vunpack.c.h.b16 %v69
    %v506 = vunpack.c.h.b16 %v70
    %v507 = vunpack.c.h.b16 %v71
    %v508 = vunpack.c.h.b16 %v72
    %v509 = vunpack.c.h.b16 %v73
    %v510 = vunpack.c.h.b16 %v74
    %v511 = vunpack.c.h.b16 %v75
    %v512 = vunpack.c.h.b16 %v76
    %v513 = vunpack.c.h.b16 %v77
    %v514 = vunpack.c.h.b16 %v78
    %v515 = vunpack.c.h.b16 %v79
    %v516 = vpack.c.b16 %v501, %v500
    %v517 = vpack.c.b16 %v503, %v502
    %v518 = vpack.c.b16 %v505, %v504
    %v519 = vpack.c.b16 %v507, %v506
    %v520 = vpack.c.b16 %v509, %v508
    %v521 = vpack.c.b16 %v511, %v510
    %v522 = vpack.c.b16 %v513, %v512
    %v523 = vpack.c.b16 %v515, %v514
    %532 = vmatprep.subr.bf16.mxu0 0
    %533 = vmatpush1.bf16.msra.mxu0 %v516
    %534 = vmatprep.subr.bf16.mxu0 0
    %535 = vmatpush1.bf16.msra.mxu0 %v517
    %536 = vmatprep.subr.bf16.mxu0 0
    %537 = vmatpush1.bf16.msra.mxu0 %v518
    %538 = vmatprep.subr.bf16.mxu0 0
    %539 = vmatpush1.bf16.msra.mxu0 %v519
    %540 = vmatprep.subr.bf16.mxu0 0
    %541 = vmatpush1.bf16.msra.mxu0 %v520
    %542 = vmatprep.subr.bf16.mxu0 0
    %543 = vmatpush1.bf16.msra.mxu0 %v521
    %544 = vmatprep.subr.bf16.mxu0 0
    %545 = vmatpush1.bf16.msra.mxu0 %v522
    %546 = vmatprep.subr.bf16.mxu0 0
    %547 = vmatpush1.bf16.msra.mxu0 %v523
    %548 = vmatprep.subr.bf16.mxu0 0
    %549 = vmatpush1.bf16.msra.mxu0 0
    %550 = vmatprep.subr.bf16.mxu0 0
    %551 = vmatpush1.bf16.msra.mxu0 0
    %552 = vmatprep.subr.bf16.mxu0 0
    %553 = vmatpush1.bf16.msra.mxu0 0
    %554 = vmatprep.subr.bf16.mxu0 0
    %555 = vmatpush1.bf16.msra.mxu0 0
    %556 = vmatprep.subr.bf16.mxu0 0
    %557 = vmatpush1.bf16.msra.mxu0 0
    %558 = vmatprep.subr.bf16.mxu0 0
    %559 = vmatpush1.bf16.msra.mxu0 0
    %560 = vmatprep.subr.bf16.mxu0 0
    %561 = vmatpush1.bf16.msra.mxu0 0
    %562 = vmatprep.subr.bf16.mxu0 0
    %563 = vmatpush1.bf16.msra.mxu0 0
    %564 = vmatprep.mubr.bf16.mxu0 0
    %565 = vmatmul.mubr.bf16.gmra.mrb[0].mxu0 %v498
    %v566 = vpop.f32.mrb[0].mxu0
    %v567 = vadd.f32 0.0, %v566
    %v568 = vpop.f32.mrb[0].mxu0
    %v569 = vpop.f32.mrb[0].mxu0
    %v570 = vadd.f32 0.0, %v569
    %v571 = vpop.f32.mrb[0].mxu0
    %572 = vmatprep.mubr.bf16.mxu0 0
    %573 = vmatmul.mubr.bf16.gmra.mrb[0].mxu0 %v499
    %v574 = vpop.f32.mrb[0].mxu0
    %v575 = vadd.f32 0.0, %v574
    %v576 = vpop.f32.mrb[0].mxu0
    %v577 = vpop.f32.mrb[0].mxu0
    %v578 = vadd.f32 0.0, %v577
    %v579 = vpop.f32.mrb[0].mxu0
    %580 = vdwg.mxu0
    %v581 = vadd.f32 %v494, %v567
    %v582 = vadd.f32 %v495, %v570
    %v583 = vadd.f32 %v496, %v575
    %v584 = vadd.f32 %v497, %v578
    %585 = vst [vmem:[#allocation4 + $0x8] sm:$0xff] %v581
    %586 = vst [vmem:[#allocation4 + $0x18] sm:$0xff] %v582
    %587 = vst [vmem:[#allocation4 + $0x28] sm:$0xff] %v583
    %588 = vst [vmem:[#allocation4 + $0x38] sm:$0xff] %v584
    %589 = vst.msk [vmem:[#allocation2] sm:$0xff] %vm465, %v397
    %590 = vst.msk [vmem:[#allocation2 + $0x8] sm:$0xff] %vm465, %v398
    %591 = vst.msk [vmem:[#allocation2 + $0x10] sm:$0xff] %vm465, %v399
    %592 = vst.msk [vmem:[#allocation2 + $0x18] sm:$0xff] %vm465, %v400
  $region25: #{attnet_s_forward.5} parent=0 // pred_fallthru
    _
  // Predicated region
  $region26: #{attnet_s_forward.5} parent=0 // pred_check
    %p593 = pneg %p20
  $region27: #{attnet_s_forward.5} parent=0 // pred_check_branch
    %595 = sbr.rel (%p593) target = $region29
  $region28: #{attnet_s_forward.5} parent=0 // pred_region
    %v596 = vld [vmem:[#allocation3] sm:$0xff]
    %v597 = vld [vmem:[#allocation3 + $0x8] sm:$0xff]
    %v598 = vld [vmem:[#allocation3 + $0x10] sm:$0xff]
    %v599 = vld [vmem:[#allocation3 + $0x18] sm:$0xff]
    %v600 = vmax.f32 %v596, 1e-20
    %v601 = vmax.f32 %v597, 1e-20
    %v602 = vmax.f32 %v598, 1e-20
    %v603 = vmax.f32 %v599, 1e-20
    %v604 = vrcp.pop %v600
    %v605 = vmul.f32 1.0, %v604
    %v606 = vrcp.pop %v601
    %v607 = vmul.f32 1.0, %v606
    %v608 = vrcp.pop %v602
    %v609 = vmul.f32 1.0, %v608
    %v610 = vrcp.pop %v603
    %v611 = vmul.f32 1.0, %v610
    %v612 = vld [vmem:[#allocation4] sm:$0xff]
    %v613 = vld [vmem:[#allocation4 + $0x10] sm:$0xff]
    %v614 = vld [vmem:[#allocation4 + $0x20] sm:$0xff]
    %v615 = vld [vmem:[#allocation4 + $0x30] sm:$0xff]
    %617 = vset.pattern.permute.xlu0 0
    %618 = vperm.xlu0 %617, %v605
    %v619 = vpop.permute.xlu0 %618
    %622 = vset.pattern.permute.xlu0 0
    %623 = vperm.xlu0 %622, %v607
    %v624 = vpop.permute.xlu0 %623
    %627 = vset.pattern.permute.xlu0 0
    %628 = vperm.xlu0 %627, %v609
    %v629 = vpop.permute.xlu0 %628
    %632 = vset.pattern.permute.xlu0 0
    %633 = vperm.xlu0 %632, %v611
    %v634 = vpop.permute.xlu0 %633
    %v636 = vmul.f32 %v612, %v619
    %v637 = vmul.f32 %v613, %v624
    %v638 = vmul.f32 %v614, %v629
    %v639 = vmul.f32 %v615, %v634
    %vm640 = vcmp.gt.f32.partialorder %v636, 0.0
    %vm641 = vcmp.gt.f32.partialorder %v637, 0.0
    %vm642 = vcmp.gt.f32.partialorder %v638, 0.0
    %vm643 = vcmp.gt.f32.partialorder %v639, 0.0
    %v644 = vmin.f32 %v636, 0.0
    %v645 = vmin.f32 %v637, 0.0
    %v646 = vmin.f32 %v638, 0.0
    %v647 = vmin.f32 %v639, 0.0
    %v648 = vmul.f32 %v644, 1.442695
    %v649 = vpow.pop %v648
    %v650 = vmul.f32 %v645, 1.442695
    %v651 = vpow.pop %v650
    %v652 = vmul.f32 %v646, 1.442695
    %v653 = vpow.pop %v652
    %v654 = vmul.f32 %v647, 1.442695
    %v655 = vpow.pop %v654
    %v656 = vsub.f32 %v649, 1.0
    %v657 = vsub.f32 %v651, 1.0
    %v658 = vsub.f32 %v653, 1.0
    %v659 = vsub.f32 %v655, 1.0
    %v660 = vsel %vm640, %v636, %v656
    %v661 = vsel %vm641, %v637, %v657
    %v662 = vsel %vm642, %v638, %v658
    %v663 = vsel %vm643, %v639, %v659
    %v664 = vpack.c.bf16 %v661, %v660
    %v665 = vpack.c.bf16 %v663, %v662
    %v668 = vunpack.c.l.b16 %v664
    %v669 = vunpack.c.h.b16 %v664
    %v670 = vunpack.c.l.b16 %v665
    %v671 = vunpack.c.h.b16 %v665
    %v672 = vpack.c.b16 %v668, %v668
    %v673 = vpack.c.b16 %v669, %v669
    %v674 = vpack.c.b16 %v670, %v670
    %v675 = vpack.c.b16 %v671, %v671
    %680 = vst [vmem:[%s5] sm:$0xf] %v672
    %681 = vst [vmem:[%s5 + $0x8] sm:$0xf] %v673
    %682 = vst [vmem:[%s5 + $0x10] sm:$0xf] %v674
    %683 = vst [vmem:[%s5 + $0x18] sm:$0xf] %v675
    %v684 = vld [vmem:[#allocation4 + $0x8] sm:$0xff]
    %v685 = vld [vmem:[#allocation4 + $0x18] sm:$0xff]
    %v686 = vld [vmem:[#allocation4 + $0x28] sm:$0xff]
    %v687 = vld [vmem:[#allocation4 + $0x38] sm:$0xff]
    %688 = vset.pattern.permute.xlu0 1
    %689 = vperm.xlu0 %688, %v605
    %v690 = vpop.permute.xlu0 %689
    %692 = vset.pattern.permute.xlu0 1
    %693 = vperm.xlu0 %692, %v607
    %v694 = vpop.permute.xlu0 %693
    %696 = vset.pattern.permute.xlu0 1
    %697 = vperm.xlu0 %696, %v609
    %v698 = vpop.permute.xlu0 %697
    %700 = vset.pattern.permute.xlu0 1
    %701 = vperm.xlu0 %700, %v611
    %v702 = vpop.permute.xlu0 %701
    %v704 = vmul.f32 %v684, %v690
    %v705 = vmul.f32 %v685, %v694
    %v706 = vmul.f32 %v686, %v698
    %v707 = vmul.f32 %v687, %v702
    %vm708 = vcmp.gt.f32.partialorder %v704, 0.0
    %vm709 = vcmp.gt.f32.partialorder %v705, 0.0
    %vm710 = vcmp.gt.f32.partialorder %v706, 0.0
    %vm711 = vcmp.gt.f32.partialorder %v707, 0.0
    %v712 = vmin.f32 %v704, 0.0
    %v713 = vmin.f32 %v705, 0.0
    %v714 = vmin.f32 %v706, 0.0
    %v715 = vmin.f32 %v707, 0.0
    %v716 = vmul.f32 %v712, 1.442695
    %v717 = vpow.pop %v716
    %v718 = vmul.f32 %v713, 1.442695
    %v719 = vpow.pop %v718
    %v720 = vmul.f32 %v714, 1.442695
    %v721 = vpow.pop %v720
    %v722 = vmul.f32 %v715, 1.442695
    %v723 = vpow.pop %v722
    %v724 = vsub.f32 %v717, 1.0
    %v725 = vsub.f32 %v719, 1.0
    %v726 = vsub.f32 %v721, 1.0
    %v727 = vsub.f32 %v723, 1.0
    %v728 = vsel %vm708, %v704, %v724
    %v729 = vsel %vm709, %v705, %v725
    %v730 = vsel %vm710, %v706, %v726
    %v731 = vsel %vm711, %v707, %v727
    %v732 = vpack.c.bf16 %v729, %v728
    %v733 = vpack.c.bf16 %v731, %v730
    %v736 = vunpack.c.l.b16 %v732
    %v737 = vunpack.c.h.b16 %v732
    %v738 = vunpack.c.l.b16 %v733
    %v739 = vunpack.c.h.b16 %v733
    %v740 = vpack.c.b16 %v736, %v736
    %v741 = vpack.c.b16 %v737, %v737
    %v742 = vpack.c.b16 %v738, %v738
    %v743 = vpack.c.b16 %v739, %v739
    %748 = vst [vmem:[%s5 + $0x4] sm:$0xf] %v740
    %749 = vst [vmem:[%s5 + $0xc] sm:$0xf] %v741
    %750 = vst [vmem:[%s5 + $0x14] sm:$0xf] %v742
    %751 = vst [vmem:[%s5 + $0x1c] sm:$0xf] %v743
  $region29: #{attnet_s_forward.5} parent=0 // pred_fallthru
    _
  // Predicated region
  $region30: #{attnet_s_forward.5} parent=0 // pred_check
    _
  $region31: #{attnet_s_forward.5} parent=0 // pred_check_branch
    %753 = sbr.rel (0) target = $region33
  $region32: #{attnet_s_forward.5} parent=0 // pred_region
    _
  $region33: #{attnet_s_forward.5} parent=0 // pred_fallthru
    _
  // Predicated region
  $region34: #{attnet_s_forward.5} parent=0 // pred_check
    _
  $region35: #{attnet_s_forward.5} parent=0 // pred_check_branch
    %755 = sbr.rel (0) target = $region37
  $region36: #{attnet_s_forward.5} parent=0 // pred_region
    _
  $region37: #{attnet_s_forward.5} parent=0 // pred_fallthru
    _

// kernel: attnet_s_forward.6
$region0: #{attnet_s_forward.6}
  #allocation0 [shape = 'u32[]', space=smem, size = 0x4, offset = 0x4, fixed_abs, tag = 'smem constant byte address 0x4 - core index']
  #allocation1 [shape = 'u32[144,128]{1,0:T(1,128)}', space=vmem, size = 0x12000, scoped, tag = 'internal scratch']
  %s0 = inlined_call_operand.vmem [shape: bf16[128,64], index: 0, kind: input, shape index: {}]
  %s1 = inlined_call_operand.vmem [shape: bf16[64,256], index: 1, kind: input, shape index: {}]
  %s2 = inlined_call_operand.vmem [shape: bf16[256,4], index: 2, kind: input, shape index: {}]
  %s3 = inlined_call_operand.vmem [shape: bf16[128,256], index: 3, kind: output, shape index: {0}]
  %s4 = inlined_call_operand.vmem [shape: f32[128,4], index: 4, kind: output, shape index: {1}]
  %5 = xla_tuple %s3, %s4
  %s6 = sld [smem:[#allocation0]]
  $region30: #{attnet_s_forward.6} parent=0
    _
  %s8 = ssub.s32 1, %s6
  %s9 = scalar_select 0, %s8, %s6
  // Predicated region
  $region2: #{attnet_s_forward.6} parent=0 // pred_check
    _
  $region3: #{attnet_s_forward.6} parent=0 // pred_check_branch
    %11 = sbr.rel (0) target = $region5
  $region4: #{attnet_s_forward.6} parent=0 // pred_region
    _
  $region5: #{attnet_s_forward.6} parent=0 // pred_fallthru
    _
  // Predicated region
  $region6: #{attnet_s_forward.6} parent=0 // pred_check
    _
  $region7: #{attnet_s_forward.6} parent=0 // pred_check_branch
    %13 = sbr.rel (0) target = $region9
  $region8: #{attnet_s_forward.6} parent=0 // pred_region
    _
  $region9: #{attnet_s_forward.6} parent=0 // pred_fallthru
    _
  // Predicated region
  $region10: #{attnet_s_forward.6} parent=0 // pred_check
    _
  $region11: #{attnet_s_forward.6} parent=0 // pred_check_branch
    %15 = sbr.rel (0) target = $region13
  $region12: #{attnet_s_forward.6} parent=0 // pred_region
    _
  $region13: #{attnet_s_forward.6} parent=0 // pred_fallthru
    _
  %v17 = vld [vmem:[%s0] sm:$0xf]
  %v18 = vld [vmem:[%s0 + $0x4] sm:$0xf]
  %v19 = vld [vmem:[%s0 + $0x8] sm:$0xf]
  %v20 = vld [vmem:[%s0 + $0xc] sm:$0xf]
  %v21 = vld [vmem:[%s0 + $0x10] sm:$0xf]
  %v22 = vld [vmem:[%s0 + $0x14] sm:$0xf]
  %v23 = vld [vmem:[%s0 + $0x18] sm:$0xf]
  %v24 = vld [vmem:[%s0 + $0x1c] sm:$0xf]
  %v25 = vld [vmem:[%s0 + $0x20] sm:$0xf]
  %v26 = vld [vmem:[%s0 + $0x24] sm:$0xf]
  %v27 = vld [vmem:[%s0 + $0x28] sm:$0xf]
  %v28 = vld [vmem:[%s0 + $0x2c] sm:$0xf]
  %v29 = vld [vmem:[%s0 + $0x30] sm:$0xf]
  %v30 = vld [vmem:[%s0 + $0x34] sm:$0xf]
  %v31 = vld [vmem:[%s0 + $0x38] sm:$0xf]
  %v32 = vld [vmem:[%s0 + $0x3c] sm:$0xf]
  %v33 = vld [vmem:[%s1] sm:$0xff]
  %v34 = vld [vmem:[%s1 + $0x8] sm:$0xff]
  %v35 = vld [vmem:[%s1 + $0x10] sm:$0xff]
  %v36 = vld [vmem:[%s1 + $0x18] sm:$0xff]
  %v37 = vld [vmem:[%s1 + $0x20] sm:$0xff]
  %v38 = vld [vmem:[%s1 + $0x28] sm:$0xff]
  %v39 = vld [vmem:[%s1 + $0x30] sm:$0xff]
  %v40 = vld [vmem:[%s1 + $0x38] sm:$0xff]
  %v57 = vunpack.c.l.b16 %v17
  %v58 = vunpack.c.l.b16 %v18
  %v59 = vunpack.c.l.b16 %v19
  %v60 = vunpack.c.l.b16 %v20
  %v61 = vunpack.c.l.b16 %v21
  %v62 = vunpack.c.l.b16 %v22
  %v63 = vunpack.c.l.b16 %v23
  %v64 = vunpack.c.l.b16 %v24
  %v65 = vunpack.c.l.b16 %v25
  %v66 = vunpack.c.l.b16 %v26
  %v67 = vunpack.c.l.b16 %v27
  %v68 = vunpack.c.l.b16 %v28
  %v69 = vunpack.c.l.b16 %v29
  %v70 = vunpack.c.l.b16 %v30
  %v71 = vunpack.c.l.b16 %v31
  %v72 = vunpack.c.l.b16 %v32
  %v73 = vpack.c.b16 %v58, %v57
  %v74 = vpack.c.b16 %v60, %v59
  %v75 = vpack.c.b16 %v62, %v61
  %v76 = vpack.c.b16 %v64, %v63
  %v77 = vpack.c.b16 %v66, %v65
  %v78 = vpack.c.b16 %v68, %v67
  %v79 = vpack.c.b16 %v70, %v69
  %v80 = vpack.c.b16 %v72, %v71
  %v89 = vunpack.c.l.b16 %v33
  %v90 = vunpack.c.h.b16 %v33
  %v91 = vunpack.c.l.b16 %v34
  %v92 = vunpack.c.h.b16 %v34
  %v93 = vunpack.c.l.b16 %v35
  %v94 = vunpack.c.h.b16 %v35
  %v95 = vunpack.c.l.b16 %v36
  %v96 = vunpack.c.h.b16 %v36
  %v97 = vunpack.c.l.b16 %v37
  %v98 = vunpack.c.h.b16 %v37
  %v99 = vunpack.c.l.b16 %v38
  %v100 = vunpack.c.h.b16 %v38
  %v101 = vunpack.c.l.b16 %v39
  %v102 = vunpack.c.h.b16 %v39
  %v103 = vunpack.c.l.b16 %v40
  %v104 = vunpack.c.h.b16 %v40
  %v105 = vpack.c.b16 %v91, %v89
  %v106 = vpack.c.b16 %v92, %v90
  %v107 = vpack.c.b16 %v95, %v93
  %v108 = vpack.c.b16 %v96, %v94
  %v109 = vpack.c.b16 %v99, %v97
  %v110 = vpack.c.b16 %v100, %v98
  %v111 = vpack.c.b16 %v103, %v101
  %v112 = vpack.c.b16 %v104, %v102
  %vm121 = vcmask 523264
  %v123 = vsel %vm121, %v73, 0
  %v126 = vsel %vm121, %v74, 0
  %v129 = vsel %vm121, %v75, 0
  %v132 = vsel %vm121, %v76, 0
  %v135 = vsel %vm121, %v77, 0
  %v138 = vsel %vm121, %v78, 0
  %v141 = vsel %vm121, %v79, 0
  %v144 = vsel %vm121, %v80, 0
  %146 = vmatprep.subr.bf16.mxu0 %v106
  %147 = vmatpush1.bf16.msra.mxu0 %v105
  %148 = vmatprep.subr.bf16.mxu0 %v108
  %149 = vmatpush1.bf16.msra.mxu0 %v107
  %150 = vmatprep.subr.bf16.mxu0 %v110
  %151 = vmatpush1.bf16.msra.mxu0 %v109
  %152 = vmatprep.subr.bf16.mxu0 %v112
  %153 = vmatpush1.bf16.msra.mxu0 %v111
  %154 = vmatprep.subr.bf16.mxu0 0
  %155 = vmatpush1.bf16.msra.mxu0 0
  %156 = vmatprep.subr.bf16.mxu0 0
  %157 = vmatpush1.bf16.msra.mxu0 0
  %158 = vmatprep.subr.bf16.mxu0 0
  %159 = vmatpush1.bf16.msra.mxu0 0
  %160 = vmatprep.subr.bf16.mxu0 0
  %161 = vmatpush1.bf16.msra.mxu0 0
  %162 = vmatprep.subr.bf16.mxu0 0
  %163 = vmatpush1.bf16.msra.mxu0 0
  %164 = vmatprep.subr.bf16.mxu0 0
  %165 = vmatpush1.bf16.msra.mxu0 0
  %166 = vmatprep.subr.bf16.mxu0 0
  %167 = vmatpush1.bf16.msra.mxu0 0
  %168 = vmatprep.subr.bf16.mxu0 0
  %169 = vmatpush1.bf16.msra.mxu0 0
  %170 = vmatprep.subr.bf16.mxu0 0
  %171 = vmatpush1.bf16.msra.mxu0 0
  %172 = vmatprep.subr.bf16.mxu0 0
  %173 = vmatpush1.bf16.msra.mxu0 0
  %174 = vmatprep.subr.bf16.mxu0 0
  %175 = vmatpush1.bf16.msra.mxu0 0
  %176 = vmatprep.subr.bf16.mxu0 0
  %177 = vmatpush1.bf16.msra.mxu0 0
  %178 = vmatprep.mubr.bf16.mxu0 0
  %179 = vmatmul.mubr.bf16.gmra.mrb[0].mxu0 %v123
  %v180 = vpop.f32.mrb[0].mxu0
  %v181 = vadd.f32 0.0, %v180
  %v182 = vpop.f32.mrb[0].mxu0
  %v183 = vadd.f32 0.0, %v182
  %v184 = vpop.f32.mrb[0].mxu0
  %v185 = vadd.f32 0.0, %v184
  %v186 = vpop.f32.mrb[0].mxu0
  %v187 = vadd.f32 0.0, %v186
  %188 = vmatprep.mubr.bf16.mxu0 0
  %189 = vmatmul.mubr.bf16.gmra.mrb[0].mxu0 %v126
  %v190 = vpop.f32.mrb[0].mxu0
  %v191 = vadd.f32 0.0, %v190
  %v192 = vpop.f32.mrb[0].mxu0
  %v193 = vadd.f32 0.0, %v192
  %v194 = vpop.f32.mrb[0].mxu0
  %v195 = vadd.f32 0.0, %v194
  %v196 = vpop.f32.mrb[0].mxu0
  %v197 = vadd.f32 0.0, %v196
  %198 = vmatprep.mubr.bf16.mxu0 0
  %199 = vmatmul.mubr.bf16.gmra.mrb[0].mxu0 %v129
  %v200 = vpop.f32.mrb[0].mxu0
  %v201 = vadd.f32 0.0, %v200
  %v202 = vpop.f32.mrb[0].mxu0
  %v203 = vadd.f32 0.0, %v202
  %v204 = vpop.f32.mrb[0].mxu0
  %v205 = vadd.f32 0.0, %v204
  %v206 = vpop.f32.mrb[0].mxu0
  %v207 = vadd.f32 0.0, %v206
  %208 = vmatprep.mubr.bf16.mxu0 0
  %209 = vmatmul.mubr.bf16.gmra.mrb[0].mxu0 %v132
  %v210 = vpop.f32.mrb[0].mxu0
  %v211 = vadd.f32 0.0, %v210
  %v212 = vpop.f32.mrb[0].mxu0
  %v213 = vadd.f32 0.0, %v212
  %v214 = vpop.f32.mrb[0].mxu0
  %v215 = vadd.f32 0.0, %v214
  %v216 = vpop.f32.mrb[0].mxu0
  %v217 = vadd.f32 0.0, %v216
  %218 = vmatprep.mubr.bf16.mxu0 0
  %219 = vmatmul.mubr.bf16.gmra.mrb[0].mxu0 %v135
  %v220 = vpop.f32.mrb[0].mxu0
  %v221 = vadd.f32 0.0, %v220
  %v222 = vpop.f32.mrb[0].mxu0
  %v223 = vadd.f32 0.0, %v222
  %v224 = vpop.f32.mrb[0].mxu0
  %v225 = vadd.f32 0.0, %v224
  %v226 = vpop.f32.mrb[0].mxu0
  %v227 = vadd.f32 0.0, %v226
  %228 = vmatprep.mubr.bf16.mxu0 0
  %229 = vmatmul.mubr.bf16.gmra.mrb[0].mxu0 %v138
  %v230 = vpop.f32.mrb[0].mxu0
  %v231 = vadd.f32 0.0, %v230
  %v232 = vpop.f32.mrb[0].mxu0
  %v233 = vadd.f32 0.0, %v232
  %v234 = vpop.f32.mrb[0].mxu0
  %v235 = vadd.f32 0.0, %v234
  %v236 = vpop.f32.mrb[0].mxu0
  %v237 = vadd.f32 0.0, %v236
  %238 = vmatprep.mubr.bf16.mxu0 0
  %239 = vmatmul.mubr.bf16.gmra.mrb[0].mxu0 %v141
  %v240 = vpop.f32.mrb[0].mxu0
  %v241 = vadd.f32 0.0, %v240
  %v242 = vpop.f32.mrb[0].mxu0
  %v243 = vadd.f32 0.0, %v242
  %v244 = vpop.f32.mrb[0].mxu0
  %v245 = vadd.f32 0.0, %v244
  %v246 = vpop.f32.mrb[0].mxu0
  %v247 = vadd.f32 0.0, %v246
  %248 = vmatprep.mubr.bf16.mxu0 0
  %249 = vmatmul.mubr.bf16.gmra.mrb[0].mxu0 %v144
  %v250 = vpop.f32.mrb[0].mxu0
  %v251 = vadd.f32 0.0, %v250
  %v252 = vpop.f32.mrb[0].mxu0
  %v253 = vadd.f32 0.0, %v252
  %v254 = vpop.f32.mrb[0].mxu0
  %v255 = vadd.f32 0.0, %v254
  %v256 = vpop.f32.mrb[0].mxu0
  %v257 = vadd.f32 0.0, %v256
  %258 = vdwg.mxu0
  %v259 = vpack.c.bf16 %v185, %v181
  %v260 = vpack.c.bf16 %v187, %v183
  %v261 = vpack.c.bf16 %v195, %v191
  %v262 = vpack.c.bf16 %v197, %v193
  %v263 = vpack.c.bf16 %v205, %v201
  %v264 = vpack.c.bf16 %v207, %v203
  %v265 = vpack.c.bf16 %v215, %v211
  %v266 = vpack.c.bf16 %v217, %v213
  %v267 = vpack.c.bf16 %v225, %v221
  %v268 = vpack.c.bf16 %v227, %v223
  %v269 = vpack.c.bf16 %v235, %v231
  %v270 = vpack.c.bf16 %v237, %v233
  %v271 = vpack.c.bf16 %v245, %v241
  %v272 = vpack.c.bf16 %v247, %v243
  %v273 = vpack.c.bf16 %v255, %v251
  %v274 = vpack.c.bf16 %v257, %v253
  %v291 = vunpack.c.l.b16 %v259
  %v292 = vunpack.c.l.b16 %v260
  %v293 = vunpack.c.h.b16 %v259
  %v294 = vunpack.c.h.b16 %v260
  %v295 = vunpack.c.l.b16 %v261
  %v296 = vunpack.c.l.b16 %v262
  %v297 = vunpack.c.h.b16 %v261
  %v298 = vunpack.c.h.b16 %v262
  %v299 = vunpack.c.l.b16 %v263
  %v300 = vunpack.c.l.b16 %v264
  %v301 = vunpack.c.h.b16 %v263
  %v302 = vunpack.c.h.b16 %v264
  %v303 = vunpack.c.l.b16 %v265
  %v304 = vunpack.c.l.b16 %v266
  %v305 = vunpack.c.h.b16 %v265
  %v306 = vunpack.c.h.b16 %v266
  %v307 = vunpack.c.l.b16 %v267
  %v308 = vunpack.c.l.b16 %v268
  %v309 = vunpack.c.h.b16 %v267
  %v310 = vunpack.c.h.b16 %v268
  %v311 = vunpack.c.l.b16 %v269
  %v312 = vunpack.c.l.b16 %v270
  %v313 = vunpack.c.h.b16 %v269
  %v314 = vunpack.c.h.b16 %v270
  %v315 = vunpack.c.l.b16 %v271
  %v316 = vunpack.c.l.b16 %v272
  %v317 = vunpack.c.h.b16 %v271
  %v318 = vunpack.c.h.b16 %v272
  %v319 = vunpack.c.l.b16 %v273
  %v320 = vunpack.c.l.b16 %v274
  %v321 = vunpack.c.h.b16 %v273
  %v322 = vunpack.c.h.b16 %v274
  %v323 = vpack.c.b16 %v292, %v291
  %v324 = vpack.c.b16 %v294, %v293
  %v325 = vpack.c.b16 %v296, %v295
  %v326 = vpack.c.b16 %v298, %v297
  %v327 = vpack.c.b16 %v300, %v299
  %v328 = vpack.c.b16 %v302, %v301
  %v329 = vpack.c.b16 %v304, %v303
  %v330 = vpack.c.b16 %v306, %v305
  %v331 = vpack.c.b16 %v308, %v307
  %v332 = vpack.c.b16 %v310, %v309
  %v333 = vpack.c.b16 %v312, %v311
  %v334 = vpack.c.b16 %v314, %v313
  %v335 = vpack.c.b16 %v316, %v315
  %v336 = vpack.c.b16 %v318, %v317
  %v337 = vpack.c.b16 %v320, %v319
  %v338 = vpack.c.b16 %v322, %v321
  %355 = vst [vmem:[%s3] sm:$0xff] %v323
  %356 = vst [vmem:[%s3 + $0x8] sm:$0xff] %v324
  %357 = vst [vmem:[%s3 + $0x10] sm:$0xff] %v325
  %358 = vst [vmem:[%s3 + $0x18] sm:$0xff] %v326
  %359 = vst [vmem:[%s3 + $0x20] sm:$0xff] %v327
  %360 = vst [vmem:[%s3 + $0x28] sm:$0xff] %v328
  %361 = vst [vmem:[%s3 + $0x30] sm:$0xff] %v329
  %362 = vst [vmem:[%s3 + $0x38] sm:$0xff] %v330
  %363 = vst [vmem:[%s3 + $0x40] sm:$0xff] %v331
  %364 = vst [vmem:[%s3 + $0x48] sm:$0xff] %v332
  %365 = vst [vmem:[%s3 + $0x50] sm:$0xff] %v333
  %366 = vst [vmem:[%s3 + $0x58] sm:$0xff] %v334
  %367 = vst [vmem:[%s3 + $0x60] sm:$0xff] %v335
  %368 = vst [vmem:[%s3 + $0x68] sm:$0xff] %v336
  %369 = vst [vmem:[%s3 + $0x70] sm:$0xff] %v337
  %370 = vst [vmem:[%s3 + $0x78] sm:$0xff] %v338
  %v371 = vld [vmem:[%s2] sm:$0xf]
  %v372 = vld [vmem:[%s2 + $0x4] sm:$0xf]
  %v373 = vld [vmem:[%s2 + $0x8] sm:$0xf]
  %v374 = vld [vmem:[%s2 + $0xc] sm:$0xf]
  %v375 = vld [vmem:[%s2 + $0x10] sm:$0xf]
  %v376 = vld [vmem:[%s2 + $0x14] sm:$0xf]
  %v377 = vld [vmem:[%s2 + $0x18] sm:$0xf]
  %v378 = vld [vmem:[%s2 + $0x1c] sm:$0xf]
  %v379 = vld [vmem:[%s2 + $0x20] sm:$0xf]
  %v380 = vld [vmem:[%s2 + $0x24] sm:$0xf]
  %v381 = vld [vmem:[%s2 + $0x28] sm:$0xf]
  %v382 = vld [vmem:[%s2 + $0x2c] sm:$0xf]
  %v383 = vld [vmem:[%s2 + $0x30] sm:$0xf]
  %v384 = vld [vmem:[%s2 + $0x34] sm:$0xf]
  %v385 = vld [vmem:[%s2 + $0x38] sm:$0xf]
  %v386 = vld [vmem:[%s2 + $0x3c] sm:$0xf]
  %v387 = vld [vmem:[%s2 + $0x40] sm:$0xf]
  %v388 = vld [vmem:[%s2 + $0x44] sm:$0xf]
  %v389 = vld [vmem:[%s2 + $0x48] sm:$0xf]
  %v390 = vld [vmem:[%s2 + $0x4c] sm:$0xf]
  %v391 = vld [vmem:[%s2 + $0x50] sm:$0xf]
  %v392 = vld [vmem:[%s2 + $0x54] sm:$0xf]
  %v393 = vld [vmem:[%s2 + $0x58] sm:$0xf]
  %v394 = vld [vmem:[%s2 + $0x5c] sm:$0xf]
  %v395 = vld [vmem:[%s2 + $0x60] sm:$0xf]
  %v396 = vld [vmem:[%s2 + $0x64] sm:$0xf]
  %v397 = vld [vmem:[%s2 + $0x68] sm:$0xf]
  %v398 = vld [vmem:[%s2 + $0x6c] sm:$0xf]
  %v399 = vld [vmem:[%s2 + $0x70] sm:$0xf]
  %v400 = vld [vmem:[%s2 + $0x74] sm:$0xf]
  %v401 = vld [vmem:[%s2 + $0x78] sm:$0xf]
  %v402 = vld [vmem:[%s2 + $0x7c] sm:$0xf]
  %v435 = vunpack.c.l.b16 %v371
  %v436 = vunpack.c.l.b16 %v372
  %v437 = vunpack.c.l.b16 %v373
  %v438 = vunpack.c.l.b16 %v374
  %v439 = vunpack.c.l.b16 %v375
  %v440 = vunpack.c.l.b16 %v376
  %v441 = vunpack.c.l.b16 %v377
  %v442 = vunpack.c.l.b16 %v378
  %v443 = vunpack.c.l.b16 %v379
  %v444 = vunpack.c.l.b16 %v380
  %v445 = vunpack.c.l.b16 %v381
  %v446 = vunpack.c.l.b16 %v382
  %v447 = vunpack.c.l.b16 %v383
  %v448 = vunpack.c.l.b16 %v384
  %v449 = vunpack.c.l.b16 %v385
  %v450 = vunpack.c.l.b16 %v386
  %v451 = vunpack.c.l.b16 %v387
  %v452 = vunpack.c.l.b16 %v388
  %v453 = vunpack.c.l.b16 %v389
  %v454 = vunpack.c.l.b16 %v390
  %v455 = vunpack.c.l.b16 %v391
  %v456 = vunpack.c.l.b16 %v392
  %v457 = vunpack.c.l.b16 %v393
  %v458 = vunpack.c.l.b16 %v394
  %v459 = vunpack.c.l.b16 %v395
  %v460 = vunpack.c.l.b16 %v396
  %v461 = vunpack.c.l.b16 %v397
  %v462 = vunpack.c.l.b16 %v398
  %v463 = vunpack.c.l.b16 %v399
  %v464 = vunpack.c.l.b16 %v400
  %v465 = vunpack.c.l.b16 %v401
  %v466 = vunpack.c.l.b16 %v402
  %v467 = vpack.c.b16 %v436, %v435
  %v468 = vpack.c.b16 %v438, %v437
  %v469 = vpack.c.b16 %v440, %v439
  %v470 = vpack.c.b16 %v442, %v441
  %v471 = vpack.c.b16 %v444, %v443
  %v472 = vpack.c.b16 %v446, %v445
  %v473 = vpack.c.b16 %v448, %v447
  %v474 = vpack.c.b16 %v450, %v449
  %v475 = vpack.c.b16 %v452, %v451
  %v476 = vpack.c.b16 %v454, %v453
  %v477 = vpack.c.b16 %v456, %v455
  %v478 = vpack.c.b16 %v458, %v457
  %v479 = vpack.c.b16 %v460, %v459
  %v480 = vpack.c.b16 %v462, %v461
  %v481 = vpack.c.b16 %v464, %v463
  %v482 = vpack.c.b16 %v466, %v465
  %499 = vmatprep.subr.bf16.mxu0 0
  %500 = vmatpush1.bf16.msra.mxu0 %v467
  %501 = vmatprep.subr.bf16.mxu0 0
  %502 = vmatpush1.bf16.msra.mxu0 %v468
  %503 = vmatprep.subr.bf16.mxu0 0
  %504 = vmatpush1.bf16.msra.mxu0 %v469
  %505 = vmatprep.subr.bf16.mxu0 0
  %506 = vmatpush1.bf16.msra.mxu0 %v470
  %507 = vmatprep.subr.bf16.mxu0 0
  %508 = vmatpush1.bf16.msra.mxu0 %v471
  %509 = vmatprep.subr.bf16.mxu0 0
  %510 = vmatpush1.bf16.msra.mxu0 %v472
  %511 = vmatprep.subr.bf16.mxu0 0
  %512 = vmatpush1.bf16.msra.mxu0 %v473
  %513 = vmatprep.subr.bf16.mxu0 0
  %514 = vmatpush1.bf16.msra.mxu0 %v474
  %515 = vmatprep.subr.bf16.mxu0 0
  %516 = vmatpush1.bf16.msra.mxu0 %v475
  %517 = vmatprep.subr.bf16.mxu0 0
  %518 = vmatpush1.bf16.msra.mxu0 %v476
  %519 = vmatprep.subr.bf16.mxu0 0
  %520 = vmatpush1.bf16.msra.mxu0 %v477
  %521 = vmatprep.subr.bf16.mxu0 0
  %522 = vmatpush1.bf16.msra.mxu0 %v478
  %523 = vmatprep.subr.bf16.mxu0 0
  %524 = vmatpush1.bf16.msra.mxu0 %v479
  %525 = vmatprep.subr.bf16.mxu0 0
  %526 = vmatpush1.bf16.msra.mxu0 %v480
  %527 = vmatprep.subr.bf16.mxu0 0
  %528 = vmatpush1.bf16.msra.mxu0 %v481
  %529 = vmatprep.subr.bf16.mxu0 0
  %530 = vmatpush1.bf16.msra.mxu0 %v482
  %531 = vmatprep.mubr.bf16.mxu0 %v260
  %532 = vmatmul.mubr.bf16.gmra.mrb[0].mxu0 %v259
  %v533 = vpop.f32.mrb[0].mxu0
  %v534 = vadd.f32 0.0, %v533
  %v535 = vpop.f32.mrb[0].mxu0
  %v536 = vpop.f32.mrb[0].mxu0
  %v537 = vadd.f32 0.0, %v536
  %v538 = vpop.f32.mrb[0].mxu0
  %539 = vmatprep.mubr.bf16.mxu0 %v262
  %540 = vmatmul.mubr.bf16.gmra.mrb[0].mxu0 %v261
  %v541 = vpop.f32.mrb[0].mxu0
  %v542 = vadd.f32 0.0, %v541
  %v543 = vpop.f32.mrb[0].mxu0
  %v544 = vpop.f32.mrb[0].mxu0
  %v545 = vadd.f32 0.0, %v544
  %v546 = vpop.f32.mrb[0].mxu0
  %547 = vmatprep.mubr.bf16.mxu0 %v264
  %548 = vmatmul.mubr.bf16.gmra.mrb[0].mxu0 %v263
  %v549 = vpop.f32.mrb[0].mxu0
  %v550 = vadd.f32 0.0, %v549
  %v551 = vpop.f32.mrb[0].mxu0
  %v552 = vpop.f32.mrb[0].mxu0
  %v553 = vadd.f32 0.0, %v552
  %v554 = vpop.f32.mrb[0].mxu0
  %555 = vmatprep.mubr.bf16.mxu0 %v266
  %556 = vmatmul.mubr.bf16.gmra.mrb[0].mxu0 %v265
  %v557 = vpop.f32.mrb[0].mxu0
  %v558 = vadd.f32 0.0, %v557
  %v559 = vpop.f32.mrb[0].mxu0
  %v560 = vpop.f32.mrb[0].mxu0
  %v561 = vadd.f32 0.0, %v560
  %v562 = vpop.f32.mrb[0].mxu0
  %563 = vmatprep.mubr.bf16.mxu0 %v268
  %564 = vmatmul.mubr.bf16.gmra.mrb[0].mxu0 %v267
  %v565 = vpop.f32.mrb[0].mxu0
  %v566 = vadd.f32 0.0, %v565
  %v567 = vpop.f32.mrb[0].mxu0
  %v568 = vpop.f32.mrb[0].mxu0
  %v569 = vadd.f32 0.0, %v568
  %v570 = vpop.f32.mrb[0].mxu0
  %571 = vmatprep.mubr.bf16.mxu0 %v270
  %572 = vmatmul.mubr.bf16.gmra.mrb[0].mxu0 %v269
  %v573 = vpop.f32.mrb[0].mxu0
  %v574 = vadd.f32 0.0, %v573
  %v575 = vpop.f32.mrb[0].mxu0
  %v576 = vpop.f32.mrb[0].mxu0
  %v577 = vadd.f32 0.0, %v576
  %v578 = vpop.f32.mrb[0].mxu0
  %579 = vmatprep.mubr.bf16.mxu0 %v272
  %580 = vmatmul.mubr.bf16.gmra.mrb[0].mxu0 %v271
  %v581 = vpop.f32.mrb[0].mxu0
  %v582 = vadd.f32 0.0, %v581
  %v583 = vpop.f32.mrb[0].mxu0
  %v584 = vpop.f32.mrb[0].mxu0
  %v585 = vadd.f32 0.0, %v584
  %v586 = vpop.f32.mrb[0].mxu0
  %587 = vmatprep.mubr.bf16.mxu0 %v274
  %588 = vmatmul.mubr.bf16.gmra.mrb[0].mxu0 %v273
  %v589 = vpop.f32.mrb[0].mxu0
  %v590 = vadd.f32 0.0, %v589
  %v591 = vpop.f32.mrb[0].mxu0
  %v592 = vpop.f32.mrb[0].mxu0
  %v593 = vadd.f32 0.0, %v592
  %v594 = vpop.f32.mrb[0].mxu0
  %595 = vdwg.mxu0
  %vm596 = vcmask 31744
  %597 = vst.msk [vmem:[%s4] sm:$0xff] %vm596, %v534
  %598 = vst.msk [vmem:[%s4 + $0x8] sm:$0xff] %vm596, %v537
  %599 = vst.msk [vmem:[%s4 + $0x10] sm:$0xff] %vm596, %v542
  %600 = vst.msk [vmem:[%s4 + $0x18] sm:$0xff] %vm596, %v545
  %601 = vst.msk [vmem:[%s4 + $0x20] sm:$0xff] %vm596, %v550
  %602 = vst.msk [vmem:[%s4 + $0x28] sm:$0xff] %vm596, %v553
  %603 = vst.msk [vmem:[%s4 + $0x30] sm:$0xff] %vm596, %v558
  %604 = vst.msk [vmem:[%s4 + $0x38] sm:$0xff] %vm596, %v561
  %605 = vst.msk [vmem:[%s4 + $0x40] sm:$0xff] %vm596, %v566
  %606 = vst.msk [vmem:[%s4 + $0x48] sm:$0xff] %vm596, %v569
  %607 = vst.msk [vmem:[%s4 + $0x50] sm:$0xff] %vm596, %v574
  %608 = vst.msk [vmem:[%s4 + $0x58] sm:$0xff] %vm596, %v577
  %609 = vst.msk [vmem:[%s4 + $0x60] sm:$0xff] %vm596, %v582
  %610 = vst.msk [vmem:[%s4 + $0x68] sm:$0xff] %vm596, %v585
  %611 = vst.msk [vmem:[%s4 + $0x70] sm:$0xff] %vm596, %v590
  %612 = vst.msk [vmem:[%s4 + $0x78] sm:$0xff] %vm596, %v593
  // Predicated region
  $region14: #{attnet_s_forward.6} parent=0 // pred_check
    _
  $region15: #{attnet_s_forward.6} parent=0 // pred_check_branch
    %614 = sbr.rel (0) target = $region17
  $region16: #{attnet_s_forward.6} parent=0 // pred_region
    _
  $region17: #{attnet_s_forward.6} parent=0 // pred_fallthru
    _
  // Predicated region
  $region18: #{attnet_s_forward.6} parent=0 // pred_check
    _
  $region19: #{attnet_s_forward.6} parent=0 // pred_check_branch
    %616 = sbr.rel (0) target = $region21
  $region20: #{attnet_s_forward.6} parent=0 // pred_region
    _
  $region21: #{attnet_s_forward.6} parent=0 // pred_fallthru
    _
  // Predicated region
  $region22: #{attnet_s_forward.6} parent=0 // pred_check
    _
  $region23: #{attnet_s_forward.6} parent=0 // pred_check_branch
    %618 = sbr.rel (0) target = $region25
  $region24: #{attnet_s_forward.6} parent=0 // pred_region
    _
  $region25: #{attnet_s_forward.6} parent=0 // pred_fallthru
    _
  // Predicated region
  $region26: #{attnet_s_forward.6} parent=0 // pred_check
    _
  $region27: #{attnet_s_forward.6} parent=0 // pred_check_branch
    %620 = sbr.rel (0) target = $region29
  $region28: #{attnet_s_forward.6} parent=0 // pred_region
    _
  $region29: #{attnet_s_forward.6} parent=0 // pred_fallthru
    _

// kernel: attnet_s_forward.7
$region0: #{attnet_s_forward.7}
  #allocation0 [shape = 'u32[]', space=smem, size = 0x4, offset = 0x4, fixed_abs, tag = 'smem constant byte address 0x4 - core index']
  #allocation1 [shape = 'u32[144,128]{1,0:T(1,128)}', space=vmem, size = 0x12000, scoped, tag = 'internal scratch']
  #allocation2 [shape = 'f32[32,2]{1,0:T(8,128)}', space=vmem, size = 0x4000, scoped, tag = 'scratch operand']
  #allocation3 [shape = 'f32[32,2]{1,0:T(8,128)}', space=vmem, size = 0x4000, scoped, tag = 'scratch operand']
  #allocation4 [shape = 'f32[32,256]{1,0:T(8,128)}', space=vmem, size = 0x8000, scoped, tag = 'scratch operand']
  #allocation5 [shape = 's32[1]{0}', space=sflag, size = 0x4, scoped, tag = 'scoped memory for attnet_s_forward.7']
  #allocation6 [shape = 's32[1]{0:T(128)S(6)}', space=smem, size = 0x200, scoped, tag = 'prefetched SMEM operand 0']
  %s0 = inlined_call_operand.<no memory space> [shape: s32[1], index: 0, kind: input, shape index: {}]
  %s1 = inlined_call_operand.vmem [shape: f32[32,2], index: 1, kind: input, shape index: {}]
  %s2 = inlined_call_operand.vmem [shape: f32[2,128], index: 2, kind: input, shape index: {}]
  %s3 = inlined_call_operand.vmem [shape: bf16[128,256], index: 3, kind: input, shape index: {}]
  %s4 = inlined_call_operand.vmem [shape: s8[32,128], index: 4, kind: input, shape index: {}]
  %s5 = inlined_call_operand.vmem [shape: f32[32,128], index: 5, kind: output, shape index: {}]
  %s6 = sld [smem:[#allocation0]]
  $region38: #{attnet_s_forward.7} parent=0
    _
  %s8 = ssub.s32 1, %s6
  %s9 = scalar_select 0, %s8, %s6
  %10 = sst [smem:[#allocation6]] %s0
  // Predicated region
  $region2: #{attnet_s_forward.7} parent=0 // pred_check
    _
  $region3: #{attnet_s_forward.7} parent=0 // pred_check_branch
    %12 = sbr.rel (0) target = $region5
  $region4: #{attnet_s_forward.7} parent=0 // pred_region
    _
  $region5: #{attnet_s_forward.7} parent=0 // pred_fallthru
    _
  // Predicated region
  $region6: #{attnet_s_forward.7} parent=0 // pred_check
    _
  $region7: #{attnet_s_forward.7} parent=0 // pred_check_branch
    %14 = sbr.rel (0) target = $region9
  $region8: #{attnet_s_forward.7} parent=0 // pred_region
    _
  $region9: #{attnet_s_forward.7} parent=0 // pred_fallthru
    _
  // Predicated region
  $region10: #{attnet_s_forward.7} parent=0 // pred_check
    _
  $region11: #{attnet_s_forward.7} parent=0 // pred_check_branch
    %16 = sbr.rel (0) target = $region13
  $region12: #{attnet_s_forward.7} parent=0 // pred_region
    _
  $region13: #{attnet_s_forward.7} parent=0 // pred_fallthru
    _
  // Predicated region
  $region14: #{attnet_s_forward.7} parent=0 // pred_check
    _
  $region15: #{attnet_s_forward.7} parent=0 // pred_check_branch
    %18 = sbr.rel (0) target = $region17
  $region16: #{attnet_s_forward.7} parent=0 // pred_region
    _
  $region17: #{attnet_s_forward.7} parent=0 // pred_fallthru
    _
  %p20 = scmp.eq.s32.totalorder 0, 0
  // Predicated region
  $region18: #{attnet_s_forward.7} parent=0 // pred_check
    %p21 = pneg %p20
  $region19: #{attnet_s_forward.7} parent=0 // pred_check_branch
    %23 = sbr.rel (%p21) target = $region21
  $region20: #{attnet_s_forward.7} parent=0 // pred_region
    %vm24 = vcmask 15360
    %25 = vst.msk [vmem:[#allocation2] sm:$0xff] %vm24, -1e+09
    %26 = vst.msk [vmem:[#allocation2 + $0x8] sm:$0xff] %vm24, -1e+09
    %27 = vst.msk [vmem:[#allocation2 + $0x10] sm:$0xff] %vm24, -1e+09
    %28 = vst.msk [vmem:[#allocation2 + $0x18] sm:$0xff] %vm24, -1e+09
    %29 = vst.msk [vmem:[#allocation3] sm:$0xff] %vm24, 0.0
    %30 = vst.msk [vmem:[#allocation3 + $0x8] sm:$0xff] %vm24, 0.0
    %31 = vst.msk [vmem:[#allocation3 + $0x10] sm:$0xff] %vm24, 0.0
    %32 = vst.msk [vmem:[#allocation3 + $0x18] sm:$0xff] %vm24, 0.0
    %33 = vst [vmem:[#allocation4] sm:$0xff] 0.0
    %34 = vst [vmem:[#allocation4 + $0x8] sm:$0xff] 0.0
    %35 = vst [vmem:[#allocation4 + $0x10] sm:$0xff] 0.0
    %36 = vst [vmem:[#allocation4 + $0x18] sm:$0xff] 0.0
    %37 = vst [vmem:[#allocation4 + $0x20] sm:$0xff] 0.0
    %38 = vst [vmem:[#allocation4 + $0x28] sm:$0xff] 0.0
    %39 = vst [vmem:[#allocation4 + $0x30] sm:$0xff] 0.0
    %40 = vst [vmem:[#allocation4 + $0x38] sm:$0xff] 0.0
  $region21: #{attnet_s_forward.7} parent=0 // pred_fallthru
    _
  %s41 = sadd.s32 0, 0
  %s42 = sld [smem:[#allocation6 + %s41]]
  %p43 = scmp.gt.s32.totalorder %s42, 0
  // Predicated region
  $region22: #{attnet_s_forward.7} parent=0 // pred_check
    %p44 = pneg %p43
  $region23: #{attnet_s_forward.7} parent=0 // pred_check_branch
    %46 = sbr.rel (%p44) target = $region25
  $region24: #{attnet_s_forward.7} parent=0 // pred_region
    %v47 = vld [vmem:[%s4] sm:$0xff]
    %v48 = vunpack.c.0.s8 %v47
    %v49 = vunpack.c.1.s8 %v47
    %v50 = vunpack.c.2.s8 %v47
    %v51 = vunpack.c.3.s8 %v47
    %v52 = vcvt.s32.f32 %v48
    %v53 = vcvt.s32.f32 %v49
    %v54 = vcvt.s32.f32 %v50
    %v55 = vcvt.s32.f32 %v51
    %v56 = vsub.f32 %v52, 1.0
    %v57 = vsub.f32 %v53, 1.0
    %v58 = vsub.f32 %v54, 1.0
    %v59 = vsub.f32 %v55, 1.0
    %v60 = vmul.f32 %v56, 2e+09
    %v61 = vmul.f32 %v57, 2e+09
    %v62 = vmul.f32 %v58, 2e+09
    %v63 = vmul.f32 %v59, 2e+09
    %v64 = vld [vmem:[%s3] sm:$0xff]
    %v65 = vld [vmem:[%s3 + $0x8] sm:$0xff]
    %v66 = vld [vmem:[%s3 + $0x10] sm:$0xff]
    %v67 = vld [vmem:[%s3 + $0x18] sm:$0xff]
    %v68 = vld [vmem:[%s3 + $0x20] sm:$0xff]
    %v69 = vld [vmem:[%s3 + $0x28] sm:$0xff]
    %v70 = vld [vmem:[%s3 + $0x30] sm:$0xff]
    %v71 = vld [vmem:[%s3 + $0x38] sm:$0xff]
    %v72 = vld [vmem:[%s3 + $0x40] sm:$0xff]
    %v73 = vld [vmem:[%s3 + $0x48] sm:$0xff]
    %v74 = vld [vmem:[%s3 + $0x50] sm:$0xff]
    %v75 = vld [vmem:[%s3 + $0x58] sm:$0xff]
    %v76 = vld [vmem:[%s3 + $0x60] sm:$0xff]
    %v77 = vld [vmem:[%s3 + $0x68] sm:$0xff]
    %v78 = vld [vmem:[%s3 + $0x70] sm:$0xff]
    %v79 = vld [vmem:[%s3 + $0x78] sm:$0xff]
    %v80 = vld [vmem:[%s1] sm:$0xff]
    %v81 = vld [vmem:[%s1 + $0x8] sm:$0xff]
    %v82 = vld [vmem:[%s1 + $0x10] sm:$0xff]
    %v83 = vld [vmem:[%s1 + $0x18] sm:$0xff]
    %v84 = vld [vmem:[%s2] sm:$0x3]
    %86 = vset.pattern.permute.xlu0 0
    %87 = vperm.xlu0 %86, %v80
    %v88 = vpop.permute.xlu0 %87
    %91 = vset.pattern.permute.xlu0 0
    %92 = vperm.xlu0 %91, %v81
    %v93 = vpop.permute.xlu0 %92
    %96 = vset.pattern.permute.xlu0 0
    %97 = vperm.xlu0 %96, %v82
    %v98 = vpop.permute.xlu0 %97
    %101 = vset.pattern.permute.xlu0 0
    %102 = vperm.xlu0 %101, %v83
    %v103 = vpop.permute.xlu0 %102
    %v105 = vlaneseq
    %v106 = vshrl.u32 %v105, 7
    %v107 = vsub.s32 0, %v106
    %v108 = vrot.slane %v84, %v107
    %v109 = vadd.f32 %v88, %v108
    %v110 = vadd.f32 %v93, %v108
    %v111 = vadd.f32 %v98, %v108
    %v112 = vadd.f32 %v103, %v108
    %v113 = vmul.f32 %v109, 0.2
    %v114 = vmul.f32 %v110, 0.2
    %v115 = vmul.f32 %v111, 0.2
    %v116 = vmul.f32 %v112, 0.2
    %v117 = vmax.f32 %v109, %v113
    %v118 = vmax.f32 %v110, %v114
    %v119 = vmax.f32 %v111, %v115
    %v120 = vmax.f32 %v112, %v116
    %v121 = vadd.f32 %v117, %v60
    %v122 = vadd.f32 %v118, %v61
    %v123 = vadd.f32 %v119, %v62
    %v124 = vadd.f32 %v120, %v63
    %v125 = vld [vmem:[#allocation2] sm:$0xff]
    %v126 = vld [vmem:[#allocation2 + $0x8] sm:$0xff]
    %v127 = vld [vmem:[#allocation2 + $0x10] sm:$0xff]
    %v128 = vld [vmem:[#allocation2 + $0x18] sm:$0xff]
    %129 = vmax.xlane.f32.xlu0 %v121
    %v130 = vpop.xlane.xlu0 %129
    %131 = vmax.xlane.f32.xlu0 %v122
    %v132 = vpop.xlane.xlu0 %131
    %133 = vmax.xlane.f32.xlu0 %v123
    %v134 = vpop.xlane.xlu0 %133
    %135 = vmax.xlane.f32.xlu0 %v124
    %v136 = vpop.xlane.xlu0 %135
    %v137 = vmax.f32 %v125, %v130
    %v138 = vmax.f32 %v126, %v132
    %v139 = vmax.f32 %v127, %v134
    %v140 = vmax.f32 %v128, %v136
    %v141 = vsub.f32 %v125, %v137
    %v142 = vsub.f32 %v126, %v138
    %v143 = vsub.f32 %v127, %v139
    %v144 = vsub.f32 %v128, %v140
    %v145 = vmul.f32 %v141, 1.442695
    %v146 = vpow.pop %v145
    %v147 = vmul.f32 %v142, 1.442695
    %v148 = vpow.pop %v147
    %v149 = vmul.f32 %v143, 1.442695
    %v150 = vpow.pop %v149
    %v151 = vmul.f32 %v144, 1.442695
    %v152 = vpow.pop %v151
    %154 = vset.pattern.permute.xlu0 0
    %155 = vperm.xlu0 %154, %v137
    %v156 = vpop.permute.xlu0 %155
    %159 = vset.pattern.permute.xlu0 0
    %160 = vperm.xlu0 %159, %v138
    %v161 = vpop.permute.xlu0 %160
    %164 = vset.pattern.permute.xlu0 0
    %165 = vperm.xlu0 %164, %v139
    %v166 = vpop.permute.xlu0 %165
    %169 = vset.pattern.permute.xlu0 0
    %170 = vperm.xlu0 %169, %v140
    %v171 = vpop.permute.xlu0 %170
    %v173 = vsub.f32 %v121, %v156
    %v174 = vsub.f32 %v122, %v161
    %v175 = vsub.f32 %v123, %v166
    %v176 = vsub.f32 %v124, %v171
    %v177 = vmul.f32 %v173, 1.442695
    %v178 = vpow.pop %v177
    %v179 = vmul.f32 %v174, 1.442695
    %v180 = vpow.pop %v179
    %v181 = vmul.f32 %v175, 1.442695
    %v182 = vpow.pop %v181
    %v183 = vmul.f32 %v176, 1.442695
    %v184 = vpow.pop %v183
    %v185 = vld [vmem:[#allocation3] sm:$0xff]
    %v186 = vld [vmem:[#allocation3 + $0x8] sm:$0xff]
    %v187 = vld [vmem:[#allocation3 + $0x10] sm:$0xff]
    %v188 = vld [vmem:[#allocation3 + $0x18] sm:$0xff]
    %v189 = vmul.f32 %v146, %v185
    %v190 = vmul.f32 %v148, %v186
    %v191 = vmul.f32 %v150, %v187
    %v192 = vmul.f32 %v152, %v188
    %193 = vadd.xlane.f32.xlu0 %v178
    %v194 = vpop.xlane.xlu0 %193
    %195 = vadd.xlane.f32.xlu0 %v180
    %v196 = vpop.xlane.xlu0 %195
    %197 = vadd.xlane.f32.xlu0 %v182
    %v198 = vpop.xlane.xlu0 %197
    %199 = vadd.xlane.f32.xlu0 %v184
    %v200 = vpop.xlane.xlu0 %199
    %v201 = vadd.f32 %v189, %v194
    %v202 = vadd.f32 %v190, %v196
    %v203 = vadd.f32 %v191, %v198
    %v204 = vadd.f32 %v192, %v200
    %vm205 = vcmask 7168
    %206 = vst.msk [vmem:[#allocation3] sm:$0xff] %vm205, %v201
    %207 = vst.msk [vmem:[#allocation3 + $0x8] sm:$0xff] %vm205, %v202
    %208 = vst.msk [vmem:[#allocation3 + $0x10] sm:$0xff] %vm205, %v203
    %209 = vst.msk [vmem:[#allocation3 + $0x18] sm:$0xff] %vm205, %v204
    %v210 = vld [vmem:[#allocation4] sm:$0xff]
    %v211 = vld [vmem:[#allocation4 + $0x10] sm:$0xff]
    %v212 = vld [vmem:[#allocation4 + $0x20] sm:$0xff]
    %v213 = vld [vmem:[#allocation4 + $0x30] sm:$0xff]
    %215 = vset.pattern.permute.xlu0 0
    %216 = vperm.xlu0 %215, %v146
    %v217 = vpop.permute.xlu0 %216
    %220 = vset.pattern.permute.xlu0 0
    %221 = vperm.xlu0 %220, %v148
    %v222 = vpop.permute.xlu0 %221
    %225 = vset.pattern.permute.xlu0 0
    %226 = vperm.xlu0 %225, %v150
    %v227 = vpop.permute.xlu0 %226
    %230 = vset.pattern.permute.xlu0 0
    %231 = vperm.xlu0 %230, %v152
    %v232 = vpop.permute.xlu0 %231
    %v234 = vmul.f32 %v217, %v210
    %v235 = vmul.f32 %v222, %v211
    %v236 = vmul.f32 %v227, %v212
    %v237 = vmul.f32 %v232, %v213
    %v238 = vpack.c.bf16 %v180, %v178
    %v239 = vpack.c.bf16 %v184, %v182
    %v256 = vunpack.c.l.b16 %v64
    %v257 = vunpack.c.l.b16 %v65
    %v258 = vunpack.c.l.b16 %v66
    %v259 = vunpack.c.l.b16 %v67
    %v260 = vunpack.c.l.b16 %v68
    %v261 = vunpack.c.l.b16 %v69
    %v262 = vunpack.c.l.b16 %v70
    %v263 = vunpack.c.l.b16 %v71
    %v264 = vunpack.c.l.b16 %v72
    %v265 = vunpack.c.l.b16 %v73
    %v266 = vunpack.c.l.b16 %v74
    %v267 = vunpack.c.l.b16 %v75
    %v268 = vunpack.c.l.b16 %v76
    %v269 = vunpack.c.l.b16 %v77
    %v270 = vunpack.c.l.b16 %v78
    %v271 = vunpack.c.l.b16 %v79
    %v272 = vpack.c.b16 %v257, %v256
    %v273 = vpack.c.b16 %v259, %v258
    %v274 = vpack.c.b16 %v261, %v260
    %v275 = vpack.c.b16 %v263, %v262
    %v276 = vpack.c.b16 %v265, %v264
    %v277 = vpack.c.b16 %v267, %v266
    %v278 = vpack.c.b16 %v269, %v268
    %v279 = vpack.c.b16 %v271, %v270
    %288 = vmatprep.subr.bf16.mxu0 0
    %289 = vmatpush1.bf16.msra.mxu0 %v272
    %290 = vmatprep.subr.bf16.mxu0 0
    %291 = vmatpush1.bf16.msra.mxu0 %v273
    %292 = vmatprep.subr.bf16.mxu0 0
    %293 = vmatpush1.bf16.msra.mxu0 %v274
    %294 = vmatprep.subr.bf16.mxu0 0
    %295 = vmatpush1.bf16.msra.mxu0 %v275
    %296 = vmatprep.subr.bf16.mxu0 0
    %297 = vmatpush1.bf16.msra.mxu0 %v276
    %298 = vmatprep.subr.bf16.mxu0 0
    %299 = vmatpush1.bf16.msra.mxu0 %v277
    %300 = vmatprep.subr.bf16.mxu0 0
    %301 = vmatpush1.bf16.msra.mxu0 %v278
    %302 = vmatprep.subr.bf16.mxu0 0
    %303 = vmatpush1.bf16.msra.mxu0 %v279
    %304 = vmatprep.subr.bf16.mxu0 0
    %305 = vmatpush1.bf16.msra.mxu0 0
    %306 = vmatprep.subr.bf16.mxu0 0
    %307 = vmatpush1.bf16.msra.mxu0 0
    %308 = vmatprep.subr.bf16.mxu0 0
    %309 = vmatpush1.bf16.msra.mxu0 0
    %310 = vmatprep.subr.bf16.mxu0 0
    %311 = vmatpush1.bf16.msra.mxu0 0
    %312 = vmatprep.subr.bf16.mxu0 0
    %313 = vmatpush1.bf16.msra.mxu0 0
    %314 = vmatprep.subr.bf16.mxu0 0
    %315 = vmatpush1.bf16.msra.mxu0 0
    %316 = vmatprep.subr.bf16.mxu0 0
    %317 = vmatpush1.bf16.msra.mxu0 0
    %318 = vmatprep.subr.bf16.mxu0 0
    %319 = vmatpush1.bf16.msra.mxu0 0
    %320 = vmatprep.mubr.bf16.mxu0 0
    %321 = vmatmul.mubr.bf16.gmra.mrb[0].mxu0 %v238
    %v322 = vpop.f32.mrb[0].mxu0
    %v323 = vadd.f32 0.0, %v322
    %v324 = vpop.f32.mrb[0].mxu0
    %v325 = vpop.f32.mrb[0].mxu0
    %v326 = vadd.f32 0.0, %v325
    %v327 = vpop.f32.mrb[0].mxu0
    %328 = vmatprep.mubr.bf16.mxu0 0
    %329 = vmatmul.mubr.bf16.gmra.mrb[0].mxu0 %v239
    %v330 = vpop.f32.mrb[0].mxu0
    %v331 = vadd.f32 0.0, %v330
    %v332 = vpop.f32.mrb[0].mxu0
    %v333 = vpop.f32.mrb[0].mxu0
    %v334 = vadd.f32 0.0, %v333
    %v335 = vpop.f32.mrb[0].mxu0
    %336 = vdwg.mxu0
    %v337 = vadd.f32 %v234, %v323
    %v338 = vadd.f32 %v235, %v326
    %v339 = vadd.f32 %v236, %v331
    %v340 = vadd.f32 %v237, %v334
    %341 = vst [vmem:[#allocation4] sm:$0xff] %v337
    %342 = vst [vmem:[#allocation4 + $0x10] sm:$0xff] %v338
    %343 = vst [vmem:[#allocation4 + $0x20] sm:$0xff] %v339
    %344 = vst [vmem:[#allocation4 + $0x30] sm:$0xff] %v340
    %345 = vst.msk [vmem:[#allocation2] sm:$0xff] %vm205, %v137
    %346 = vst.msk [vmem:[#allocation2 + $0x8] sm:$0xff] %vm205, %v138
    %347 = vst.msk [vmem:[#allocation2 + $0x10] sm:$0xff] %vm205, %v139
    %348 = vst.msk [vmem:[#allocation2 + $0x18] sm:$0xff] %vm205, %v140
    %349 = vset.pattern.permute.xlu0 1
    %350 = vperm.xlu0 %349, %v80
    %v351 = vpop.permute.xlu0 %350
    %353 = vset.pattern.permute.xlu0 1
    %354 = vperm.xlu0 %353, %v81
    %v355 = vpop.permute.xlu0 %354
    %357 = vset.pattern.permute.xlu0 1
    %358 = vperm.xlu0 %357, %v82
    %v359 = vpop.permute.xlu0 %358
    %361 = vset.pattern.permute.xlu0 1
    %362 = vperm.xlu0 %361, %v83
    %v363 = vpop.permute.xlu0 %362
    %v365 = vlaneseq
    %v366 = vshrl.u32 %v365, 7
    %v367 = vsub.s32 1, %v366
    %v368 = vrot.slane %v84, %v367
    %v369 = vadd.f32 %v351, %v368
    %v370 = vadd.f32 %v355, %v368
    %v371 = vadd.f32 %v359, %v368
    %v372 = vadd.f32 %v363, %v368
    %v373 = vmul.f32 %v369, 0.2
    %v374 = vmul.f32 %v370, 0.2
    %v375 = vmul.f32 %v371, 0.2
    %v376 = vmul.f32 %v372, 0.2
    %v377 = vmax.f32 %v369, %v373
    %v378 = vmax.f32 %v370, %v374
    %v379 = vmax.f32 %v371, %v375
    %v380 = vmax.f32 %v372, %v376
    %v381 = vadd.f32 %v377, %v60
    %v382 = vadd.f32 %v378, %v61
    %v383 = vadd.f32 %v379, %v62
    %v384 = vadd.f32 %v380, %v63
    %v385 = vld [vmem:[#allocation2] sm:$0xff]
    %v386 = vld [vmem:[#allocation2 + $0x8] sm:$0xff]
    %v387 = vld [vmem:[#allocation2 + $0x10] sm:$0xff]
    %v388 = vld [vmem:[#allocation2 + $0x18] sm:$0xff]
    %389 = vmax.xlane.f32.xlu0 %v381
    %v390 = vpop.xlane.xlu0 %389
    %391 = vmax.xlane.f32.xlu0 %v382
    %v392 = vpop.xlane.xlu0 %391
    %393 = vmax.xlane.f32.xlu0 %v383
    %v394 = vpop.xlane.xlu0 %393
    %395 = vmax.xlane.f32.xlu0 %v384
    %v396 = vpop.xlane.xlu0 %395
    %v397 = vmax.f32 %v385, %v390
    %v398 = vmax.f32 %v386, %v392
    %v399 = vmax.f32 %v387, %v394
    %v400 = vmax.f32 %v388, %v396
    %v401 = vsub.f32 %v385, %v397
    %v402 = vsub.f32 %v386, %v398
    %v403 = vsub.f32 %v387, %v399
    %v404 = vsub.f32 %v388, %v400
    %v405 = vmul.f32 %v401, 1.442695
    %v406 = vpow.pop %v405
    %v407 = vmul.f32 %v402, 1.442695
    %v408 = vpow.pop %v407
    %v409 = vmul.f32 %v403, 1.442695
    %v410 = vpow.pop %v409
    %v411 = vmul.f32 %v404, 1.442695
    %v412 = vpow.pop %v411
    %414 = vset.pattern.permute.xlu0 1
    %415 = vperm.xlu0 %414, %v397
    %v416 = vpop.permute.xlu0 %415
    %419 = vset.pattern.permute.xlu0 1
    %420 = vperm.xlu0 %419, %v398
    %v421 = vpop.permute.xlu0 %420
    %424 = vset.pattern.permute.xlu0 1
    %425 = vperm.xlu0 %424, %v399
    %v426 = vpop.permute.xlu0 %425
    %429 = vset.pattern.permute.xlu0 1
    %430 = vperm.xlu0 %429, %v400
    %v431 = vpop.permute.xlu0 %430
    %v433 = vsub.f32 %v381, %v416
    %v434 = vsub.f32 %v382, %v421
    %v435 = vsub.f32 %v383, %v426
    %v436 = vsub.f32 %v384, %v431
    %v437 = vmul.f32 %v433, 1.442695
    %v438 = vpow.pop %v437
    %v439 = vmul.f32 %v434, 1.442695
    %v440 = vpow.pop %v439
    %v441 = vmul.f32 %v435, 1.442695
    %v442 = vpow.pop %v441
    %v443 = vmul.f32 %v436, 1.442695
    %v444 = vpow.pop %v443
    %v445 = vld [vmem:[#allocation3] sm:$0xff]
    %v446 = vld [vmem:[#allocation3 + $0x8] sm:$0xff]
    %v447 = vld [vmem:[#allocation3 + $0x10] sm:$0xff]
    %v448 = vld [vmem:[#allocation3 + $0x18] sm:$0xff]
    %v449 = vmul.f32 %v406, %v445
    %v450 = vmul.f32 %v408, %v446
    %v451 = vmul.f32 %v410, %v447
    %v452 = vmul.f32 %v412, %v448
    %453 = vadd.xlane.f32.xlu0 %v438
    %v454 = vpop.xlane.xlu0 %453
    %455 = vadd.xlane.f32.xlu0 %v440
    %v456 = vpop.xlane.xlu0 %455
    %457 = vadd.xlane.f32.xlu0 %v442
    %v458 = vpop.xlane.xlu0 %457
    %459 = vadd.xlane.f32.xlu0 %v444
    %v460 = vpop.xlane.xlu0 %459
    %v461 = vadd.f32 %v449, %v454
    %v462 = vadd.f32 %v450, %v456
    %v463 = vadd.f32 %v451, %v458
    %v464 = vadd.f32 %v452, %v460
    %vm465 = vcmask 15368
    %466 = vst.msk [vmem:[#allocation3] sm:$0xff] %vm465, %v461
    %467 = vst.msk [vmem:[#allocation3 + $0x8] sm:$0xff] %vm465, %v462
    %468 = vst.msk [vmem:[#allocation3 + $0x10] sm:$0xff] %vm465, %v463
    %469 = vst.msk [vmem:[#allocation3 + $0x18] sm:$0xff] %vm465, %v464
    %v470 = vld [vmem:[#allocation4 + $0x8] sm:$0xff]
    %v471 = vld [vmem:[#allocation4 + $0x18] sm:$0xff]
    %v472 = vld [vmem:[#allocation4 + $0x28] sm:$0xff]
    %v473 = vld [vmem:[#allocation4 + $0x38] sm:$0xff]
    %475 = vset.pattern.permute.xlu0 1
    %476 = vperm.xlu0 %475, %v406
    %v477 = vpop.permute.xlu0 %476
    %480 = vset.pattern.permute.xlu0 1
    %481 = vperm.xlu0 %480, %v408
    %v482 = vpop.permute.xlu0 %481
    %485 = vset.pattern.permute.xlu0 1
    %486 = vperm.xlu0 %485, %v410
    %v487 = vpop.permute.xlu0 %486
    %490 = vset.pattern.permute.xlu0 1
    %491 = vperm.xlu0 %490, %v412
    %v492 = vpop.permute.xlu0 %491
    %v494 = vmul.f32 %v477, %v470
    %v495 = vmul.f32 %v482, %v471
    %v496 = vmul.f32 %v487, %v472
    %v497 = vmul.f32 %v492, %v473
    %v498 = vpack.c.bf16 %v440, %v438
    %v499 = vpack.c.bf16 %v444, %v442
    %v500 = vunpack.c.h.b16 %v64
    %v501 = vunpack.c.h.b16 %v65
    %v502 = vunpack.c.h.b16 %v66
    %v503 = vunpack.c.h.b16 %v67
    %v504 = vunpack.c.h.b16 %v68
    %v505 = vunpack.c.h.b16 %v69
    %v506 = vunpack.c.h.b16 %v70
    %v507 = vunpack.c.h.b16 %v71
    %v508 = vunpack.c.h.b16 %v72
    %v509 = vunpack.c.h.b16 %v73
    %v510 = vunpack.c.h.b16 %v74
    %v511 = vunpack.c.h.b16 %v75
    %v512 = vunpack.c.h.b16 %v76
    %v513 = vunpack.c.h.b16 %v77
    %v514 = vunpack.c.h.b16 %v78
    %v515 = vunpack.c.h.b16 %v79
    %v516 = vpack.c.b16 %v501, %v500
    %v517 = vpack.c.b16 %v503, %v502
    %v518 = vpack.c.b16 %v505, %v504
    %v519 = vpack.c.b16 %v507, %v506
    %v520 = vpack.c.b16 %v509, %v508
    %v521 = vpack.c.b16 %v511, %v510
    %v522 = vpack.c.b16 %v513, %v512
    %v523 = vpack.c.b16 %v515, %v514
    %532 = vmatprep.subr.bf16.mxu0 0
    %533 = vmatpush1.bf16.msra.mxu0 %v516
    %534 = vmatprep.subr.bf16.mxu0 0
    %535 = vmatpush1.bf16.msra.mxu0 %v517
    %536 = vmatprep.subr.bf16.mxu0 0
    %537 = vmatpush1.bf16.msra.mxu0 %v518
    %538 = vmatprep.subr.bf16.mxu0 0
    %539 = vmatpush1.bf16.msra.mxu0 %v519
    %540 = vmatprep.subr.bf16.mxu0 0
    %541 = vmatpush1.bf16.msra.mxu0 %v520
    %542 = vmatprep.subr.bf16.mxu0 0
    %543 = vmatpush1.bf16.msra.mxu0 %v521
    %544 = vmatprep.subr.bf16.mxu0 0
    %545 = vmatpush1.bf16.msra.mxu0 %v522
    %546 = vmatprep.subr.bf16.mxu0 0
    %547 = vmatpush1.bf16.msra.mxu0 %v523
    %548 = vmatprep.subr.bf16.mxu0 0
    %549 = vmatpush1.bf16.msra.mxu0 0
    %550 = vmatprep.subr.bf16.mxu0 0
    %551 = vmatpush1.bf16.msra.mxu0 0
    %552 = vmatprep.subr.bf16.mxu0 0
    %553 = vmatpush1.bf16.msra.mxu0 0
    %554 = vmatprep.subr.bf16.mxu0 0
    %555 = vmatpush1.bf16.msra.mxu0 0
    %556 = vmatprep.subr.bf16.mxu0 0
    %557 = vmatpush1.bf16.msra.mxu0 0
    %558 = vmatprep.subr.bf16.mxu0 0
    %559 = vmatpush1.bf16.msra.mxu0 0
    %560 = vmatprep.subr.bf16.mxu0 0
    %561 = vmatpush1.bf16.msra.mxu0 0
    %562 = vmatprep.subr.bf16.mxu0 0
    %563 = vmatpush1.bf16.msra.mxu0 0
    %564 = vmatprep.mubr.bf16.mxu0 0
    %565 = vmatmul.mubr.bf16.gmra.mrb[0].mxu0 %v498
    %v566 = vpop.f32.mrb[0].mxu0
    %v567 = vadd.f32 0.0, %v566
    %v568 = vpop.f32.mrb[0].mxu0
    %v569 = vpop.f32.mrb[0].mxu0
    %v570 = vadd.f32 0.0, %v569
    %v571 = vpop.f32.mrb[0].mxu0
    %572 = vmatprep.mubr.bf16.mxu0 0
    %573 = vmatmul.mubr.bf16.gmra.mrb[0].mxu0 %v499
    %v574 = vpop.f32.mrb[0].mxu0
    %v575 = vadd.f32 0.0, %v574
    %v576 = vpop.f32.mrb[0].mxu0
    %v577 = vpop.f32.mrb[0].mxu0
    %v578 = vadd.f32 0.0, %v577
    %v579 = vpop.f32.mrb[0].mxu0
    %580 = vdwg.mxu0
    %v581 = vadd.f32 %v494, %v567
    %v582 = vadd.f32 %v495, %v570
    %v583 = vadd.f32 %v496, %v575
    %v584 = vadd.f32 %v497, %v578
    %585 = vst [vmem:[#allocation4 + $0x8] sm:$0xff] %v581
    %586 = vst [vmem:[#allocation4 + $0x18] sm:$0xff] %v582
    %587 = vst [vmem:[#allocation4 + $0x28] sm:$0xff] %v583
    %588 = vst [vmem:[#allocation4 + $0x38] sm:$0xff] %v584
    %589 = vst.msk [vmem:[#allocation2] sm:$0xff] %vm465, %v397
    %590 = vst.msk [vmem:[#allocation2 + $0x8] sm:$0xff] %vm465, %v398
    %591 = vst.msk [vmem:[#allocation2 + $0x10] sm:$0xff] %vm465, %v399
    %592 = vst.msk [vmem:[#allocation2 + $0x18] sm:$0xff] %vm465, %v400
  $region25: #{attnet_s_forward.7} parent=0 // pred_fallthru
    _
  // Predicated region
  $region26: #{attnet_s_forward.7} parent=0 // pred_check
    %p593 = pneg %p20
  $region27: #{attnet_s_forward.7} parent=0 // pred_check_branch
    %595 = sbr.rel (%p593) target = $region29
  $region28: #{attnet_s_forward.7} parent=0 // pred_region
    %v596 = vld [vmem:[#allocation3] sm:$0xff]
    %v597 = vld [vmem:[#allocation3 + $0x8] sm:$0xff]
    %v598 = vld [vmem:[#allocation3 + $0x10] sm:$0xff]
    %v599 = vld [vmem:[#allocation3 + $0x18] sm:$0xff]
    %v600 = vmax.f32 %v596, 1e-20
    %v601 = vmax.f32 %v597, 1e-20
    %v602 = vmax.f32 %v598, 1e-20
    %v603 = vmax.f32 %v599, 1e-20
    %v604 = vrcp.pop %v600
    %v605 = vmul.f32 1.0, %v604
    %v606 = vrcp.pop %v601
    %v607 = vmul.f32 1.0, %v606
    %v608 = vrcp.pop %v602
    %v609 = vmul.f32 1.0, %v608
    %v610 = vrcp.pop %v603
    %v611 = vmul.f32 1.0, %v610
    %v612 = vld [vmem:[#allocation4] sm:$0xff]
    %v613 = vld [vmem:[#allocation4 + $0x10] sm:$0xff]
    %v614 = vld [vmem:[#allocation4 + $0x20] sm:$0xff]
    %v615 = vld [vmem:[#allocation4 + $0x30] sm:$0xff]
    %617 = vset.pattern.permute.xlu0 0
    %618 = vperm.xlu0 %617, %v605
    %v619 = vpop.permute.xlu0 %618
    %622 = vset.pattern.permute.xlu0 0
    %623 = vperm.xlu0 %622, %v607
    %v624 = vpop.permute.xlu0 %623
    %627 = vset.pattern.permute.xlu0 0
    %628 = vperm.xlu0 %627, %v609
    %v629 = vpop.permute.xlu0 %628
    %632 = vset.pattern.permute.xlu0 0
    %633 = vperm.xlu0 %632, %v611
    %v634 = vpop.permute.xlu0 %633
    %v636 = vmul.f32 %v612, %v619
    %v637 = vmul.f32 %v613, %v624
    %v638 = vmul.f32 %v614, %v629
    %v639 = vmul.f32 %v615, %v634
    %v640 = vadd.f32 %v636, 0.0
    %v641 = vadd.f32 %v637, 0.0
    %v642 = vadd.f32 %v638, 0.0
    %v643 = vadd.f32 %v639, 0.0
    %v644 = vld [vmem:[#allocation4 + $0x8] sm:$0xff]
    %v645 = vld [vmem:[#allocation4 + $0x18] sm:$0xff]
    %v646 = vld [vmem:[#allocation4 + $0x28] sm:$0xff]
    %v647 = vld [vmem:[#allocation4 + $0x38] sm:$0xff]
    %648 = vset.pattern.permute.xlu0 1
    %649 = vperm.xlu0 %648, %v605
    %v650 = vpop.permute.xlu0 %649
    %652 = vset.pattern.permute.xlu0 1
    %653 = vperm.xlu0 %652, %v607
    %v654 = vpop.permute.xlu0 %653
    %656 = vset.pattern.permute.xlu0 1
    %657 = vperm.xlu0 %656, %v609
    %v658 = vpop.permute.xlu0 %657
    %660 = vset.pattern.permute.xlu0 1
    %661 = vperm.xlu0 %660, %v611
    %v662 = vpop.permute.xlu0 %661
    %v664 = vmul.f32 %v644, %v650
    %v665 = vmul.f32 %v645, %v654
    %v666 = vmul.f32 %v646, %v658
    %v667 = vmul.f32 %v647, %v662
    %v668 = vadd.f32 %v640, %v664
    %v669 = vadd.f32 %v641, %v665
    %v670 = vadd.f32 %v642, %v666
    %v671 = vadd.f32 %v643, %v667
    %v672 = vmul.f32 %v668, 0.5
    %v673 = vmul.f32 %v669, 0.5
    %v674 = vmul.f32 %v670, 0.5
    %v675 = vmul.f32 %v671, 0.5
    %676 = vst [vmem:[%s5] sm:$0xff] %v672
    %677 = vst [vmem:[%s5 + $0x8] sm:$0xff] %v673
    %678 = vst [vmem:[%s5 + $0x10] sm:$0xff] %v674
    %679 = vst [vmem:[%s5 + $0x18] sm:$0xff] %v675
  $region29: #{attnet_s_forward.7} parent=0 // pred_fallthru
    _
  // Predicated region
  $region30: #{attnet_s_forward.7} parent=0 // pred_check
    _
  $region31: #{attnet_s_forward.7} parent=0 // pred_check_branch
    %681 = sbr.rel (0) target = $region33
  $region32: #{attnet_s_forward.7} parent=0 // pred_region
    _
  $region33: #{attnet_s_forward.7} parent=0 // pred_fallthru
    _
  // Predicated region
  $region34: #{attnet_s_forward.7} parent=0 // pred_check
    _
  $region35: #{attnet_s_forward.7} parent=0 // pred_check_branch
    %683 = sbr.rel (0) target = $region37
  $region36: #{attnet_s_forward.7} parent=0 // pred_region
    _
  $region37: #{attnet_s_forward.7} parent=0 // pred_fallthru
    _

</llo_original>
